<compile_context>
chip_gen: v5e
topology: v5e:2x2
jax: 0.10.0
libtpu: 0.0.40
codegen_flags: <defaults>
</compile_context>

<pallas_src>
import functools

import jax
import jax.numpy as jnp
from jax.experimental import pallas as pl
from jax.experimental.pallas import tpu as pltpu

EPS = 1e-5
LANE = 128


def _round_up(x, m):
    return (x + m - 1) // m * m


# ----------------------------- fused Pallas kernel --------------------------- #

def _batchnorm(x2d, gamma, beta):
    # Training-mode BatchNorm2d forward, single pass: sum + sum-of-squares,
    # var = E[x^2] - mean^2 (biased).  All f32.
    m = x2d.shape[0]
    s = jnp.sum(x2d, axis=0, keepdims=True)
    ss = jnp.sum(x2d * x2d, axis=0, keepdims=True)
    mean = s * (1.0 / m)
    var = ss * (1.0 / m) - mean * mean
    return (x2d - mean) * jax.lax.rsqrt(var + EPS) * gamma + beta


def residual_fused_kernel(lhs_ref, w1sc_ref, g1_ref, b1_ref, w2_ref, g2_ref, b2_ref,
                          o_ref, hsh_ref, *, N, H, W):
    M, CP = o_ref.shape

    # ---- conv1 + fused shortcut: ONE dense-K MXU matmul -------------------------------
    # lhs : (M, K1P) dense im2col of x (9*Cin real K columns + a ones column).
    # rhs : (K1P, 2*CP) = [ conv1 weights | shortcut weights on center-tap rows + bias row ].
    y = jnp.dot(lhs_ref[...], w1sc_ref[...], preferred_element_type=jnp.float32)
    sc = y[:, CP:]                                           # shortcut (bias already folded)
    h = jnp.maximum(_batchnorm(y[:, :CP], g1_ref[...], b1_ref[...]), 0.0)

    # ---- three kw-pre-shifted copies of h with H-halo rows -----------------------------
    # Copy j (rows [j*N,(j+1)*N) of the scratch) satisfies  hsh[j][n, hp, w, :] == h_pad[n, hp, w+j, :],
    # so every slab read in the conv2 loop below is a tile-aligned outer-dim slice.
    hb = h.reshape(N * H, W, CP)
    wi = jax.lax.broadcasted_iota(jnp.int32, hb.shape, 1)
    shift_r = jnp.where(wi == 0, 0.0, pltpu.roll(hb, shift=1, axis=1))          # h shifted right
    shift_l = jnp.where(wi == W - 1, 0.0, pltpu.roll(hb, shift=W - 1, axis=1))  # h shifted left

    zrow = jnp.zeros((3 * N, 1, W, CP), jnp.float32)
    hsh_ref[:, 0:1, :, :] = zrow                 # zero only the halo rows, not the buffer
    hsh_ref[:, H + 1:H + 2, :, :] = zrow
    hsh_ref[0 * N:1 * N, 1:H + 1, :, :] = shift_r.reshape(N, H, W, CP)
    hsh_ref[1 * N:2 * N, 1:H + 1, :, :] = hb.reshape(N, H, W, CP)
    hsh_ref[2 * N:3 * N, 1:H + 1, :, :] = shift_l.reshape(N, H, W, CP)

    # ---- conv2: nine shifted K=CP dots accumulated in f32 ------------------------------
    # (no materialized 9x im2col concat; conv2 bias dropped - cancelled by BN2)
    acc = None
    for kh in range(3):
        for kw in range(3):
            slab = hsh_ref[kw * N:(kw + 1) * N, kh:kh + H, :, :].reshape(M, CP)
            d = jnp.dot(slab, w2_ref[kh * 3 + kw], preferred_element_type=jnp.float32)
            acc = d if acc is None else acc + d

    o_ref[...] = jnp.maximum(_batchnorm(acc, g2_ref[...], b2_ref[...]) + sc, 0.0)


# ---------------------------------- wrapper ---------------------------------- #

def residual_forward(x_nchw, params, stride=1):
    # TODO(synk): stride > 1 path not implemented (module default stride=1).
    assert stride == 1, "only stride=1 is implemented"
    Cout, Cin = params["conv1_w"].shape[0], params["conv1_w"].shape[1]
    N, _, H, W = x_nchw.shape
    M = N * H * W
    CP = _round_up(Cout, LANE)           # lane-dense channel width for activations/outputs
    K1 = 9 * Cin + 1                     # 9 taps x Cin  +  ones column (shortcut-bias fold)
    K1P = _round_up(K1, LANE)            # dense contraction width for conv1 (128 here)

    f32 = jnp.float32
    x = jnp.transpose(x_nchw, (0, 2, 3, 1)).astype(f32)              # NHWC
    xp = jnp.pad(x, ((0, 0), (1, 1), (1, 1), (0, 0)))

    # Dense im2col LHS for conv1, K packed as (kh, kw, cin) + ones column, padded to K1P.
    # Built on the XLA side: <= 256 KB, replaces the previous 128-channel pad of x, and lets
    # conv1 + shortcut (+ its bias) run as a single MXU matmul inside the kernel.
    cols = jnp.concatenate(
        [xp[:, kh:kh + H, kw:kw + W, :] for kh in range(3) for kw in range(3)]
        + [jnp.ones((N, H, W, 1), f32)], axis=-1)                    # (N, H, W, 9*Cin+1)
    lhs = jnp.pad(cols, ((0, 0), (0, 0), (0, 0), (0, K1P - K1))).reshape(M, K1P)

    # conv1 weight block: rows ordered (kh, kw, cin) to match the LHS packing; the ones-column
    # row stays zero here (conv1 bias dropped -> exactly cancelled by BN1 batch stats).
    w1 = jnp.transpose(params["conv1_w"], (2, 3, 1, 0)).reshape(9 * Cin, Cout).astype(f32)
    w1_blk = jnp.zeros((K1P, CP), f32).at[:9 * Cin, :Cout].set(w1)

    # Shortcut block: weights sit on the center-tap rows (kh=kw=1 -> rows 4*Cin..5*Cin-1) so the
    # shortcut reuses conv1's im2col LHS stream; its bias rides on the ones-column row.
    sc_blk = jnp.zeros((K1P, CP), f32)
    if params.get("conv1x1_w") is not None:
        ws = params["conv1x1_w"][:, :, 0, 0].T.astype(f32)           # (Cin, Cout)
        sc_blk = sc_blk.at[4 * Cin:5 * Cin, :Cout].set(ws)
        sc_blk = sc_blk.at[9 * Cin, :Cout].set(params["conv1x1_b"].astype(f32))
    else:
        sc_blk = sc_blk.at[4 * Cin:5 * Cin, :Cin].set(jnp.eye(Cin, dtype=f32))
    w1sc = jnp.concatenate([w1_blk, sc_blk], axis=1)                 # (K1P, 2*CP)

    # conv2 weights, tap-major (9, CP, CP); channels zero-padded; bias dropped (BN2 cancels it).
    w2 = jnp.transpose(params["conv2_w"], (2, 3, 1, 0)).astype(f32)  # (3, 3, Cout, Cout)
    w2 = jnp.pad(w2, ((0, 0), (0, 0), (0, CP - Cout), (0, CP - Cout))).reshape(9, CP, CP)

    def chanvec(v):
        return jnp.pad(v.astype(f32), (0, CP - v.shape[0])).reshape(1, CP)

    args = [lhs, w1sc,
            chanvec(params["bn1_g"]), chanvec(params["bn1_b"]),
            w2,
            chanvec(params["bn2_g"]), chanvec(params["bn2_b"])]

    kernel = functools.partial(residual_fused_kernel, N=N, H=H, W=W)

    # TODO(synk): single-invocation kernel (no grid).  At realistic shapes / on v7x this should
    # become a row-tiled grid with dimension_semantics=("parallel",...) and two-phase BN
    # (stats pass then normalize) so both TensorCores are used; at N*H*W=512 the extra passes
    # and per-step overhead cost more than they save.
    out2d = pl.pallas_call(
        kernel,
        out_shape=jax.ShapeDtypeStruct((M, CP), jnp.float32),
        in_specs=[pl.BlockSpec(memory_space=pltpu.MemorySpace.VMEM)] * len(args),
        out_specs=pl.BlockSpec(memory_space=pltpu.MemorySpace.VMEM),
        scratch_shapes=[pltpu.VMEM((3 * N, H + 2, W, CP), jnp.float32)],
        # ~2.5 MB live VMEM at this shape; explicit limit > v5e's 16 MiB scoped default and
        # under the ~48 MiB guidance for v7x's 64 MiB physical VMEM.
        compiler_params=pltpu.CompilerParams(vmem_limit_bytes=32 * 1024 * 1024),
    )(*args)

    # Boundary plumbing back to the module's NCHW contract.  In a real network keep the
    # activations NHWC / channel-padded end-to-end instead of converting around every layer.
    out = out2d[:, :Cout].reshape(N, H, W, Cout)
    return jnp.transpose(out, (0, 3, 1, 2))


# ------------------------- pure-JAX reference (NCHW) ------------------------- #

def _ref_conv(x, w, b, pad):
    y = jax.lax.conv_general_dilated(
        x, w, window_strides=(1, 1), padding=[(pad, pad), (pad, pad)],
        dimension_numbers=("NCHW", "OIHW", "NCHW"))
    return y + b[None, :, None, None]


def _ref_bn(x, g, b):
    mean = x.mean(axis=(0, 2, 3), keepdims=True)
    var = ((x - mean) ** 2).mean(axis=(0, 2, 3), keepdims=True)
    return (x - mean) * jax.lax.rsqrt(var + EPS) * g[None, :, None, None] + b[None, :, None, None]


def ref_forward(x, params):
    o1 = jnp.maximum(_ref_bn(_ref_conv(x, params["conv1_w"], params["conv1_b"], 1),
                             params["bn1_g"], params["bn1_b"]), 0.0)
    o2 = _ref_bn(_ref_conv(o1, params["conv2_w"], params["conv2_b"], 1),
                 params["bn2_g"], params["bn2_b"])
    sc = x
    if params.get("conv1x1_w") is not None:
        sc = _ref_conv(x, params["conv1x1_w"], params["conv1x1_b"], 0)
    return jnp.maximum(o2 + sc, 0.0)


# ------------------------------------ main ----------------------------------- #

if __name__ == "__main__":
    N, Cin, Cout, H, W = 2, 4, 8, 16, 16
    key = jax.random.PRNGKey(0)
    keys = jax.random.split(key, 4)

    x = jax.random.normal(keys[0], (N, Cin, H, W), jnp.float32)

    def conv_init(k, cout, cin, kh, kw):
        bound = 1.0 / (cin * kh * kw) ** 0.5
        kw_, kb_ = jax.random.split(k)
        w = jax.random.uniform(kw_, (cout, cin, kh, kw), jnp.float32, -bound, bound)
        b = jax.random.uniform(kb_, (cout,), jnp.float32, -bound, bound)
        return w, b

    w1, b1 = conv_init(keys[1], Cout, Cin, 3, 3)
    w2, b2 = conv_init(keys[2], Cout, Cout, 3, 3)
    w3, b3 = conv_init(keys[3], Cout, Cin, 1, 1)   # in_channels != out_channels -> 1x1 shortcut

    params = dict(
        conv1_w=w1, conv1_b=b1,
        conv2_w=w2, conv2_b=b2,
        conv1x1_w=w3, conv1x1_b=b3,
        bn1_g=jnp.ones((Cout,), jnp.float32), bn1_b=jnp.zeros((Cout,), jnp.float32),
        bn2_g=jnp.ones((Cout,), jnp.float32), bn2_b=jnp.zeros((Cout,), jnp.float32),
    )

    out = residual_forward(x, params)
    out = jax.block_until_ready(out)

    ref = ref_forward(x, params)
    assert out.shape == (N, Cout, H, W), out.shape
    assert jnp.allclose(out, ref, rtol=1e-4, atol=1e-4), float(jnp.abs(out - ref).max())
    print("KERNEL_OK")
</pallas_src>

<mosaic_0001>
module attributes {stable_mosaic.version = 11 : i64} {
  func.func @residual_fused_kernel(%arg0: memref<512x128xf32, #tpu.memory_space<vmem>>, %arg1: memref<128x256xf32, #tpu.memory_space<vmem>>, %arg2: memref<1x128xf32, #tpu.memory_space<vmem>>, %arg3: memref<1x128xf32, #tpu.memory_space<vmem>>, %arg4: memref<9x128x128xf32, #tpu.memory_space<vmem>>, %arg5: memref<1x128xf32, #tpu.memory_space<vmem>>, %arg6: memref<1x128xf32, #tpu.memory_space<vmem>>, %arg7: memref<512x128xf32, #tpu.memory_space<vmem>>, %arg8: memref<6x18x16x128xf32, #tpu.memory_space<vmem>>) attributes {dimension_semantics = [], scalar_prefetch = 0 : i64, scratch_operands = 1 : i64, tpu.core_type = #tpu.core_type<tc>} {
    %c0 = arith.constant 0 : index
    %c0_0 = arith.constant 0 : index
    %0 = vector.load %arg0[%c0, %c0_0] : memref<512x128xf32, #tpu.memory_space<vmem>>, vector<512x128xf32>
    %c0_1 = arith.constant 0 : index
    %c0_2 = arith.constant 0 : index
    %1 = vector.load %arg1[%c0_1, %c0_2] : memref<128x256xf32, #tpu.memory_space<vmem>>, vector<128x256xf32>
    %cst = arith.constant dense<0.000000e+00> : vector<512x256xf32>
    %2 = tpu.matmul %0, %1, %cst {dimension_numbers = #tpu.dot_dimension_numbers<[1], [0], [0], [1], [0, 0, 1, 1], [], []>} : vector<512x128xf32>, vector<128x256xf32>, vector<512x256xf32> -> vector<512x256xf32>
    %3 = vector.extract_strided_slice %2 {offsets = [0, 128], sizes = [512, 128], strides = [1, 1]} : vector<512x256xf32> to vector<512x128xf32>
    %4 = vector.extract_strided_slice %2 {offsets = [0, 0], sizes = [512, 128], strides = [1, 1]} : vector<512x256xf32> to vector<512x128xf32>
    %c0_3 = arith.constant 0 : index
    %c0_4 = arith.constant 0 : index
    %5 = vector.load %arg2[%c0_3, %c0_4] : memref<1x128xf32, #tpu.memory_space<vmem>>, vector<1x128xf32>
    %c0_5 = arith.constant 0 : index
    %c0_6 = arith.constant 0 : index
    %6 = vector.load %arg3[%c0_5, %c0_6] : memref<1x128xf32, #tpu.memory_space<vmem>>, vector<1x128xf32>
    %cst_7 = arith.constant dense<0.000000e+00> : vector<128xf32>
    %7 = vector.multi_reduction <add>, %4, %cst_7 [0] : vector<512x128xf32> to vector<128xf32>
    %8 = vector.shape_cast %7 : vector<128xf32> to vector<1x128xf32>
    %9 = arith.mulf %4, %4 : vector<512x128xf32>
    %cst_8 = arith.constant dense<0.000000e+00> : vector<128xf32>
    %10 = vector.multi_reduction <add>, %9, %cst_8 [0] : vector<512x128xf32> to vector<128xf32>
    %11 = vector.shape_cast %10 : vector<128xf32> to vector<1x128xf32>
    %cst_9 = arith.constant 0.001953125 : f32
    %12 = vector.broadcast %cst_9 : f32 to vector<1x128xf32>
    %13 = arith.mulf %8, %12 : vector<1x128xf32>
    %cst_10 = arith.constant 0.001953125 : f32
    %14 = vector.broadcast %cst_10 : f32 to vector<1x128xf32>
    %15 = arith.mulf %11, %14 : vector<1x128xf32>
    %16 = arith.mulf %13, %13 : vector<1x128xf32>
    %17 = arith.subf %15, %16 : vector<1x128xf32>
    %18 = vector.broadcast %13 : vector<1x128xf32> to vector<512x128xf32>
    %19 = arith.subf %4, %18 : vector<512x128xf32>
    %cst_11 = arith.constant 9.99999974E-6 : f32
    %20 = vector.broadcast %cst_11 : f32 to vector<1x128xf32>
    %21 = arith.addf %17, %20 : vector<1x128xf32>
    %22 = math.rsqrt %21 : vector<1x128xf32>
    %23 = vector.broadcast %22 : vector<1x128xf32> to vector<512x128xf32>
    %24 = arith.mulf %19, %23 : vector<512x128xf32>
    %25 = vector.broadcast %5 : vector<1x128xf32> to vector<512x128xf32>
    %26 = arith.mulf %24, %25 : vector<512x128xf32>
    %27 = vector.broadcast %6 : vector<1x128xf32> to vector<512x128xf32>
    %28 = arith.addf %26, %27 : vector<512x128xf32>
    %cst_12 = arith.constant 0.000000e+00 : f32
    %29 = vector.broadcast %cst_12 : f32 to vector<512x128xf32>
    %30 = arith.maximumf %28, %29 : vector<512x128xf32>
    %31 = vector.shape_cast %30 : vector<512x128xf32> to vector<32x16x128xf32>
    %32 = tpu.iota {dimensions = array<i32: 1>} : vector<32x16x128xi32>
    %c0_i32 = arith.constant 0 : i32
    %33 = vector.broadcast %c0_i32 : i32 to vector<32x16x128xi32>
    %34 = arith.cmpi eq, %32, %33 : vector<32x16x128xi32>
    %c1_i32 = arith.constant 1 : i32
    %35 = tpu.dynamic_rotate %31 by %c1_i32 dim 1 : vector<32x16x128xf32>, i32 -> vector<32x16x128xf32>
    %cst_13 = arith.constant 0.000000e+00 : f32
    %36 = vector.broadcast %cst_13 : f32 to vector<32x16x128xf32>
    %37 = arith.select %34, %36, %35 : vector<32x16x128xi1>, vector<32x16x128xf32>
    %c15_i32 = arith.constant 15 : i32
    %38 = vector.broadcast %c15_i32 : i32 to vector<32x16x128xi32>
    %39 = arith.cmpi eq, %32, %38 : vector<32x16x128xi32>
    %c15_i32_14 = arith.constant 15 : i32
    %40 = tpu.dynamic_rotate %31 by %c15_i32_14 dim 1 : vector<32x16x128xf32>, i32 -> vector<32x16x128xf32>
    %cst_15 = arith.constant 0.000000e+00 : f32
    %41 = vector.broadcast %cst_15 : f32 to vector<32x16x128xf32>
    %42 = arith.select %39, %41, %40 : vector<32x16x128xi1>, vector<32x16x128xf32>
    %cst_16 = arith.constant 0.000000e+00 : f32
    %43 = vector.broadcast %cst_16 : f32 to vector<6x1x16x128xf32>
    %c0_17 = arith.constant 0 : index
    %c0_18 = arith.constant 0 : index
    %c0_19 = arith.constant 0 : index
    %c0_20 = arith.constant 0 : index
    %44 = vector.load %arg8[%c0_17, %c0_18, %c0_19, %c0_20] : memref<6x18x16x128xf32, #tpu.memory_space<vmem>>, vector<6x1x16x128xf32>
    tpu.vector_store %arg8[%c0_17, %c0_18, %c0_19, %c0_20], %43 {strides = array<i32>} : memref<6x18x16x128xf32, #tpu.memory_space<vmem>>, vector<6x1x16x128xf32>,
    %c0_21 = arith.constant 0 : index
    %c17 = arith.constant 17 : index
    %c0_22 = arith.constant 0 : index
    %c0_23 = arith.constant 0 : index
    %45 = vector.load %arg8[%c0_21, %c17, %c0_22, %c0_23] : memref<6x18x16x128xf32, #tpu.memory_space<vmem>>, vector<6x1x16x128xf32>
    tpu.vector_store %arg8[%c0_21, %c17, %c0_22, %c0_23], %43 {strides = array<i32>} : memref<6x18x16x128xf32, #tpu.memory_space<vmem>>, vector<6x1x16x128xf32>,
    %46 = vector.shape_cast %37 : vector<32x16x128xf32> to vector<2x16x16x128xf32>
    %c0_24 = arith.constant 0 : index
    %c1 = arith.constant 1 : index
    %c0_25 = arith.constant 0 : index
    %c0_26 = arith.constant 0 : index
    %47 = vector.load %arg8[%c0_24, %c1, %c0_25, %c0_26] : memref<6x18x16x128xf32, #tpu.memory_space<vmem>>, vector<2x16x16x128xf32>
    tpu.vector_store %arg8[%c0_24, %c1, %c0_25, %c0_26], %46 {strides = array<i32>} : memref<6x18x16x128xf32, #tpu.memory_space<vmem>>, vector<2x16x16x128xf32>,
    %48 = vector.shape_cast %31 : vector<32x16x128xf32> to vector<2x16x16x128xf32>
    %c2 = arith.constant 2 : index
    %c1_27 = arith.constant 1 : index
    %c0_28 = arith.constant 0 : index
    %c0_29 = arith.constant 0 : index
    %49 = vector.load %arg8[%c2, %c1_27, %c0_28, %c0_29] : memref<6x18x16x128xf32, #tpu.memory_space<vmem>>, vector<2x16x16x128xf32>
    tpu.vector_store %arg8[%c2, %c1_27, %c0_28, %c0_29], %48 {strides = array<i32>} : memref<6x18x16x128xf32, #tpu.memory_space<vmem>>, vector<2x16x16x128xf32>,
    %50 = vector.shape_cast %42 : vector<32x16x128xf32> to vector<2x16x16x128xf32>
    %c4 = arith.constant 4 : index
    %c1_30 = arith.constant 1 : index
    %c0_31 = arith.constant 0 : index
    %c0_32 = arith.constant 0 : index
    %51 = vector.load %arg8[%c4, %c1_30, %c0_31, %c0_32] : memref<6x18x16x128xf32, #tpu.memory_space<vmem>>, vector<2x16x16x128xf32>
    tpu.vector_store %arg8[%c4, %c1_30, %c0_31, %c0_32], %50 {strides = array<i32>} : memref<6x18x16x128xf32, #tpu.memory_space<vmem>>, vector<2x16x16x128xf32>,
    %c0_33 = arith.constant 0 : index
    %c0_34 = arith.constant 0 : index
    %c0_35 = arith.constant 0 : index
    %c0_36 = arith.constant 0 : index
    %52 = vector.load %arg8[%c0_33, %c0_34, %c0_35, %c0_36] : memref<6x18x16x128xf32, #tpu.memory_space<vmem>>, vector<2x16x16x128xf32>
    %53 = vector.shape_cast %52 : vector<2x16x16x128xf32> to vector<512x128xf32>
    %c0_37 = arith.constant 0 : index
    %c0_38 = arith.constant 0 : index
    %c0_39 = arith.constant 0 : index
    %54 = vector.load %arg4[%c0_37, %c0_38, %c0_39] : memref<9x128x128xf32, #tpu.memory_space<vmem>>, vector<1x128x128xf32>
    %55 = vector.shape_cast %54 : vector<1x128x128xf32> to vector<128x128xf32>
    %cst_40 = arith.constant dense<0.000000e+00> : vector<512x128xf32>
    %56 = tpu.matmul %53, %55, %cst_40 {dimension_numbers = #tpu.dot_dimension_numbers<[1], [0], [0], [1], [0, 0, 1, 1], [], []>} : vector<512x128xf32>, vector<128x128xf32>, vector<512x128xf32> -> vector<512x128xf32>
    %c2_41 = arith.constant 2 : index
    %c0_42 = arith.constant 0 : index
    %c0_43 = arith.constant 0 : index
    %c0_44 = arith.constant 0 : index
    %57 = vector.load %arg8[%c2_41, %c0_42, %c0_43, %c0_44] : memref<6x18x16x128xf32, #tpu.memory_space<vmem>>, vector<2x16x16x128xf32>
    %58 = vector.shape_cast %57 : vector<2x16x16x128xf32> to vector<512x128xf32>
    %c1_45 = arith.constant 1 : index
    %c0_46 = arith.constant 0 : index
    %c0_47 = arith.constant 0 : index
    %59 = vector.load %arg4[%c1_45, %c0_46, %c0_47] : memref<9x128x128xf32, #tpu.memory_space<vmem>>, vector<1x128x128xf32>
    %60 = vector.shape_cast %59 : vector<1x128x128xf32> to vector<128x128xf32>
    %cst_48 = arith.constant dense<0.000000e+00> : vector<512x128xf32>
    %61 = tpu.matmul %58, %60, %cst_48 {dimension_numbers = #tpu.dot_dimension_numbers<[1], [0], [0], [1], [0, 0, 1, 1], [], []>} : vector<512x128xf32>, vector<128x128xf32>, vector<512x128xf32> -> vector<512x128xf32>
    %62 = arith.addf %56, %61 : vector<512x128xf32>
    %c4_49 = arith.constant 4 : index
    %c0_50 = arith.constant 0 : index
    %c0_51 = arith.constant 0 : index
    %c0_52 = arith.constant 0 : index
    %63 = vector.load %arg8[%c4_49, %c0_50, %c0_51, %c0_52] : memref<6x18x16x128xf32, #tpu.memory_space<vmem>>, vector<2x16x16x128xf32>
    %64 = vector.shape_cast %63 : vector<2x16x16x128xf32> to vector<512x128xf32>
    %c2_53 = arith.constant 2 : index
    %c0_54 = arith.constant 0 : index
    %c0_55 = arith.constant 0 : index
    %65 = vector.load %arg4[%c2_53, %c0_54, %c0_55] : memref<9x128x128xf32, #tpu.memory_space<vmem>>, vector<1x128x128xf32>
    %66 = vector.shape_cast %65 : vector<1x128x128xf32> to vector<128x128xf32>
    %cst_56 = arith.constant dense<0.000000e+00> : vector<512x128xf32>
    %67 = tpu.matmul %64, %66, %cst_56 {dimension_numbers = #tpu.dot_dimension_numbers<[1], [0], [0], [1], [0, 0, 1, 1], [], []>} : vector<512x128xf32>, vector<128x128xf32>, vector<512x128xf32> -> vector<512x128xf32>
    %68 = arith.addf %62, %67 : vector<512x128xf32>
    %c0_57 = arith.constant 0 : index
    %c1_58 = arith.constant 1 : index
    %c0_59 = arith.constant 0 : index
    %c0_60 = arith.constant 0 : index
    %69 = vector.load %arg8[%c0_57, %c1_58, %c0_59, %c0_60] : memref<6x18x16x128xf32, #tpu.memory_space<vmem>>, vector<2x16x16x128xf32>
    %70 = vector.shape_cast %69 : vector<2x16x16x128xf32> to vector<512x128xf32>
    %c3 = arith.constant 3 : index
    %c0_61 = arith.constant 0 : index
    %c0_62 = arith.constant 0 : index
    %71 = vector.load %arg4[%c3, %c0_61, %c0_62] : memref<9x128x128xf32, #tpu.memory_space<vmem>>, vector<1x128x128xf32>
    %72 = vector.shape_cast %71 : vector<1x128x128xf32> to vector<128x128xf32>
    %cst_63 = arith.constant dense<0.000000e+00> : vector<512x128xf32>
    %73 = tpu.matmul %70, %72, %cst_63 {dimension_numbers = #tpu.dot_dimension_numbers<[1], [0], [0], [1], [0, 0, 1, 1], [], []>} : vector<512x128xf32>, vector<128x128xf32>, vector<512x128xf32> -> vector<512x128xf32>
    %74 = arith.addf %68, %73 : vector<512x128xf32>
    %c2_64 = arith.constant 2 : index
    %c1_65 = arith.constant 1 : index
    %c0_66 = arith.constant 0 : index
    %c0_67 = arith.constant 0 : index
    %75 = vector.load %arg8[%c2_64, %c1_65, %c0_66, %c0_67] : memref<6x18x16x128xf32, #tpu.memory_space<vmem>>, vector<2x16x16x128xf32>
    %76 = vector.shape_cast %75 : vector<2x16x16x128xf32> to vector<512x128xf32>
    %c4_68 = arith.constant 4 : index
    %c0_69 = arith.constant 0 : index
    %c0_70 = arith.constant 0 : index
    %77 = vector.load %arg4[%c4_68, %c0_69, %c0_70] : memref<9x128x128xf32, #tpu.memory_space<vmem>>, vector<1x128x128xf32>
    %78 = vector.shape_cast %77 : vector<1x128x128xf32> to vector<128x128xf32>
    %cst_71 = arith.constant dense<0.000000e+00> : vector<512x128xf32>
    %79 = tpu.matmul %76, %78, %cst_71 {dimension_numbers = #tpu.dot_dimension_numbers<[1], [0], [0], [1], [0, 0, 1, 1], [], []>} : vector<512x128xf32>, vector<128x128xf32>, vector<512x128xf32> -> vector<512x128xf32>
    %80 = arith.addf %74, %79 : vector<512x128xf32>
    %c4_72 = arith.constant 4 : index
    %c1_73 = arith.constant 1 : index
    %c0_74 = arith.constant 0 : index
    %c0_75 = arith.constant 0 : index
    %81 = vector.load %arg8[%c4_72, %c1_73, %c0_74, %c0_75] : memref<6x18x16x128xf32, #tpu.memory_space<vmem>>, vector<2x16x16x128xf32>
    %82 = vector.shape_cast %81 : vector<2x16x16x128xf32> to vector<512x128xf32>
    %c5 = arith.constant 5 : index
    %c0_76 = arith.constant 0 : index
    %c0_77 = arith.constant 0 : index
    %83 = vector.load %arg4[%c5, %c0_76, %c0_77] : memref<9x128x128xf32, #tpu.memory_space<vmem>>, vector<1x128x128xf32>
    %84 = vector.shape_cast %83 : vector<1x128x128xf32> to vector<128x128xf32>
    %cst_78 = arith.constant dense<0.000000e+00> : vector<512x128xf32>
    %85 = tpu.matmul %82, %84, %cst_78 {dimension_numbers = #tpu.dot_dimension_numbers<[1], [0], [0], [1], [0, 0, 1, 1], [], []>} : vector<512x128xf32>, vector<128x128xf32>, vector<512x128xf32> -> vector<512x128xf32>
    %86 = arith.addf %80, %85 : vector<512x128xf32>
    %c0_79 = arith.constant 0 : index
    %c2_80 = arith.constant 2 : index
    %c0_81 = arith.constant 0 : index
    %c0_82 = arith.constant 0 : index
    %87 = vector.load %arg8[%c0_79, %c2_80, %c0_81, %c0_82] : memref<6x18x16x128xf32, #tpu.memory_space<vmem>>, vector<2x16x16x128xf32>
    %88 = vector.shape_cast %87 : vector<2x16x16x128xf32> to vector<512x128xf32>
    %c6 = arith.constant 6 : index
    %c0_83 = arith.constant 0 : index
    %c0_84 = arith.constant 0 : index
    %89 = vector.load %arg4[%c6, %c0_83, %c0_84] : memref<9x128x128xf32, #tpu.memory_space<vmem>>, vector<1x128x128xf32>
    %90 = vector.shape_cast %89 : vector<1x128x128xf32> to vector<128x128xf32>
    %cst_85 = arith.constant dense<0.000000e+00> : vector<512x128xf32>
    %91 = tpu.matmul %88, %90, %cst_85 {dimension_numbers = #tpu.dot_dimension_numbers<[1], [0], [0], [1], [0, 0, 1, 1], [], []>} : vector<512x128xf32>, vector<128x128xf32>, vector<512x128xf32> -> vector<512x128xf32>
    %92 = arith.addf %86, %91 : vector<512x128xf32>
    %c2_86 = arith.constant 2 : index
    %c2_87 = arith.constant 2 : index
    %c0_88 = arith.constant 0 : index
    %c0_89 = arith.constant 0 : index
    %93 = vector.load %arg8[%c2_86, %c2_87, %c0_88, %c0_89] : memref<6x18x16x128xf32, #tpu.memory_space<vmem>>, vector<2x16x16x128xf32>
    %94 = vector.shape_cast %93 : vector<2x16x16x128xf32> to vector<512x128xf32>
    %c7 = arith.constant 7 : index
    %c0_90 = arith.constant 0 : index
    %c0_91 = arith.constant 0 : index
    %95 = vector.load %arg4[%c7, %c0_90, %c0_91] : memref<9x128x128xf32, #tpu.memory_space<vmem>>, vector<1x128x128xf32>
    %96 = vector.shape_cast %95 : vector<1x128x128xf32> to vector<128x128xf32>
    %cst_92 = arith.constant dense<0.000000e+00> : vector<512x128xf32>
    %97 = tpu.matmul %94, %96, %cst_92 {dimension_numbers = #tpu.dot_dimension_numbers<[1], [0], [0], [1], [0, 0, 1, 1], [], []>} : vector<512x128xf32>, vector<128x128xf32>, vector<512x128xf32> -> vector<512x128xf32>
    %98 = arith.addf %92, %97 : vector<512x128xf32>
    %c4_93 = arith.constant 4 : index
    %c2_94 = arith.constant 2 : index
    %c0_95 = arith.constant 0 : index
    %c0_96 = arith.constant 0 : index
    %99 = vector.load %arg8[%c4_93, %c2_94, %c0_95, %c0_96] : memref<6x18x16x128xf32, #tpu.memory_space<vmem>>, vector<2x16x16x128xf32>
    %100 = vector.shape_cast %99 : vector<2x16x16x128xf32> to vector<512x128xf32>
    %c8 = arith.constant 8 : index
    %c0_97 = arith.constant 0 : index
    %c0_98 = arith.constant 0 : index
    %101 = vector.load %arg4[%c8, %c0_97, %c0_98] : memref<9x128x128xf32, #tpu.memory_space<vmem>>, vector<1x128x128xf32>
    %102 = vector.shape_cast %101 : vector<1x128x128xf32> to vector<128x128xf32>
    %cst_99 = arith.constant dense<0.000000e+00> : vector<512x128xf32>
    %103 = tpu.matmul %100, %102, %cst_99 {dimension_numbers = #tpu.dot_dimension_numbers<[1], [0], [0], [1], [0, 0, 1, 1], [], []>} : vector<512x128xf32>, vector<128x128xf32>, vector<512x128xf32> -> vector<512x128xf32>
    %104 = arith.addf %98, %103 : vector<512x128xf32>
    %c0_100 = arith.constant 0 : index
    %c0_101 = arith.constant 0 : index
    %105 = vector.load %arg5[%c0_100, %c0_101] : memref<1x128xf32, #tpu.memory_space<vmem>>, vector<1x128xf32>
    %c0_102 = arith.constant 0 : index
    %c0_103 = arith.constant 0 : index
    %106 = vector.load %arg6[%c0_102, %c0_103] : memref<1x128xf32, #tpu.memory_space<vmem>>, vector<1x128xf32>
    %cst_104 = arith.constant dense<0.000000e+00> : vector<128xf32>
    %107 = vector.multi_reduction <add>, %104, %cst_104 [0] : vector<512x128xf32> to vector<128xf32>
    %108 = vector.shape_cast %107 : vector<128xf32> to vector<1x128xf32>
    %109 = arith.mulf %104, %104 : vector<512x128xf32>
    %cst_105 = arith.constant dense<0.000000e+00> : vector<128xf32>
    %110 = vector.multi_reduction <add>, %109, %cst_105 [0] : vector<512x128xf32> to vector<128xf32>
    %111 = vector.shape_cast %110 : vector<128xf32> to vector<1x128xf32>
    %cst_106 = arith.constant 0.001953125 : f32
    %112 = vector.broadcast %cst_106 : f32 to vector<1x128xf32>
    %113 = arith.mulf %108, %112 : vector<1x128xf32>
    %cst_107 = arith.constant 0.001953125 : f32
    %114 = vector.broadcast %cst_107 : f32 to vector<1x128xf32>
    %115 = arith.mulf %111, %114 : vector<1x128xf32>
    %116 = arith.mulf %113, %113 : vector<1x128xf32>
    %117 = arith.subf %115, %116 : vector<1x128xf32>
    %118 = vector.broadcast %113 : vector<1x128xf32> to vector<512x128xf32>
    %119 = arith.subf %104, %118 : vector<512x128xf32>
    %cst_108 = arith.constant 9.99999974E-6 : f32
    %120 = vector.broadcast %cst_108 : f32 to vector<1x128xf32>
    %121 = arith.addf %117, %120 : vector<1x128xf32>
    %122 = math.rsqrt %121 : vector<1x128xf32>
    %123 = vector.broadcast %122 : vector<1x128xf32> to vector<512x128xf32>
    %124 = arith.mulf %119, %123 : vector<512x128xf32>
    %125 = vector.broadcast %105 : vector<1x128xf32> to vector<512x128xf32>
    %126 = arith.mulf %124, %125 : vector<512x128xf32>
    %127 = vector.broadcast %106 : vector<1x128xf32> to vector<512x128xf32>
    %128 = arith.addf %126, %127 : vector<512x128xf32>
    %129 = arith.addf %128, %3 : vector<512x128xf32>
    %cst_109 = arith.constant 0.000000e+00 : f32
    %130 = vector.broadcast %cst_109 : f32 to vector<512x128xf32>
    %131 = arith.maximumf %129, %130 : vector<512x128xf32>
    %c0_110 = arith.constant 0 : index
    %c0_111 = arith.constant 0 : index
    %132 = vector.load %arg7[%c0_110, %c0_111] : memref<512x128xf32, #tpu.memory_space<vmem>>, vector<512x128xf32>
    tpu.vector_store %arg7[%c0_110, %c0_111], %131 {strides = array<i32>} : memref<512x128xf32, #tpu.memory_space<vmem>>, vector<512x128xf32>,
    return
  }
}

</mosaic_0001>

<llo_original>
// kernel: tpu_custom_call.1
$region0: #{tpu_custom_call.1}
  #allocation0 [shape = 'u32[]', space=smem, size = 0x4, offset = 0x4, fixed_abs, tag = 'smem constant byte address 0x4 - core index']
  #allocation1 [shape = 'u32[72,128]{1,0:T(1,128)}', space=vmem, size = 0x9000, scoped, tag = 'internal scratch']
  #allocation2 [shape = 'f32[6,18,16,128]{3,2,1,0:T(8,128)}', space=vmem, size = 0xd8000, scoped, tag = 'scratch operand']
  %s0 = inlined_call_operand.hbm [shape: f32[512,128], index: 0, kind: input, shape index: {}]
  %s1 = inlined_call_operand.hbm [shape: f32[128,256], index: 1, kind: input, shape index: {}]
  %s2 = inlined_call_operand.vmem [shape: f32[1,128], index: 2, kind: input, shape index: {}]
  %s3 = inlined_call_operand.vmem [shape: f32[1,128], index: 3, kind: input, shape index: {}]
  %s4 = inlined_call_operand.hbm [shape: f32[9,128,128], index: 4, kind: input, shape index: {}]
  %s5 = inlined_call_operand.vmem [shape: f32[1,128], index: 5, kind: input, shape index: {}]
  %s6 = inlined_call_operand.vmem [shape: f32[1,128], index: 6, kind: input, shape index: {}]
  %s7 = inlined_call_operand.hbm [shape: f32[512,128], index: 7, kind: output, shape index: {}]
  %s8 = sld [smem:[#allocation0]]
  $region50: #{tpu_custom_call.1} parent=0
    _
  %s10 = ssub.s32 1, %s8
  %s11 = scalar_select 0, %s10, %s8
  $region1: #{tpu_custom_call.1} parent=0
    #allocation3 [shape = 'u8[262144]{0}', space=vmem, size = 0x40000, scoped, tag = 'input window, operand 0, single buffered']
    #allocation4 [shape = 's32[1]{0}', space=sflag, size = 0x4, scoped, tag = 'scoped memory for tpu_custom_call.1']
    #allocation5 [shape = 's32[1]{0}', space=sflag, size = 0x4, scoped, tag = 'scoped memory for tpu_custom_call.1']
    #allocation6 [shape = 'u8[131072]{0}', space=vmem, size = 0x20000, scoped, tag = 'input window, operand 1, single buffered']
    #allocation7 [shape = 's32[1]{0}', space=sflag, size = 0x4, scoped, tag = 'scoped memory for tpu_custom_call.1']
    #allocation8 [shape = 'u8[589824]{0}', space=vmem, size = 0x90000, scoped, tag = 'input window, operand 4, single buffered']
    #allocation9 [shape = 'u8[262144]{0}', space=vmem, size = 0x40000, scoped, tag = 'output window, operand 0, single buffered']
    %12 = vsyncpa [#allocation4], 0
    %13 = vsyncpa [#allocation7], 0
    %14 = vsyncpa [#allocation5], 0
    // Predicated region
    $region2: #{tpu_custom_call.1} parent=1 // pred_check
      _
    $region3: #{tpu_custom_call.1} parent=1 // pred_check_branch
      %16 = sbr.rel (0) target = $region5
    $region4: #{tpu_custom_call.1} parent=1 // pred_region
      %18 = vsyncadd [#allocation4], 0
      %s19 = sshll.u32 %s0, 4
      %s20 = int_to_ptr.hbm [resolvable:$true] %s19
      %s21 = sshll.u32 [#allocation3], 4
      %s22 = int_to_ptr.vmem [resolvable:$true] %s21
      %27 = dma.hbm_to_vmem [thread:$0]  %s20, 8192, %s22, [#allocation4], 128, 128, 8
    $region5: #{tpu_custom_call.1} parent=1 // pred_fallthru
      _
    // Predicated region
    $region6: #{tpu_custom_call.1} parent=1 // pred_check
      _
    $region7: #{tpu_custom_call.1} parent=1 // pred_check_branch
      %29 = sbr.rel (0) target = $region9
    $region8: #{tpu_custom_call.1} parent=1 // pred_region
      %31 = vsyncadd [#allocation7], 0
      %s32 = sshll.u32 %s1, 4
      %s33 = int_to_ptr.hbm [resolvable:$true] %s32
      %s34 = sshll.u32 [#allocation6], 4
      %s35 = int_to_ptr.vmem [resolvable:$true] %s34
      %40 = dma.hbm_to_vmem [thread:$0]  %s33, 4096, %s35, [#allocation7], 256, 256, 16
    $region9: #{tpu_custom_call.1} parent=1 // pred_fallthru
      _
    // Predicated region
    $region10: #{tpu_custom_call.1} parent=1 // pred_check
      _
    $region11: #{tpu_custom_call.1} parent=1 // pred_check_branch
      %42 = sbr.rel (0) target = $region13
    $region12: #{tpu_custom_call.1} parent=1 // pred_region
      _
    $region13: #{tpu_custom_call.1} parent=1 // pred_fallthru
      _
    // Predicated region
    $region14: #{tpu_custom_call.1} parent=1 // pred_check
      _
    $region15: #{tpu_custom_call.1} parent=1 // pred_check_branch
      %44 = sbr.rel (0) target = $region17
    $region16: #{tpu_custom_call.1} parent=1 // pred_region
      _
    $region17: #{tpu_custom_call.1} parent=1 // pred_fallthru
      _
    // Predicated region
    $region18: #{tpu_custom_call.1} parent=1 // pred_check
      _
    $region19: #{tpu_custom_call.1} parent=1 // pred_check_branch
      %46 = sbr.rel (0) target = $region21
    $region20: #{tpu_custom_call.1} parent=1 // pred_region
      %48 = vsyncadd [#allocation7], 0
      %s49 = sshll.u32 %s4, 4
      %s50 = int_to_ptr.hbm [resolvable:$true] %s49
      %s51 = sshll.u32 [#allocation8], 4
      %s52 = int_to_ptr.vmem [resolvable:$true] %s51
      %57 = dma.hbm_to_vmem [thread:$0]  %s50, 18432, %s52, [#allocation7], 128, 128, 8
    $region21: #{tpu_custom_call.1} parent=1 // pred_fallthru
      _
    // Predicated region
    $region22: #{tpu_custom_call.1} parent=1 // pred_check
      _
    $region23: #{tpu_custom_call.1} parent=1 // pred_check_branch
      %59 = sbr.rel (0) target = $region25
    $region24: #{tpu_custom_call.1} parent=1 // pred_region
      _
    $region25: #{tpu_custom_call.1} parent=1 // pred_fallthru
      _
    // Predicated region
    $region26: #{tpu_custom_call.1} parent=1 // pred_check
      _
    $region27: #{tpu_custom_call.1} parent=1 // pred_check_branch
      %61 = sbr.rel (0) target = $region29
    $region28: #{tpu_custom_call.1} parent=1 // pred_region
      _
    $region29: #{tpu_custom_call.1} parent=1 // pred_fallthru
      _
    // Predicated region
    $region30: #{tpu_custom_call.1} parent=1 // pred_check
      _
    $region31: #{tpu_custom_call.1} parent=1 // pred_check_branch
      %63 = sbr.rel (0) target = $region33
    $region32: #{tpu_custom_call.1} parent=1 // pred_region
      %65 = dma.done [#allocation4], 8192
    $region33: #{tpu_custom_call.1} parent=1 // pred_fallthru
      _
    // Predicated region
    $region34: #{tpu_custom_call.1} parent=1 // pred_check
      _
    $region35: #{tpu_custom_call.1} parent=1 // pred_check_branch
      %67 = sbr.rel (0) target = $region37
    $region36: #{tpu_custom_call.1} parent=1 // pred_region
      %69 = dma.done [#allocation7], 4096
    $region37: #{tpu_custom_call.1} parent=1 // pred_fallthru
      _
    // Predicated region
    $region38: #{tpu_custom_call.1} parent=1 // pred_check
      _
    $region39: #{tpu_custom_call.1} parent=1 // pred_check_branch
      %71 = sbr.rel (0) target = $region41
    $region40: #{tpu_custom_call.1} parent=1 // pred_region
      %73 = dma.done [#allocation7], 18432
    $region41: #{tpu_custom_call.1} parent=1 // pred_fallthru
      _
    %v74 = vld [vmem:[#allocation3] sm:$0xff]
    %v75 = vld [vmem:[#allocation3 + $0x8] sm:$0xff]
    %v76 = vld [vmem:[#allocation3 + $0x10] sm:$0xff]
    %v77 = vld [vmem:[#allocation3 + $0x18] sm:$0xff]
    %v78 = vld [vmem:[#allocation3 + $0x20] sm:$0xff]
    %v79 = vld [vmem:[#allocation3 + $0x28] sm:$0xff]
    %v80 = vld [vmem:[#allocation3 + $0x30] sm:$0xff]
    %v81 = vld [vmem:[#allocation3 + $0x38] sm:$0xff]
    %v82 = vld [vmem:[#allocation3 + $0x40] sm:$0xff]
    %v83 = vld [vmem:[#allocation3 + $0x48] sm:$0xff]
    %v84 = vld [vmem:[#allocation3 + $0x50] sm:$0xff]
    %v85 = vld [vmem:[#allocation3 + $0x58] sm:$0xff]
    %v86 = vld [vmem:[#allocation3 + $0x60] sm:$0xff]
    %v87 = vld [vmem:[#allocation3 + $0x68] sm:$0xff]
    %v88 = vld [vmem:[#allocation3 + $0x70] sm:$0xff]
    %v89 = vld [vmem:[#allocation3 + $0x78] sm:$0xff]
    %v90 = vld [vmem:[#allocation3 + $0x80] sm:$0xff]
    %v91 = vld [vmem:[#allocation3 + $0x88] sm:$0xff]
    %v92 = vld [vmem:[#allocation3 + $0x90] sm:$0xff]
    %v93 = vld [vmem:[#allocation3 + $0x98] sm:$0xff]
    %v94 = vld [vmem:[#allocation3 + $0xa0] sm:$0xff]
    %v95 = vld [vmem:[#allocation3 + $0xa8] sm:$0xff]
    %v96 = vld [vmem:[#allocation3 + $0xb0] sm:$0xff]
    %v97 = vld [vmem:[#allocation3 + $0xb8] sm:$0xff]
    %v98 = vld [vmem:[#allocation3 + $0xc0] sm:$0xff]
    %v99 = vld [vmem:[#allocation3 + $0xc8] sm:$0xff]
    %v100 = vld [vmem:[#allocation3 + $0xd0] sm:$0xff]
    %v101 = vld [vmem:[#allocation3 + $0xd8] sm:$0xff]
    %v102 = vld [vmem:[#allocation3 + $0xe0] sm:$0xff]
    %v103 = vld [vmem:[#allocation3 + $0xe8] sm:$0xff]
    %v104 = vld [vmem:[#allocation3 + $0xf0] sm:$0xff]
    %v105 = vld [vmem:[#allocation3 + $0xf8] sm:$0xff]
    %v106 = vld [vmem:[#allocation3 + $0x100] sm:$0xff]
    %v107 = vld [vmem:[#allocation3 + $0x108] sm:$0xff]
    %v108 = vld [vmem:[#allocation3 + $0x110] sm:$0xff]
    %v109 = vld [vmem:[#allocation3 + $0x118] sm:$0xff]
    %v110 = vld [vmem:[#allocation3 + $0x120] sm:$0xff]
    %v111 = vld [vmem:[#allocation3 + $0x128] sm:$0xff]
    %v112 = vld [vmem:[#allocation3 + $0x130] sm:$0xff]
    %v113 = vld [vmem:[#allocation3 + $0x138] sm:$0xff]
    %v114 = vld [vmem:[#allocation3 + $0x140] sm:$0xff]
    %v115 = vld [vmem:[#allocation3 + $0x148] sm:$0xff]
    %v116 = vld [vmem:[#allocation3 + $0x150] sm:$0xff]
    %v117 = vld [vmem:[#allocation3 + $0x158] sm:$0xff]
    %v118 = vld [vmem:[#allocation3 + $0x160] sm:$0xff]
    %v119 = vld [vmem:[#allocation3 + $0x168] sm:$0xff]
    %v120 = vld [vmem:[#allocation3 + $0x170] sm:$0xff]
    %v121 = vld [vmem:[#allocation3 + $0x178] sm:$0xff]
    %v122 = vld [vmem:[#allocation3 + $0x180] sm:$0xff]
    %v123 = vld [vmem:[#allocation3 + $0x188] sm:$0xff]
    %v124 = vld [vmem:[#allocation3 + $0x190] sm:$0xff]
    %v125 = vld [vmem:[#allocation3 + $0x198] sm:$0xff]
    %v126 = vld [vmem:[#allocation3 + $0x1a0] sm:$0xff]
    %v127 = vld [vmem:[#allocation3 + $0x1a8] sm:$0xff]
    %v128 = vld [vmem:[#allocation3 + $0x1b0] sm:$0xff]
    %v129 = vld [vmem:[#allocation3 + $0x1b8] sm:$0xff]
    %v130 = vld [vmem:[#allocation3 + $0x1c0] sm:$0xff]
    %v131 = vld [vmem:[#allocation3 + $0x1c8] sm:$0xff]
    %v132 = vld [vmem:[#allocation3 + $0x1d0] sm:$0xff]
    %v133 = vld [vmem:[#allocation3 + $0x1d8] sm:$0xff]
    %v134 = vld [vmem:[#allocation3 + $0x1e0] sm:$0xff]
    %v135 = vld [vmem:[#allocation3 + $0x1e8] sm:$0xff]
    %v136 = vld [vmem:[#allocation3 + $0x1f0] sm:$0xff]
    %v137 = vld [vmem:[#allocation3 + $0x1f8] sm:$0xff]
    %v138 = vld [vmem:[#allocation6] sm:$0xff]
    %v139 = vld [vmem:[#allocation6 + $0x8] sm:$0xff]
    %v140 = vld [vmem:[#allocation6 + $0x10] sm:$0xff]
    %v141 = vld [vmem:[#allocation6 + $0x18] sm:$0xff]
    %v142 = vld [vmem:[#allocation6 + $0x20] sm:$0xff]
    %v143 = vld [vmem:[#allocation6 + $0x28] sm:$0xff]
    %v144 = vld [vmem:[#allocation6 + $0x30] sm:$0xff]
    %v145 = vld [vmem:[#allocation6 + $0x38] sm:$0xff]
    %v146 = vld [vmem:[#allocation6 + $0x40] sm:$0xff]
    %v147 = vld [vmem:[#allocation6 + $0x48] sm:$0xff]
    %v148 = vld [vmem:[#allocation6 + $0x50] sm:$0xff]
    %v149 = vld [vmem:[#allocation6 + $0x58] sm:$0xff]
    %v150 = vld [vmem:[#allocation6 + $0x60] sm:$0xff]
    %v151 = vld [vmem:[#allocation6 + $0x68] sm:$0xff]
    %v152 = vld [vmem:[#allocation6 + $0x70] sm:$0xff]
    %v153 = vld [vmem:[#allocation6 + $0x78] sm:$0xff]
    %v154 = vld [vmem:[#allocation6 + $0x80] sm:$0xff]
    %v155 = vld [vmem:[#allocation6 + $0x88] sm:$0xff]
    %v156 = vld [vmem:[#allocation6 + $0x90] sm:$0xff]
    %v157 = vld [vmem:[#allocation6 + $0x98] sm:$0xff]
    %v158 = vld [vmem:[#allocation6 + $0xa0] sm:$0xff]
    %v159 = vld [vmem:[#allocation6 + $0xa8] sm:$0xff]
    %v160 = vld [vmem:[#allocation6 + $0xb0] sm:$0xff]
    %v161 = vld [vmem:[#allocation6 + $0xb8] sm:$0xff]
    %v162 = vld [vmem:[#allocation6 + $0xc0] sm:$0xff]
    %v163 = vld [vmem:[#allocation6 + $0xc8] sm:$0xff]
    %v164 = vld [vmem:[#allocation6 + $0xd0] sm:$0xff]
    %v165 = vld [vmem:[#allocation6 + $0xd8] sm:$0xff]
    %v166 = vld [vmem:[#allocation6 + $0xe0] sm:$0xff]
    %v167 = vld [vmem:[#allocation6 + $0xe8] sm:$0xff]
    %v168 = vld [vmem:[#allocation6 + $0xf0] sm:$0xff]
    %v169 = vld [vmem:[#allocation6 + $0xf8] sm:$0xff]
    %170 = vmatpush.msra.mxu0 %v168
    %171 = vmatpush.msra.mxu0 %v166
    %172 = vmatpush.msra.mxu0 %v164
    %173 = vmatpush.msra.mxu0 %v162
    %174 = vmatpush.msra.mxu0 %v160
    %175 = vmatpush.msra.mxu0 %v158
    %176 = vmatpush.msra.mxu0 %v156
    %177 = vmatpush.msra.mxu0 %v154
    %178 = vmatpush.msra.mxu0 %v152
    %179 = vmatpush.msra.mxu0 %v150
    %180 = vmatpush.msra.mxu0 %v148
    %181 = vmatpush.msra.mxu0 %v146
    %182 = vmatpush.msra.mxu0 %v144
    %183 = vmatpush.msra.mxu0 %v142
    %184 = vmatpush.msra.mxu0 %v140
    %185 = vmatpush.msra.mxu0 %v138
    %186 = vmatmul.f32.gmra.mxu0 %v74
    %v187 = vpop.f32.mrf.mxu0
    %v188 = vadd.f32 0.0, %v187
    %189 = vmatmul.f32.gmra.mxu0 %v75
    %v190 = vpop.f32.mrf.mxu0
    %v191 = vadd.f32 0.0, %v190
    %192 = vmatmul.f32.gmra.mxu0 %v76
    %v193 = vpop.f32.mrf.mxu0
    %v194 = vadd.f32 0.0, %v193
    %195 = vmatmul.f32.gmra.mxu0 %v77
    %v196 = vpop.f32.mrf.mxu0
    %v197 = vadd.f32 0.0, %v196
    %198 = vmatmul.f32.gmra.mxu0 %v78
    %v199 = vpop.f32.mrf.mxu0
    %v200 = vadd.f32 0.0, %v199
    %201 = vmatmul.f32.gmra.mxu0 %v79
    %v202 = vpop.f32.mrf.mxu0
    %v203 = vadd.f32 0.0, %v202
    %204 = vmatmul.f32.gmra.mxu0 %v80
    %v205 = vpop.f32.mrf.mxu0
    %v206 = vadd.f32 0.0, %v205
    %207 = vmatmul.f32.gmra.mxu0 %v81
    %v208 = vpop.f32.mrf.mxu0
    %v209 = vadd.f32 0.0, %v208
    %210 = vmatmul.f32.gmra.mxu0 %v82
    %v211 = vpop.f32.mrf.mxu0
    %v212 = vadd.f32 0.0, %v211
    %213 = vmatmul.f32.gmra.mxu0 %v83
    %v214 = vpop.f32.mrf.mxu0
    %v215 = vadd.f32 0.0, %v214
    %216 = vmatmul.f32.gmra.mxu0 %v84
    %v217 = vpop.f32.mrf.mxu0
    %v218 = vadd.f32 0.0, %v217
    %219 = vmatmul.f32.gmra.mxu0 %v85
    %v220 = vpop.f32.mrf.mxu0
    %v221 = vadd.f32 0.0, %v220
    %222 = vmatmul.f32.gmra.mxu0 %v86
    %v223 = vpop.f32.mrf.mxu0
    %v224 = vadd.f32 0.0, %v223
    %225 = vmatmul.f32.gmra.mxu0 %v87
    %v226 = vpop.f32.mrf.mxu0
    %v227 = vadd.f32 0.0, %v226
    %228 = vmatmul.f32.gmra.mxu0 %v88
    %v229 = vpop.f32.mrf.mxu0
    %v230 = vadd.f32 0.0, %v229
    %231 = vmatmul.f32.gmra.mxu0 %v89
    %v232 = vpop.f32.mrf.mxu0
    %v233 = vadd.f32 0.0, %v232
    %234 = vmatmul.f32.gmra.mxu0 %v90
    %v235 = vpop.f32.mrf.mxu0
    %v236 = vadd.f32 0.0, %v235
    %237 = vmatmul.f32.gmra.mxu0 %v91
    %v238 = vpop.f32.mrf.mxu0
    %v239 = vadd.f32 0.0, %v238
    %240 = vmatmul.f32.gmra.mxu0 %v92
    %v241 = vpop.f32.mrf.mxu0
    %v242 = vadd.f32 0.0, %v241
    %243 = vmatmul.f32.gmra.mxu0 %v93
    %v244 = vpop.f32.mrf.mxu0
    %v245 = vadd.f32 0.0, %v244
    %246 = vmatmul.f32.gmra.mxu0 %v94
    %v247 = vpop.f32.mrf.mxu0
    %v248 = vadd.f32 0.0, %v247
    %249 = vmatmul.f32.gmra.mxu0 %v95
    %v250 = vpop.f32.mrf.mxu0
    %v251 = vadd.f32 0.0, %v250
    %252 = vmatmul.f32.gmra.mxu0 %v96
    %v253 = vpop.f32.mrf.mxu0
    %v254 = vadd.f32 0.0, %v253
    %255 = vmatmul.f32.gmra.mxu0 %v97
    %v256 = vpop.f32.mrf.mxu0
    %v257 = vadd.f32 0.0, %v256
    %258 = vmatmul.f32.gmra.mxu0 %v98
    %v259 = vpop.f32.mrf.mxu0
    %v260 = vadd.f32 0.0, %v259
    %261 = vmatmul.f32.gmra.mxu0 %v99
    %v262 = vpop.f32.mrf.mxu0
    %v263 = vadd.f32 0.0, %v262
    %264 = vmatmul.f32.gmra.mxu0 %v100
    %v265 = vpop.f32.mrf.mxu0
    %v266 = vadd.f32 0.0, %v265
    %267 = vmatmul.f32.gmra.mxu0 %v101
    %v268 = vpop.f32.mrf.mxu0
    %v269 = vadd.f32 0.0, %v268
    %270 = vmatmul.f32.gmra.mxu0 %v102
    %v271 = vpop.f32.mrf.mxu0
    %v272 = vadd.f32 0.0, %v271
    %273 = vmatmul.f32.gmra.mxu0 %v103
    %v274 = vpop.f32.mrf.mxu0
    %v275 = vadd.f32 0.0, %v274
    %276 = vmatmul.f32.gmra.mxu0 %v104
    %v277 = vpop.f32.mrf.mxu0
    %v278 = vadd.f32 0.0, %v277
    %279 = vmatmul.f32.gmra.mxu0 %v105
    %v280 = vpop.f32.mrf.mxu0
    %v281 = vadd.f32 0.0, %v280
    %282 = vmatmul.f32.gmra.mxu0 %v106
    %v283 = vpop.f32.mrf.mxu0
    %v284 = vadd.f32 0.0, %v283
    %285 = vmatmul.f32.gmra.mxu0 %v107
    %v286 = vpop.f32.mrf.mxu0
    %v287 = vadd.f32 0.0, %v286
    %288 = vmatmul.f32.gmra.mxu0 %v108
    %v289 = vpop.f32.mrf.mxu0
    %v290 = vadd.f32 0.0, %v289
    %291 = vmatmul.f32.gmra.mxu0 %v109
    %v292 = vpop.f32.mrf.mxu0
    %v293 = vadd.f32 0.0, %v292
    %294 = vmatmul.f32.gmra.mxu0 %v110
    %v295 = vpop.f32.mrf.mxu0
    %v296 = vadd.f32 0.0, %v295
    %297 = vmatmul.f32.gmra.mxu0 %v111
    %v298 = vpop.f32.mrf.mxu0
    %v299 = vadd.f32 0.0, %v298
    %300 = vmatmul.f32.gmra.mxu0 %v112
    %v301 = vpop.f32.mrf.mxu0
    %v302 = vadd.f32 0.0, %v301
    %303 = vmatmul.f32.gmra.mxu0 %v113
    %v304 = vpop.f32.mrf.mxu0
    %v305 = vadd.f32 0.0, %v304
    %306 = vmatmul.f32.gmra.mxu0 %v114
    %v307 = vpop.f32.mrf.mxu0
    %v308 = vadd.f32 0.0, %v307
    %309 = vmatmul.f32.gmra.mxu0 %v115
    %v310 = vpop.f32.mrf.mxu0
    %v311 = vadd.f32 0.0, %v310
    %312 = vmatmul.f32.gmra.mxu0 %v116
    %v313 = vpop.f32.mrf.mxu0
    %v314 = vadd.f32 0.0, %v313
    %315 = vmatmul.f32.gmra.mxu0 %v117
    %v316 = vpop.f32.mrf.mxu0
    %v317 = vadd.f32 0.0, %v316
    %318 = vmatmul.f32.gmra.mxu0 %v118
    %v319 = vpop.f32.mrf.mxu0
    %v320 = vadd.f32 0.0, %v319
    %321 = vmatmul.f32.gmra.mxu0 %v119
    %v322 = vpop.f32.mrf.mxu0
    %v323 = vadd.f32 0.0, %v322
    %324 = vmatmul.f32.gmra.mxu0 %v120
    %v325 = vpop.f32.mrf.mxu0
    %v326 = vadd.f32 0.0, %v325
    %327 = vmatmul.f32.gmra.mxu0 %v121
    %v328 = vpop.f32.mrf.mxu0
    %v329 = vadd.f32 0.0, %v328
    %330 = vmatmul.f32.gmra.mxu0 %v122
    %v331 = vpop.f32.mrf.mxu0
    %v332 = vadd.f32 0.0, %v331
    %333 = vmatmul.f32.gmra.mxu0 %v123
    %v334 = vpop.f32.mrf.mxu0
    %v335 = vadd.f32 0.0, %v334
    %336 = vmatmul.f32.gmra.mxu0 %v124
    %v337 = vpop.f32.mrf.mxu0
    %v338 = vadd.f32 0.0, %v337
    %339 = vmatmul.f32.gmra.mxu0 %v125
    %v340 = vpop.f32.mrf.mxu0
    %v341 = vadd.f32 0.0, %v340
    %342 = vmatmul.f32.gmra.mxu0 %v126
    %v343 = vpop.f32.mrf.mxu0
    %v344 = vadd.f32 0.0, %v343
    %345 = vmatmul.f32.gmra.mxu0 %v127
    %v346 = vpop.f32.mrf.mxu0
    %v347 = vadd.f32 0.0, %v346
    %348 = vmatmul.f32.gmra.mxu0 %v128
    %v349 = vpop.f32.mrf.mxu0
    %v350 = vadd.f32 0.0, %v349
    %351 = vmatmul.f32.gmra.mxu0 %v129
    %v352 = vpop.f32.mrf.mxu0
    %v353 = vadd.f32 0.0, %v352
    %354 = vmatmul.f32.gmra.mxu0 %v130
    %v355 = vpop.f32.mrf.mxu0
    %v356 = vadd.f32 0.0, %v355
    %357 = vmatmul.f32.gmra.mxu0 %v131
    %v358 = vpop.f32.mrf.mxu0
    %v359 = vadd.f32 0.0, %v358
    %360 = vmatmul.f32.gmra.mxu0 %v132
    %v361 = vpop.f32.mrf.mxu0
    %v362 = vadd.f32 0.0, %v361
    %363 = vmatmul.f32.gmra.mxu0 %v133
    %v364 = vpop.f32.mrf.mxu0
    %v365 = vadd.f32 0.0, %v364
    %366 = vmatmul.f32.gmra.mxu0 %v134
    %v367 = vpop.f32.mrf.mxu0
    %v368 = vadd.f32 0.0, %v367
    %369 = vmatmul.f32.gmra.mxu0 %v135
    %v370 = vpop.f32.mrf.mxu0
    %v371 = vadd.f32 0.0, %v370
    %372 = vmatmul.f32.gmra.mxu0 %v136
    %v373 = vpop.f32.mrf.mxu0
    %v374 = vadd.f32 0.0, %v373
    %375 = vmatmul.f32.gmra.mxu0 %v137
    %v376 = vpop.f32.mrf.mxu0
    %v377 = vadd.f32 0.0, %v376
    %378 = vdwg.mxu0
    %379 = vmatpush.msra.mxu0 %v169
    %380 = vmatpush.msra.mxu0 %v167
    %381 = vmatpush.msra.mxu0 %v165
    %382 = vmatpush.msra.mxu0 %v163
    %383 = vmatpush.msra.mxu0 %v161
    %384 = vmatpush.msra.mxu0 %v159
    %385 = vmatpush.msra.mxu0 %v157
    %386 = vmatpush.msra.mxu0 %v155
    %387 = vmatpush.msra.mxu0 %v153
    %388 = vmatpush.msra.mxu0 %v151
    %389 = vmatpush.msra.mxu0 %v149
    %390 = vmatpush.msra.mxu0 %v147
    %391 = vmatpush.msra.mxu0 %v145
    %392 = vmatpush.msra.mxu0 %v143
    %393 = vmatpush.msra.mxu0 %v141
    %394 = vmatpush.msra.mxu0 %v139
    %395 = vmatmul.f32.gmra.mxu0 %v74
    %v396 = vpop.f32.mrf.mxu0
    %v397 = vadd.f32 0.0, %v396
    %398 = vmatmul.f32.gmra.mxu0 %v75
    %v399 = vpop.f32.mrf.mxu0
    %v400 = vadd.f32 0.0, %v399
    %401 = vmatmul.f32.gmra.mxu0 %v76
    %v402 = vpop.f32.mrf.mxu0
    %v403 = vadd.f32 0.0, %v402
    %404 = vmatmul.f32.gmra.mxu0 %v77
    %v405 = vpop.f32.mrf.mxu0
    %v406 = vadd.f32 0.0, %v405
    %407 = vmatmul.f32.gmra.mxu0 %v78
    %v408 = vpop.f32.mrf.mxu0
    %v409 = vadd.f32 0.0, %v408
    %410 = vmatmul.f32.gmra.mxu0 %v79
    %v411 = vpop.f32.mrf.mxu0
    %v412 = vadd.f32 0.0, %v411
    %413 = vmatmul.f32.gmra.mxu0 %v80
    %v414 = vpop.f32.mrf.mxu0
    %v415 = vadd.f32 0.0, %v414
    %416 = vmatmul.f32.gmra.mxu0 %v81
    %v417 = vpop.f32.mrf.mxu0
    %v418 = vadd.f32 0.0, %v417
    %419 = vmatmul.f32.gmra.mxu0 %v82
    %v420 = vpop.f32.mrf.mxu0
    %v421 = vadd.f32 0.0, %v420
    %422 = vmatmul.f32.gmra.mxu0 %v83
    %v423 = vpop.f32.mrf.mxu0
    %v424 = vadd.f32 0.0, %v423
    %425 = vmatmul.f32.gmra.mxu0 %v84
    %v426 = vpop.f32.mrf.mxu0
    %v427 = vadd.f32 0.0, %v426
    %428 = vmatmul.f32.gmra.mxu0 %v85
    %v429 = vpop.f32.mrf.mxu0
    %v430 = vadd.f32 0.0, %v429
    %431 = vmatmul.f32.gmra.mxu0 %v86
    %v432 = vpop.f32.mrf.mxu0
    %v433 = vadd.f32 0.0, %v432
    %434 = vmatmul.f32.gmra.mxu0 %v87
    %v435 = vpop.f32.mrf.mxu0
    %v436 = vadd.f32 0.0, %v435
    %437 = vmatmul.f32.gmra.mxu0 %v88
    %v438 = vpop.f32.mrf.mxu0
    %v439 = vadd.f32 0.0, %v438
    %440 = vmatmul.f32.gmra.mxu0 %v89
    %v441 = vpop.f32.mrf.mxu0
    %v442 = vadd.f32 0.0, %v441
    %443 = vmatmul.f32.gmra.mxu0 %v90
    %v444 = vpop.f32.mrf.mxu0
    %v445 = vadd.f32 0.0, %v444
    %446 = vmatmul.f32.gmra.mxu0 %v91
    %v447 = vpop.f32.mrf.mxu0
    %v448 = vadd.f32 0.0, %v447
    %449 = vmatmul.f32.gmra.mxu0 %v92
    %v450 = vpop.f32.mrf.mxu0
    %v451 = vadd.f32 0.0, %v450
    %452 = vmatmul.f32.gmra.mxu0 %v93
    %v453 = vpop.f32.mrf.mxu0
    %v454 = vadd.f32 0.0, %v453
    %455 = vmatmul.f32.gmra.mxu0 %v94
    %v456 = vpop.f32.mrf.mxu0
    %v457 = vadd.f32 0.0, %v456
    %458 = vmatmul.f32.gmra.mxu0 %v95
    %v459 = vpop.f32.mrf.mxu0
    %v460 = vadd.f32 0.0, %v459
    %461 = vmatmul.f32.gmra.mxu0 %v96
    %v462 = vpop.f32.mrf.mxu0
    %v463 = vadd.f32 0.0, %v462
    %464 = vmatmul.f32.gmra.mxu0 %v97
    %v465 = vpop.f32.mrf.mxu0
    %v466 = vadd.f32 0.0, %v465
    %467 = vmatmul.f32.gmra.mxu0 %v98
    %v468 = vpop.f32.mrf.mxu0
    %v469 = vadd.f32 0.0, %v468
    %470 = vmatmul.f32.gmra.mxu0 %v99
    %v471 = vpop.f32.mrf.mxu0
    %v472 = vadd.f32 0.0, %v471
    %473 = vmatmul.f32.gmra.mxu0 %v100
    %v474 = vpop.f32.mrf.mxu0
    %v475 = vadd.f32 0.0, %v474
    %476 = vmatmul.f32.gmra.mxu0 %v101
    %v477 = vpop.f32.mrf.mxu0
    %v478 = vadd.f32 0.0, %v477
    %479 = vmatmul.f32.gmra.mxu0 %v102
    %v480 = vpop.f32.mrf.mxu0
    %v481 = vadd.f32 0.0, %v480
    %482 = vmatmul.f32.gmra.mxu0 %v103
    %v483 = vpop.f32.mrf.mxu0
    %v484 = vadd.f32 0.0, %v483
    %485 = vmatmul.f32.gmra.mxu0 %v104
    %v486 = vpop.f32.mrf.mxu0
    %v487 = vadd.f32 0.0, %v486
    %488 = vmatmul.f32.gmra.mxu0 %v105
    %v489 = vpop.f32.mrf.mxu0
    %v490 = vadd.f32 0.0, %v489
    %491 = vmatmul.f32.gmra.mxu0 %v106
    %v492 = vpop.f32.mrf.mxu0
    %v493 = vadd.f32 0.0, %v492
    %494 = vmatmul.f32.gmra.mxu0 %v107
    %v495 = vpop.f32.mrf.mxu0
    %v496 = vadd.f32 0.0, %v495
    %497 = vmatmul.f32.gmra.mxu0 %v108
    %v498 = vpop.f32.mrf.mxu0
    %v499 = vadd.f32 0.0, %v498
    %500 = vmatmul.f32.gmra.mxu0 %v109
    %v501 = vpop.f32.mrf.mxu0
    %v502 = vadd.f32 0.0, %v501
    %503 = vmatmul.f32.gmra.mxu0 %v110
    %v504 = vpop.f32.mrf.mxu0
    %v505 = vadd.f32 0.0, %v504
    %506 = vmatmul.f32.gmra.mxu0 %v111
    %v507 = vpop.f32.mrf.mxu0
    %v508 = vadd.f32 0.0, %v507
    %509 = vmatmul.f32.gmra.mxu0 %v112
    %v510 = vpop.f32.mrf.mxu0
    %v511 = vadd.f32 0.0, %v510
    %512 = vmatmul.f32.gmra.mxu0 %v113
    %v513 = vpop.f32.mrf.mxu0
    %v514 = vadd.f32 0.0, %v513
    %515 = vmatmul.f32.gmra.mxu0 %v114
    %v516 = vpop.f32.mrf.mxu0
    %v517 = vadd.f32 0.0, %v516
    %518 = vmatmul.f32.gmra.mxu0 %v115
    %v519 = vpop.f32.mrf.mxu0
    %v520 = vadd.f32 0.0, %v519
    %521 = vmatmul.f32.gmra.mxu0 %v116
    %v522 = vpop.f32.mrf.mxu0
    %v523 = vadd.f32 0.0, %v522
    %524 = vmatmul.f32.gmra.mxu0 %v117
    %v525 = vpop.f32.mrf.mxu0
    %v526 = vadd.f32 0.0, %v525
    %527 = vmatmul.f32.gmra.mxu0 %v118
    %v528 = vpop.f32.mrf.mxu0
    %v529 = vadd.f32 0.0, %v528
    %530 = vmatmul.f32.gmra.mxu0 %v119
    %v531 = vpop.f32.mrf.mxu0
    %v532 = vadd.f32 0.0, %v531
    %533 = vmatmul.f32.gmra.mxu0 %v120
    %v534 = vpop.f32.mrf.mxu0
    %v535 = vadd.f32 0.0, %v534
    %536 = vmatmul.f32.gmra.mxu0 %v121
    %v537 = vpop.f32.mrf.mxu0
    %v538 = vadd.f32 0.0, %v537
    %539 = vmatmul.f32.gmra.mxu0 %v122
    %v540 = vpop.f32.mrf.mxu0
    %v541 = vadd.f32 0.0, %v540
    %542 = vmatmul.f32.gmra.mxu0 %v123
    %v543 = vpop.f32.mrf.mxu0
    %v544 = vadd.f32 0.0, %v543
    %545 = vmatmul.f32.gmra.mxu0 %v124
    %v546 = vpop.f32.mrf.mxu0
    %v547 = vadd.f32 0.0, %v546
    %548 = vmatmul.f32.gmra.mxu0 %v125
    %v549 = vpop.f32.mrf.mxu0
    %v550 = vadd.f32 0.0, %v549
    %551 = vmatmul.f32.gmra.mxu0 %v126
    %v552 = vpop.f32.mrf.mxu0
    %v553 = vadd.f32 0.0, %v552
    %554 = vmatmul.f32.gmra.mxu0 %v127
    %v555 = vpop.f32.mrf.mxu0
    %v556 = vadd.f32 0.0, %v555
    %557 = vmatmul.f32.gmra.mxu0 %v128
    %v558 = vpop.f32.mrf.mxu0
    %v559 = vadd.f32 0.0, %v558
    %560 = vmatmul.f32.gmra.mxu0 %v129
    %v561 = vpop.f32.mrf.mxu0
    %v562 = vadd.f32 0.0, %v561
    %563 = vmatmul.f32.gmra.mxu0 %v130
    %v564 = vpop.f32.mrf.mxu0
    %v565 = vadd.f32 0.0, %v564
    %566 = vmatmul.f32.gmra.mxu0 %v131
    %v567 = vpop.f32.mrf.mxu0
    %v568 = vadd.f32 0.0, %v567
    %569 = vmatmul.f32.gmra.mxu0 %v132
    %v570 = vpop.f32.mrf.mxu0
    %v571 = vadd.f32 0.0, %v570
    %572 = vmatmul.f32.gmra.mxu0 %v133
    %v573 = vpop.f32.mrf.mxu0
    %v574 = vadd.f32 0.0, %v573
    %575 = vmatmul.f32.gmra.mxu0 %v134
    %v576 = vpop.f32.mrf.mxu0
    %v577 = vadd.f32 0.0, %v576
    %578 = vmatmul.f32.gmra.mxu0 %v135
    %v579 = vpop.f32.mrf.mxu0
    %v580 = vadd.f32 0.0, %v579
    %581 = vmatmul.f32.gmra.mxu0 %v136
    %v582 = vpop.f32.mrf.mxu0
    %v583 = vadd.f32 0.0, %v582
    %584 = vmatmul.f32.gmra.mxu0 %v137
    %v585 = vpop.f32.mrf.mxu0
    %v586 = vadd.f32 0.0, %v585
    %587 = vdwg.mxu0
    %v588 = vld [vmem:[%s2] sm:$0x1]
    %v589 = vld [vmem:[%s3] sm:$0x1]
    %v590 = vadd.f32 %v188, %v191
    %v591 = vadd.f32 %v590, %v194
    %v592 = vadd.f32 %v591, %v197
    %v593 = vadd.f32 %v592, %v200
    %v594 = vadd.f32 %v593, %v203
    %v595 = vadd.f32 %v594, %v206
    %v596 = vadd.f32 %v595, %v209
    %v597 = vadd.f32 %v596, %v212
    %v598 = vadd.f32 %v597, %v215
    %v599 = vadd.f32 %v598, %v218
    %v600 = vadd.f32 %v599, %v221
    %v601 = vadd.f32 %v600, %v224
    %v602 = vadd.f32 %v601, %v227
    %v603 = vadd.f32 %v602, %v230
    %v604 = vadd.f32 %v603, %v233
    %v605 = vadd.f32 %v604, %v236
    %v606 = vadd.f32 %v605, %v239
    %v607 = vadd.f32 %v606, %v242
    %v608 = vadd.f32 %v607, %v245
    %v609 = vadd.f32 %v608, %v248
    %v610 = vadd.f32 %v609, %v251
    %v611 = vadd.f32 %v610, %v254
    %v612 = vadd.f32 %v611, %v257
    %v613 = vadd.f32 %v612, %v260
    %v614 = vadd.f32 %v613, %v263
    %v615 = vadd.f32 %v614, %v266
    %v616 = vadd.f32 %v615, %v269
    %v617 = vadd.f32 %v616, %v272
    %v618 = vadd.f32 %v617, %v275
    %v619 = vadd.f32 %v618, %v278
    %v620 = vadd.f32 %v619, %v281
    %v621 = vadd.f32 %v620, %v284
    %v622 = vadd.f32 %v621, %v287
    %v623 = vadd.f32 %v622, %v290
    %v624 = vadd.f32 %v623, %v293
    %v625 = vadd.f32 %v624, %v296
    %v626 = vadd.f32 %v625, %v299
    %v627 = vadd.f32 %v626, %v302
    %v628 = vadd.f32 %v627, %v305
    %v629 = vadd.f32 %v628, %v308
    %v630 = vadd.f32 %v629, %v311
    %v631 = vadd.f32 %v630, %v314
    %v632 = vadd.f32 %v631, %v317
    %v633 = vadd.f32 %v632, %v320
    %v634 = vadd.f32 %v633, %v323
    %v635 = vadd.f32 %v634, %v326
    %v636 = vadd.f32 %v635, %v329
    %v637 = vadd.f32 %v636, %v332
    %v638 = vadd.f32 %v637, %v335
    %v639 = vadd.f32 %v638, %v338
    %v640 = vadd.f32 %v639, %v341
    %v641 = vadd.f32 %v640, %v344
    %v642 = vadd.f32 %v641, %v347
    %v643 = vadd.f32 %v642, %v350
    %v644 = vadd.f32 %v643, %v353
    %v645 = vadd.f32 %v644, %v356
    %v646 = vadd.f32 %v645, %v359
    %v647 = vadd.f32 %v646, %v362
    %v648 = vadd.f32 %v647, %v365
    %v649 = vadd.f32 %v648, %v368
    %v650 = vadd.f32 %v649, %v371
    %v651 = vadd.f32 %v650, %v374
    %v652 = vadd.f32 %v651, %v377
    %v653 = vrot.slane %v652, 4
    %v654 = vadd.f32 %v652, %v653
    %v655 = vrot.slane %v654, 2
    %v656 = vadd.f32 %v654, %v655
    %v657 = vrot.slane %v656, 1
    %v658 = vadd.f32 %v656, %v657
    %v659 = vmul.f32 %v188, %v188
    %v660 = vmul.f32 %v191, %v191
    %v661 = vmul.f32 %v194, %v194
    %v662 = vmul.f32 %v197, %v197
    %v663 = vmul.f32 %v200, %v200
    %v664 = vmul.f32 %v203, %v203
    %v665 = vmul.f32 %v206, %v206
    %v666 = vmul.f32 %v209, %v209
    %v667 = vmul.f32 %v212, %v212
    %v668 = vmul.f32 %v215, %v215
    %v669 = vmul.f32 %v218, %v218
    %v670 = vmul.f32 %v221, %v221
    %v671 = vmul.f32 %v224, %v224
    %v672 = vmul.f32 %v227, %v227
    %v673 = vmul.f32 %v230, %v230
    %v674 = vmul.f32 %v233, %v233
    %v675 = vmul.f32 %v236, %v236
    %v676 = vmul.f32 %v239, %v239
    %v677 = vmul.f32 %v242, %v242
    %v678 = vmul.f32 %v245, %v245
    %v679 = vmul.f32 %v248, %v248
    %v680 = vmul.f32 %v251, %v251
    %v681 = vmul.f32 %v254, %v254
    %v682 = vmul.f32 %v257, %v257
    %v683 = vmul.f32 %v260, %v260
    %v684 = vmul.f32 %v263, %v263
    %v685 = vmul.f32 %v266, %v266
    %v686 = vmul.f32 %v269, %v269
    %v687 = vmul.f32 %v272, %v272
    %v688 = vmul.f32 %v275, %v275
    %v689 = vmul.f32 %v278, %v278
    %v690 = vmul.f32 %v281, %v281
    %v691 = vmul.f32 %v284, %v284
    %v692 = vmul.f32 %v287, %v287
    %v693 = vmul.f32 %v290, %v290
    %v694 = vmul.f32 %v293, %v293
    %v695 = vmul.f32 %v296, %v296
    %v696 = vmul.f32 %v299, %v299
    %v697 = vmul.f32 %v302, %v302
    %v698 = vmul.f32 %v305, %v305
    %v699 = vmul.f32 %v308, %v308
    %v700 = vmul.f32 %v311, %v311
    %v701 = vmul.f32 %v314, %v314
    %v702 = vmul.f32 %v317, %v317
    %v703 = vmul.f32 %v320, %v320
    %v704 = vmul.f32 %v323, %v323
    %v705 = vmul.f32 %v326, %v326
    %v706 = vmul.f32 %v329, %v329
    %v707 = vmul.f32 %v332, %v332
    %v708 = vmul.f32 %v335, %v335
    %v709 = vmul.f32 %v338, %v338
    %v710 = vmul.f32 %v341, %v341
    %v711 = vmul.f32 %v344, %v344
    %v712 = vmul.f32 %v347, %v347
    %v713 = vmul.f32 %v350, %v350
    %v714 = vmul.f32 %v353, %v353
    %v715 = vmul.f32 %v356, %v356
    %v716 = vmul.f32 %v359, %v359
    %v717 = vmul.f32 %v362, %v362
    %v718 = vmul.f32 %v365, %v365
    %v719 = vmul.f32 %v368, %v368
    %v720 = vmul.f32 %v371, %v371
    %v721 = vmul.f32 %v374, %v374
    %v722 = vmul.f32 %v377, %v377
    %v723 = vadd.f32 %v659, %v660
    %v724 = vadd.f32 %v723, %v661
    %v725 = vadd.f32 %v724, %v662
    %v726 = vadd.f32 %v725, %v663
    %v727 = vadd.f32 %v726, %v664
    %v728 = vadd.f32 %v727, %v665
    %v729 = vadd.f32 %v728, %v666
    %v730 = vadd.f32 %v729, %v667
    %v731 = vadd.f32 %v730, %v668
    %v732 = vadd.f32 %v731, %v669
    %v733 = vadd.f32 %v732, %v670
    %v734 = vadd.f32 %v733, %v671
    %v735 = vadd.f32 %v734, %v672
    %v736 = vadd.f32 %v735, %v673
    %v737 = vadd.f32 %v736, %v674
    %v738 = vadd.f32 %v737, %v675
    %v739 = vadd.f32 %v738, %v676
    %v740 = vadd.f32 %v739, %v677
    %v741 = vadd.f32 %v740, %v678
    %v742 = vadd.f32 %v741, %v679
    %v743 = vadd.f32 %v742, %v680
    %v744 = vadd.f32 %v743, %v681
    %v745 = vadd.f32 %v744, %v682
    %v746 = vadd.f32 %v745, %v683
    %v747 = vadd.f32 %v746, %v684
    %v748 = vadd.f32 %v747, %v685
    %v749 = vadd.f32 %v748, %v686
    %v750 = vadd.f32 %v749, %v687
    %v751 = vadd.f32 %v750, %v688
    %v752 = vadd.f32 %v751, %v689
    %v753 = vadd.f32 %v752, %v690
    %v754 = vadd.f32 %v753, %v691
    %v755 = vadd.f32 %v754, %v692
    %v756 = vadd.f32 %v755, %v693
    %v757 = vadd.f32 %v756, %v694
    %v758 = vadd.f32 %v757, %v695
    %v759 = vadd.f32 %v758, %v696
    %v760 = vadd.f32 %v759, %v697
    %v761 = vadd.f32 %v760, %v698
    %v762 = vadd.f32 %v761, %v699
    %v763 = vadd.f32 %v762, %v700
    %v764 = vadd.f32 %v763, %v701
    %v765 = vadd.f32 %v764, %v702
    %v766 = vadd.f32 %v765, %v703
    %v767 = vadd.f32 %v766, %v704
    %v768 = vadd.f32 %v767, %v705
    %v769 = vadd.f32 %v768, %v706
    %v770 = vadd.f32 %v769, %v707
    %v771 = vadd.f32 %v770, %v708
    %v772 = vadd.f32 %v771, %v709
    %v773 = vadd.f32 %v772, %v710
    %v774 = vadd.f32 %v773, %v711
    %v775 = vadd.f32 %v774, %v712
    %v776 = vadd.f32 %v775, %v713
    %v777 = vadd.f32 %v776, %v714
    %v778 = vadd.f32 %v777, %v715
    %v779 = vadd.f32 %v778, %v716
    %v780 = vadd.f32 %v779, %v717
    %v781 = vadd.f32 %v780, %v718
    %v782 = vadd.f32 %v781, %v719
    %v783 = vadd.f32 %v782, %v720
    %v784 = vadd.f32 %v783, %v721
    %v785 = vadd.f32 %v784, %v722
    %v786 = vrot.slane %v785, 4
    %v787 = vadd.f32 %v785, %v786
    %v788 = vrot.slane %v787, 2
    %v789 = vadd.f32 %v787, %v788
    %v790 = vrot.slane %v789, 1
    %v791 = vadd.f32 %v789, %v790
    %v792 = vmul.f32 %v658, 0.001953125
    %v793 = vmul.f32 %v791, 0.001953125
    %v794 = vmul.f32 %v792, %v792
    %v795 = vsub.f32 %v793, %v794
    %v796 = vsub.f32 %v188, %v792
    %v797 = vsub.f32 %v191, %v792
    %v798 = vsub.f32 %v194, %v792
    %v799 = vsub.f32 %v197, %v792
    %v800 = vsub.f32 %v200, %v792
    %v801 = vsub.f32 %v203, %v792
    %v802 = vsub.f32 %v206, %v792
    %v803 = vsub.f32 %v209, %v792
    %v804 = vsub.f32 %v212, %v792
    %v805 = vsub.f32 %v215, %v792
    %v806 = vsub.f32 %v218, %v792
    %v807 = vsub.f32 %v221, %v792
    %v808 = vsub.f32 %v224, %v792
    %v809 = vsub.f32 %v227, %v792
    %v810 = vsub.f32 %v230, %v792
    %v811 = vsub.f32 %v233, %v792
    %v812 = vsub.f32 %v236, %v792
    %v813 = vsub.f32 %v239, %v792
    %v814 = vsub.f32 %v242, %v792
    %v815 = vsub.f32 %v245, %v792
    %v816 = vsub.f32 %v248, %v792
    %v817 = vsub.f32 %v251, %v792
    %v818 = vsub.f32 %v254, %v792
    %v819 = vsub.f32 %v257, %v792
    %v820 = vsub.f32 %v260, %v792
    %v821 = vsub.f32 %v263, %v792
    %v822 = vsub.f32 %v266, %v792
    %v823 = vsub.f32 %v269, %v792
    %v824 = vsub.f32 %v272, %v792
    %v825 = vsub.f32 %v275, %v792
    %v826 = vsub.f32 %v278, %v792
    %v827 = vsub.f32 %v281, %v792
    %v828 = vsub.f32 %v284, %v792
    %v829 = vsub.f32 %v287, %v792
    %v830 = vsub.f32 %v290, %v792
    %v831 = vsub.f32 %v293, %v792
    %v832 = vsub.f32 %v296, %v792
    %v833 = vsub.f32 %v299, %v792
    %v834 = vsub.f32 %v302, %v792
    %v835 = vsub.f32 %v305, %v792
    %v836 = vsub.f32 %v308, %v792
    %v837 = vsub.f32 %v311, %v792
    %v838 = vsub.f32 %v314, %v792
    %v839 = vsub.f32 %v317, %v792
    %v840 = vsub.f32 %v320, %v792
    %v841 = vsub.f32 %v323, %v792
    %v842 = vsub.f32 %v326, %v792
    %v843 = vsub.f32 %v329, %v792
    %v844 = vsub.f32 %v332, %v792
    %v845 = vsub.f32 %v335, %v792
    %v846 = vsub.f32 %v338, %v792
    %v847 = vsub.f32 %v341, %v792
    %v848 = vsub.f32 %v344, %v792
    %v849 = vsub.f32 %v347, %v792
    %v850 = vsub.f32 %v350, %v792
    %v851 = vsub.f32 %v353, %v792
    %v852 = vsub.f32 %v356, %v792
    %v853 = vsub.f32 %v359, %v792
    %v854 = vsub.f32 %v362, %v792
    %v855 = vsub.f32 %v365, %v792
    %v856 = vsub.f32 %v368, %v792
    %v857 = vsub.f32 %v371, %v792
    %v858 = vsub.f32 %v374, %v792
    %v859 = vsub.f32 %v377, %v792
    %v860 = vadd.f32 %v795, 1e-05
    %v861 = vrsqrt.pop %v860
    %v862 = vmul.f32 %v861, %v860
    %v863 = vmul.f32 %v862, %v861
    %v864 = vmul.f32 0.5, %v863
    %v865 = vsub.f32 1.5, %v864
    %v866 = vmul.f32 %v861, %v865
    %vm867 = vweird.f32 %v860
    %vm868 = vweird.f32 %v861
    %vm869 = vmor %vm867, %vm868
    %v870 = vsel %vm869, %v861, %v866
    %v871 = vmul.f32 %v796, %v870
    %v872 = vmul.f32 %v797, %v870
    %v873 = vmul.f32 %v798, %v870
    %v874 = vmul.f32 %v799, %v870
    %v875 = vmul.f32 %v800, %v870
    %v876 = vmul.f32 %v801, %v870
    %v877 = vmul.f32 %v802, %v870
    %v878 = vmul.f32 %v803, %v870
    %v879 = vmul.f32 %v804, %v870
    %v880 = vmul.f32 %v805, %v870
    %v881 = vmul.f32 %v806, %v870
    %v882 = vmul.f32 %v807, %v870
    %v883 = vmul.f32 %v808, %v870
    %v884 = vmul.f32 %v809, %v870
    %v885 = vmul.f32 %v810, %v870
    %v886 = vmul.f32 %v811, %v870
    %v887 = vmul.f32 %v812, %v870
    %v888 = vmul.f32 %v813, %v870
    %v889 = vmul.f32 %v814, %v870
    %v890 = vmul.f32 %v815, %v870
    %v891 = vmul.f32 %v816, %v870
    %v892 = vmul.f32 %v817, %v870
    %v893 = vmul.f32 %v818, %v870
    %v894 = vmul.f32 %v819, %v870
    %v895 = vmul.f32 %v820, %v870
    %v896 = vmul.f32 %v821, %v870
    %v897 = vmul.f32 %v822, %v870
    %v898 = vmul.f32 %v823, %v870
    %v899 = vmul.f32 %v824, %v870
    %v900 = vmul.f32 %v825, %v870
    %v901 = vmul.f32 %v826, %v870
    %v902 = vmul.f32 %v827, %v870
    %v903 = vmul.f32 %v828, %v870
    %v904 = vmul.f32 %v829, %v870
    %v905 = vmul.f32 %v830, %v870
    %v906 = vmul.f32 %v831, %v870
    %v907 = vmul.f32 %v832, %v870
    %v908 = vmul.f32 %v833, %v870
    %v909 = vmul.f32 %v834, %v870
    %v910 = vmul.f32 %v835, %v870
    %v911 = vmul.f32 %v836, %v870
    %v912 = vmul.f32 %v837, %v870
    %v913 = vmul.f32 %v838, %v870
    %v914 = vmul.f32 %v839, %v870
    %v915 = vmul.f32 %v840, %v870
    %v916 = vmul.f32 %v841, %v870
    %v917 = vmul.f32 %v842, %v870
    %v918 = vmul.f32 %v843, %v870
    %v919 = vmul.f32 %v844, %v870
    %v920 = vmul.f32 %v845, %v870
    %v921 = vmul.f32 %v846, %v870
    %v922 = vmul.f32 %v847, %v870
    %v923 = vmul.f32 %v848, %v870
    %v924 = vmul.f32 %v849, %v870
    %v925 = vmul.f32 %v850, %v870
    %v926 = vmul.f32 %v851, %v870
    %v927 = vmul.f32 %v852, %v870
    %v928 = vmul.f32 %v853, %v870
    %v929 = vmul.f32 %v854, %v870
    %v930 = vmul.f32 %v855, %v870
    %v931 = vmul.f32 %v856, %v870
    %v932 = vmul.f32 %v857, %v870
    %v933 = vmul.f32 %v858, %v870
    %v934 = vmul.f32 %v859, %v870
    %v936 = vperm.slane %v588, 0
    %v938 = vmul.f32 %v871, %v936
    %v939 = vmul.f32 %v872, %v936
    %v940 = vmul.f32 %v873, %v936
    %v941 = vmul.f32 %v874, %v936
    %v942 = vmul.f32 %v875, %v936
    %v943 = vmul.f32 %v876, %v936
    %v944 = vmul.f32 %v877, %v936
    %v945 = vmul.f32 %v878, %v936
    %v946 = vmul.f32 %v879, %v936
    %v947 = vmul.f32 %v880, %v936
    %v948 = vmul.f32 %v881, %v936
    %v949 = vmul.f32 %v882, %v936
    %v950 = vmul.f32 %v883, %v936
    %v951 = vmul.f32 %v884, %v936
    %v952 = vmul.f32 %v885, %v936
    %v953 = vmul.f32 %v886, %v936
    %v954 = vmul.f32 %v887, %v936
    %v955 = vmul.f32 %v888, %v936
    %v956 = vmul.f32 %v889, %v936
    %v957 = vmul.f32 %v890, %v936
    %v958 = vmul.f32 %v891, %v936
    %v959 = vmul.f32 %v892, %v936
    %v960 = vmul.f32 %v893, %v936
    %v961 = vmul.f32 %v894, %v936
    %v962 = vmul.f32 %v895, %v936
    %v963 = vmul.f32 %v896, %v936
    %v964 = vmul.f32 %v897, %v936
    %v965 = vmul.f32 %v898, %v936
    %v966 = vmul.f32 %v899, %v936
    %v967 = vmul.f32 %v900, %v936
    %v968 = vmul.f32 %v901, %v936
    %v969 = vmul.f32 %v902, %v936
    %v970 = vmul.f32 %v903, %v936
    %v971 = vmul.f32 %v904, %v936
    %v972 = vmul.f32 %v905, %v936
    %v973 = vmul.f32 %v906, %v936
    %v974 = vmul.f32 %v907, %v936
    %v975 = vmul.f32 %v908, %v936
    %v976 = vmul.f32 %v909, %v936
    %v977 = vmul.f32 %v910, %v936
    %v978 = vmul.f32 %v911, %v936
    %v979 = vmul.f32 %v912, %v936
    %v980 = vmul.f32 %v913, %v936
    %v981 = vmul.f32 %v914, %v936
    %v982 = vmul.f32 %v915, %v936
    %v983 = vmul.f32 %v916, %v936
    %v984 = vmul.f32 %v917, %v936
    %v985 = vmul.f32 %v918, %v936
    %v986 = vmul.f32 %v919, %v936
    %v987 = vmul.f32 %v920, %v936
    %v988 = vmul.f32 %v921, %v936
    %v989 = vmul.f32 %v922, %v936
    %v990 = vmul.f32 %v923, %v936
    %v991 = vmul.f32 %v924, %v936
    %v992 = vmul.f32 %v925, %v936
    %v993 = vmul.f32 %v926, %v936
    %v994 = vmul.f32 %v927, %v936
    %v995 = vmul.f32 %v928, %v936
    %v996 = vmul.f32 %v929, %v936
    %v997 = vmul.f32 %v930, %v936
    %v998 = vmul.f32 %v931, %v936
    %v999 = vmul.f32 %v932, %v936
    %v1000 = vmul.f32 %v933, %v936
    %v1001 = vmul.f32 %v934, %v936
    %v1003 = vperm.slane %v589, 0
    %v1005 = vadd.f32 %v938, %v1003
    %v1006 = vadd.f32 %v939, %v1003
    %v1007 = vadd.f32 %v940, %v1003
    %v1008 = vadd.f32 %v941, %v1003
    %v1009 = vadd.f32 %v942, %v1003
    %v1010 = vadd.f32 %v943, %v1003
    %v1011 = vadd.f32 %v944, %v1003
    %v1012 = vadd.f32 %v945, %v1003
    %v1013 = vadd.f32 %v946, %v1003
    %v1014 = vadd.f32 %v947, %v1003
    %v1015 = vadd.f32 %v948, %v1003
    %v1016 = vadd.f32 %v949, %v1003
    %v1017 = vadd.f32 %v950, %v1003
    %v1018 = vadd.f32 %v951, %v1003
    %v1019 = vadd.f32 %v952, %v1003
    %v1020 = vadd.f32 %v953, %v1003
    %v1021 = vadd.f32 %v954, %v1003
    %v1022 = vadd.f32 %v955, %v1003
    %v1023 = vadd.f32 %v956, %v1003
    %v1024 = vadd.f32 %v957, %v1003
    %v1025 = vadd.f32 %v958, %v1003
    %v1026 = vadd.f32 %v959, %v1003
    %v1027 = vadd.f32 %v960, %v1003
    %v1028 = vadd.f32 %v961, %v1003
    %v1029 = vadd.f32 %v962, %v1003
    %v1030 = vadd.f32 %v963, %v1003
    %v1031 = vadd.f32 %v964, %v1003
    %v1032 = vadd.f32 %v965, %v1003
    %v1033 = vadd.f32 %v966, %v1003
    %v1034 = vadd.f32 %v967, %v1003
    %v1035 = vadd.f32 %v968, %v1003
    %v1036 = vadd.f32 %v969, %v1003
    %v1037 = vadd.f32 %v970, %v1003
    %v1038 = vadd.f32 %v971, %v1003
    %v1039 = vadd.f32 %v972, %v1003
    %v1040 = vadd.f32 %v973, %v1003
    %v1041 = vadd.f32 %v974, %v1003
    %v1042 = vadd.f32 %v975, %v1003
    %v1043 = vadd.f32 %v976, %v1003
    %v1044 = vadd.f32 %v977, %v1003
    %v1045 = vadd.f32 %v978, %v1003
    %v1046 = vadd.f32 %v979, %v1003
    %v1047 = vadd.f32 %v980, %v1003
    %v1048 = vadd.f32 %v981, %v1003
    %v1049 = vadd.f32 %v982, %v1003
    %v1050 = vadd.f32 %v983, %v1003
    %v1051 = vadd.f32 %v984, %v1003
    %v1052 = vadd.f32 %v985, %v1003
    %v1053 = vadd.f32 %v986, %v1003
    %v1054 = vadd.f32 %v987, %v1003
    %v1055 = vadd.f32 %v988, %v1003
    %v1056 = vadd.f32 %v989, %v1003
    %v1057 = vadd.f32 %v990, %v1003
    %v1058 = vadd.f32 %v991, %v1003
    %v1059 = vadd.f32 %v992, %v1003
    %v1060 = vadd.f32 %v993, %v1003
    %v1061 = vadd.f32 %v994, %v1003
    %v1062 = vadd.f32 %v995, %v1003
    %v1063 = vadd.f32 %v996, %v1003
    %v1064 = vadd.f32 %v997, %v1003
    %v1065 = vadd.f32 %v998, %v1003
    %v1066 = vadd.f32 %v999, %v1003
    %v1067 = vadd.f32 %v1000, %v1003
    %v1068 = vadd.f32 %v1001, %v1003
    %v1069 = vmax.f32 %v1005, 0.0
    %v1070 = vmax.f32 %v1006, 0.0
    %v1071 = vmax.f32 %v1007, 0.0
    %v1072 = vmax.f32 %v1008, 0.0
    %v1073 = vmax.f32 %v1009, 0.0
    %v1074 = vmax.f32 %v1010, 0.0
    %v1075 = vmax.f32 %v1011, 0.0
    %v1076 = vmax.f32 %v1012, 0.0
    %v1077 = vmax.f32 %v1013, 0.0
    %v1078 = vmax.f32 %v1014, 0.0
    %v1079 = vmax.f32 %v1015, 0.0
    %v1080 = vmax.f32 %v1016, 0.0
    %v1081 = vmax.f32 %v1017, 0.0
    %v1082 = vmax.f32 %v1018, 0.0
    %v1083 = vmax.f32 %v1019, 0.0
    %v1084 = vmax.f32 %v1020, 0.0
    %v1085 = vmax.f32 %v1021, 0.0
    %v1086 = vmax.f32 %v1022, 0.0
    %v1087 = vmax.f32 %v1023, 0.0
    %v1088 = vmax.f32 %v1024, 0.0
    %v1089 = vmax.f32 %v1025, 0.0
    %v1090 = vmax.f32 %v1026, 0.0
    %v1091 = vmax.f32 %v1027, 0.0
    %v1092 = vmax.f32 %v1028, 0.0
    %v1093 = vmax.f32 %v1029, 0.0
    %v1094 = vmax.f32 %v1030, 0.0
    %v1095 = vmax.f32 %v1031, 0.0
    %v1096 = vmax.f32 %v1032, 0.0
    %v1097 = vmax.f32 %v1033, 0.0
    %v1098 = vmax.f32 %v1034, 0.0
    %v1099 = vmax.f32 %v1035, 0.0
    %v1100 = vmax.f32 %v1036, 0.0
    %v1101 = vmax.f32 %v1037, 0.0
    %v1102 = vmax.f32 %v1038, 0.0
    %v1103 = vmax.f32 %v1039, 0.0
    %v1104 = vmax.f32 %v1040, 0.0
    %v1105 = vmax.f32 %v1041, 0.0
    %v1106 = vmax.f32 %v1042, 0.0
    %v1107 = vmax.f32 %v1043, 0.0
    %v1108 = vmax.f32 %v1044, 0.0
    %v1109 = vmax.f32 %v1045, 0.0
    %v1110 = vmax.f32 %v1046, 0.0
    %v1111 = vmax.f32 %v1047, 0.0
    %v1112 = vmax.f32 %v1048, 0.0
    %v1113 = vmax.f32 %v1049, 0.0
    %v1114 = vmax.f32 %v1050, 0.0
    %v1115 = vmax.f32 %v1051, 0.0
    %v1116 = vmax.f32 %v1052, 0.0
    %v1117 = vmax.f32 %v1053, 0.0
    %v1118 = vmax.f32 %v1054, 0.0
    %v1119 = vmax.f32 %v1055, 0.0
    %v1120 = vmax.f32 %v1056, 0.0
    %v1121 = vmax.f32 %v1057, 0.0
    %v1122 = vmax.f32 %v1058, 0.0
    %v1123 = vmax.f32 %v1059, 0.0
    %v1124 = vmax.f32 %v1060, 0.0
    %v1125 = vmax.f32 %v1061, 0.0
    %v1126 = vmax.f32 %v1062, 0.0
    %v1127 = vmax.f32 %v1063, 0.0
    %v1128 = vmax.f32 %v1064, 0.0
    %v1129 = vmax.f32 %v1065, 0.0
    %v1130 = vmax.f32 %v1066, 0.0
    %v1131 = vmax.f32 %v1067, 0.0
    %v1132 = vmax.f32 %v1068, 0.0
    %v1133 = vlaneseq
    %v1134 = vshrl.u32 %v1133, 7
    %v1135 = vadd.s32 %v1134, 8
    %vm1136 = vcmp.eq.s32.totalorder %v1134, 0
    %vm1137 = vcmp.eq.s32.totalorder %v1135, 0
    %v1138 = vrot.slane %v1069, 7
    %v1139 = vrot.slane %v1071, 7
    %v1140 = vrot.slane %v1073, 7
    %v1141 = vrot.slane %v1075, 7
    %v1142 = vrot.slane %v1077, 7
    %v1143 = vrot.slane %v1079, 7
    %v1144 = vrot.slane %v1081, 7
    %v1145 = vrot.slane %v1083, 7
    %v1146 = vrot.slane %v1085, 7
    %v1147 = vrot.slane %v1087, 7
    %v1148 = vrot.slane %v1089, 7
    %v1149 = vrot.slane %v1091, 7
    %v1150 = vrot.slane %v1093, 7
    %v1151 = vrot.slane %v1095, 7
    %v1152 = vrot.slane %v1097, 7
    %v1153 = vrot.slane %v1099, 7
    %v1154 = vrot.slane %v1101, 7
    %v1155 = vrot.slane %v1103, 7
    %v1156 = vrot.slane %v1105, 7
    %v1157 = vrot.slane %v1107, 7
    %v1158 = vrot.slane %v1109, 7
    %v1159 = vrot.slane %v1111, 7
    %v1160 = vrot.slane %v1113, 7
    %v1161 = vrot.slane %v1115, 7
    %v1162 = vrot.slane %v1117, 7
    %v1163 = vrot.slane %v1119, 7
    %v1164 = vrot.slane %v1121, 7
    %v1165 = vrot.slane %v1123, 7
    %v1166 = vrot.slane %v1125, 7
    %v1167 = vrot.slane %v1127, 7
    %v1168 = vrot.slane %v1129, 7
    %v1169 = vrot.slane %v1131, 7
    %v1170 = vrot.slane %v1070, 7
    %v1171 = vrot.slane %v1072, 7
    %v1172 = vrot.slane %v1074, 7
    %v1173 = vrot.slane %v1076, 7
    %v1174 = vrot.slane %v1078, 7
    %v1175 = vrot.slane %v1080, 7
    %v1176 = vrot.slane %v1082, 7
    %v1177 = vrot.slane %v1084, 7
    %v1178 = vrot.slane %v1086, 7
    %v1179 = vrot.slane %v1088, 7
    %v1180 = vrot.slane %v1090, 7
    %v1181 = vrot.slane %v1092, 7
    %v1182 = vrot.slane %v1094, 7
    %v1183 = vrot.slane %v1096, 7
    %v1184 = vrot.slane %v1098, 7
    %v1185 = vrot.slane %v1100, 7
    %v1186 = vrot.slane %v1102, 7
    %v1187 = vrot.slane %v1104, 7
    %v1188 = vrot.slane %v1106, 7
    %v1189 = vrot.slane %v1108, 7
    %v1190 = vrot.slane %v1110, 7
    %v1191 = vrot.slane %v1112, 7
    %v1192 = vrot.slane %v1114, 7
    %v1193 = vrot.slane %v1116, 7
    %v1194 = vrot.slane %v1118, 7
    %v1195 = vrot.slane %v1120, 7
    %v1196 = vrot.slane %v1122, 7
    %v1197 = vrot.slane %v1124, 7
    %v1198 = vrot.slane %v1126, 7
    %v1199 = vrot.slane %v1128, 7
    %v1200 = vrot.slane %v1130, 7
    %v1201 = vrot.slane %v1132, 7
    %vm1202 = vcmp.lt.s32.totalorder %v1134, 1
    %v1203 = vsel %vm1202, %v1138, %v1170
    %v1204 = vsel %vm1202, %v1139, %v1171
    %v1205 = vsel %vm1202, %v1140, %v1172
    %v1206 = vsel %vm1202, %v1141, %v1173
    %v1207 = vsel %vm1202, %v1142, %v1174
    %v1208 = vsel %vm1202, %v1143, %v1175
    %v1209 = vsel %vm1202, %v1144, %v1176
    %v1210 = vsel %vm1202, %v1145, %v1177
    %v1211 = vsel %vm1202, %v1146, %v1178
    %v1212 = vsel %vm1202, %v1147, %v1179
    %v1213 = vsel %vm1202, %v1148, %v1180
    %v1214 = vsel %vm1202, %v1149, %v1181
    %v1215 = vsel %vm1202, %v1150, %v1182
    %v1216 = vsel %vm1202, %v1151, %v1183
    %v1217 = vsel %vm1202, %v1152, %v1184
    %v1218 = vsel %vm1202, %v1153, %v1185
    %v1219 = vsel %vm1202, %v1154, %v1186
    %v1220 = vsel %vm1202, %v1155, %v1187
    %v1221 = vsel %vm1202, %v1156, %v1188
    %v1222 = vsel %vm1202, %v1157, %v1189
    %v1223 = vsel %vm1202, %v1158, %v1190
    %v1224 = vsel %vm1202, %v1159, %v1191
    %v1225 = vsel %vm1202, %v1160, %v1192
    %v1226 = vsel %vm1202, %v1161, %v1193
    %v1227 = vsel %vm1202, %v1162, %v1194
    %v1228 = vsel %vm1202, %v1163, %v1195
    %v1229 = vsel %vm1202, %v1164, %v1196
    %v1230 = vsel %vm1202, %v1165, %v1197
    %v1231 = vsel %vm1202, %v1166, %v1198
    %v1232 = vsel %vm1202, %v1167, %v1199
    %v1233 = vsel %vm1202, %v1168, %v1200
    %v1234 = vsel %vm1202, %v1169, %v1201
    %v1235 = vsel %vm1202, %v1170, %v1138
    %v1236 = vsel %vm1202, %v1171, %v1139
    %v1237 = vsel %vm1202, %v1172, %v1140
    %v1238 = vsel %vm1202, %v1173, %v1141
    %v1239 = vsel %vm1202, %v1174, %v1142
    %v1240 = vsel %vm1202, %v1175, %v1143
    %v1241 = vsel %vm1202, %v1176, %v1144
    %v1242 = vsel %vm1202, %v1177, %v1145
    %v1243 = vsel %vm1202, %v1178, %v1146
    %v1244 = vsel %vm1202, %v1179, %v1147
    %v1245 = vsel %vm1202, %v1180, %v1148
    %v1246 = vsel %vm1202, %v1181, %v1149
    %v1247 = vsel %vm1202, %v1182, %v1150
    %v1248 = vsel %vm1202, %v1183, %v1151
    %v1249 = vsel %vm1202, %v1184, %v1152
    %v1250 = vsel %vm1202, %v1185, %v1153
    %v1251 = vsel %vm1202, %v1186, %v1154
    %v1252 = vsel %vm1202, %v1187, %v1155
    %v1253 = vsel %vm1202, %v1188, %v1156
    %v1254 = vsel %vm1202, %v1189, %v1157
    %v1255 = vsel %vm1202, %v1190, %v1158
    %v1256 = vsel %vm1202, %v1191, %v1159
    %v1257 = vsel %vm1202, %v1192, %v1160
    %v1258 = vsel %vm1202, %v1193, %v1161
    %v1259 = vsel %vm1202, %v1194, %v1162
    %v1260 = vsel %vm1202, %v1195, %v1163
    %v1261 = vsel %vm1202, %v1196, %v1164
    %v1262 = vsel %vm1202, %v1197, %v1165
    %v1263 = vsel %vm1202, %v1198, %v1166
    %v1264 = vsel %vm1202, %v1199, %v1167
    %v1265 = vsel %vm1202, %v1200, %v1168
    %v1266 = vsel %vm1202, %v1201, %v1169
    %v1267 = vsel %vm1136, 0.0, %v1235
    %v1268 = vsel %vm1137, 0.0, %v1203
    %v1269 = vsel %vm1136, 0.0, %v1236
    %v1270 = vsel %vm1137, 0.0, %v1204
    %v1271 = vsel %vm1136, 0.0, %v1237
    %v1272 = vsel %vm1137, 0.0, %v1205
    %v1273 = vsel %vm1136, 0.0, %v1238
    %v1274 = vsel %vm1137, 0.0, %v1206
    %v1275 = vsel %vm1136, 0.0, %v1239
    %v1276 = vsel %vm1137, 0.0, %v1207
    %v1277 = vsel %vm1136, 0.0, %v1240
    %v1278 = vsel %vm1137, 0.0, %v1208
    %v1279 = vsel %vm1136, 0.0, %v1241
    %v1280 = vsel %vm1137, 0.0, %v1209
    %v1281 = vsel %vm1136, 0.0, %v1242
    %v1282 = vsel %vm1137, 0.0, %v1210
    %v1283 = vsel %vm1136, 0.0, %v1243
    %v1284 = vsel %vm1137, 0.0, %v1211
    %v1285 = vsel %vm1136, 0.0, %v1244
    %v1286 = vsel %vm1137, 0.0, %v1212
    %v1287 = vsel %vm1136, 0.0, %v1245
    %v1288 = vsel %vm1137, 0.0, %v1213
    %v1289 = vsel %vm1136, 0.0, %v1246
    %v1290 = vsel %vm1137, 0.0, %v1214
    %v1291 = vsel %vm1136, 0.0, %v1247
    %v1292 = vsel %vm1137, 0.0, %v1215
    %v1293 = vsel %vm1136, 0.0, %v1248
    %v1294 = vsel %vm1137, 0.0, %v1216
    %v1295 = vsel %vm1136, 0.0, %v1249
    %v1296 = vsel %vm1137, 0.0, %v1217
    %v1297 = vsel %vm1136, 0.0, %v1250
    %v1298 = vsel %vm1137, 0.0, %v1218
    %v1299 = vsel %vm1136, 0.0, %v1251
    %v1300 = vsel %vm1137, 0.0, %v1219
    %v1301 = vsel %vm1136, 0.0, %v1252
    %v1302 = vsel %vm1137, 0.0, %v1220
    %v1303 = vsel %vm1136, 0.0, %v1253
    %v1304 = vsel %vm1137, 0.0, %v1221
    %v1305 = vsel %vm1136, 0.0, %v1254
    %v1306 = vsel %vm1137, 0.0, %v1222
    %v1307 = vsel %vm1136, 0.0, %v1255
    %v1308 = vsel %vm1137, 0.0, %v1223
    %v1309 = vsel %vm1136, 0.0, %v1256
    %v1310 = vsel %vm1137, 0.0, %v1224
    %v1311 = vsel %vm1136, 0.0, %v1257
    %v1312 = vsel %vm1137, 0.0, %v1225
    %v1313 = vsel %vm1136, 0.0, %v1258
    %v1314 = vsel %vm1137, 0.0, %v1226
    %v1315 = vsel %vm1136, 0.0, %v1259
    %v1316 = vsel %vm1137, 0.0, %v1227
    %v1317 = vsel %vm1136, 0.0, %v1260
    %v1318 = vsel %vm1137, 0.0, %v1228
    %v1319 = vsel %vm1136, 0.0, %v1261
    %v1320 = vsel %vm1137, 0.0, %v1229
    %v1321 = vsel %vm1136, 0.0, %v1262
    %v1322 = vsel %vm1137, 0.0, %v1230
    %v1323 = vsel %vm1136, 0.0, %v1263
    %v1324 = vsel %vm1137, 0.0, %v1231
    %v1325 = vsel %vm1136, 0.0, %v1264
    %v1326 = vsel %vm1137, 0.0, %v1232
    %v1327 = vsel %vm1136, 0.0, %v1265
    %v1328 = vsel %vm1137, 0.0, %v1233
    %v1329 = vsel %vm1136, 0.0, %v1266
    %v1330 = vsel %vm1137, 0.0, %v1234
    %vm1331 = vcmp.eq.s32.totalorder %v1134, 15
    %vm1332 = vcmp.eq.s32.totalorder %v1135, 15
    %v1333 = vrot.slane %v1069, 1
    %v1334 = vrot.slane %v1071, 1
    %v1335 = vrot.slane %v1073, 1
    %v1336 = vrot.slane %v1075, 1
    %v1337 = vrot.slane %v1077, 1
    %v1338 = vrot.slane %v1079, 1
    %v1339 = vrot.slane %v1081, 1
    %v1340 = vrot.slane %v1083, 1
    %v1341 = vrot.slane %v1085, 1
    %v1342 = vrot.slane %v1087, 1
    %v1343 = vrot.slane %v1089, 1
    %v1344 = vrot.slane %v1091, 1
    %v1345 = vrot.slane %v1093, 1
    %v1346 = vrot.slane %v1095, 1
    %v1347 = vrot.slane %v1097, 1
    %v1348 = vrot.slane %v1099, 1
    %v1349 = vrot.slane %v1101, 1
    %v1350 = vrot.slane %v1103, 1
    %v1351 = vrot.slane %v1105, 1
    %v1352 = vrot.slane %v1107, 1
    %v1353 = vrot.slane %v1109, 1
    %v1354 = vrot.slane %v1111, 1
    %v1355 = vrot.slane %v1113, 1
    %v1356 = vrot.slane %v1115, 1
    %v1357 = vrot.slane %v1117, 1
    %v1358 = vrot.slane %v1119, 1
    %v1359 = vrot.slane %v1121, 1
    %v1360 = vrot.slane %v1123, 1
    %v1361 = vrot.slane %v1125, 1
    %v1362 = vrot.slane %v1127, 1
    %v1363 = vrot.slane %v1129, 1
    %v1364 = vrot.slane %v1131, 1
    %v1365 = vrot.slane %v1070, 1
    %v1366 = vrot.slane %v1072, 1
    %v1367 = vrot.slane %v1074, 1
    %v1368 = vrot.slane %v1076, 1
    %v1369 = vrot.slane %v1078, 1
    %v1370 = vrot.slane %v1080, 1
    %v1371 = vrot.slane %v1082, 1
    %v1372 = vrot.slane %v1084, 1
    %v1373 = vrot.slane %v1086, 1
    %v1374 = vrot.slane %v1088, 1
    %v1375 = vrot.slane %v1090, 1
    %v1376 = vrot.slane %v1092, 1
    %v1377 = vrot.slane %v1094, 1
    %v1378 = vrot.slane %v1096, 1
    %v1379 = vrot.slane %v1098, 1
    %v1380 = vrot.slane %v1100, 1
    %v1381 = vrot.slane %v1102, 1
    %v1382 = vrot.slane %v1104, 1
    %v1383 = vrot.slane %v1106, 1
    %v1384 = vrot.slane %v1108, 1
    %v1385 = vrot.slane %v1110, 1
    %v1386 = vrot.slane %v1112, 1
    %v1387 = vrot.slane %v1114, 1
    %v1388 = vrot.slane %v1116, 1
    %v1389 = vrot.slane %v1118, 1
    %v1390 = vrot.slane %v1120, 1
    %v1391 = vrot.slane %v1122, 1
    %v1392 = vrot.slane %v1124, 1
    %v1393 = vrot.slane %v1126, 1
    %v1394 = vrot.slane %v1128, 1
    %v1395 = vrot.slane %v1130, 1
    %v1396 = vrot.slane %v1132, 1
    %vm1397 = vcmp.lt.s32.totalorder %v1134, 7
    %v1398 = vsel %vm1397, %v1333, %v1365
    %v1399 = vsel %vm1397, %v1334, %v1366
    %v1400 = vsel %vm1397, %v1335, %v1367
    %v1401 = vsel %vm1397, %v1336, %v1368
    %v1402 = vsel %vm1397, %v1337, %v1369
    %v1403 = vsel %vm1397, %v1338, %v1370
    %v1404 = vsel %vm1397, %v1339, %v1371
    %v1405 = vsel %vm1397, %v1340, %v1372
    %v1406 = vsel %vm1397, %v1341, %v1373
    %v1407 = vsel %vm1397, %v1342, %v1374
    %v1408 = vsel %vm1397, %v1343, %v1375
    %v1409 = vsel %vm1397, %v1344, %v1376
    %v1410 = vsel %vm1397, %v1345, %v1377
    %v1411 = vsel %vm1397, %v1346, %v1378
    %v1412 = vsel %vm1397, %v1347, %v1379
    %v1413 = vsel %vm1397, %v1348, %v1380
    %v1414 = vsel %vm1397, %v1349, %v1381
    %v1415 = vsel %vm1397, %v1350, %v1382
    %v1416 = vsel %vm1397, %v1351, %v1383
    %v1417 = vsel %vm1397, %v1352, %v1384
    %v1418 = vsel %vm1397, %v1353, %v1385
    %v1419 = vsel %vm1397, %v1354, %v1386
    %v1420 = vsel %vm1397, %v1355, %v1387
    %v1421 = vsel %vm1397, %v1356, %v1388
    %v1422 = vsel %vm1397, %v1357, %v1389
    %v1423 = vsel %vm1397, %v1358, %v1390
    %v1424 = vsel %vm1397, %v1359, %v1391
    %v1425 = vsel %vm1397, %v1360, %v1392
    %v1426 = vsel %vm1397, %v1361, %v1393
    %v1427 = vsel %vm1397, %v1362, %v1394
    %v1428 = vsel %vm1397, %v1363, %v1395
    %v1429 = vsel %vm1397, %v1364, %v1396
    %v1430 = vsel %vm1397, %v1365, %v1333
    %v1431 = vsel %vm1397, %v1366, %v1334
    %v1432 = vsel %vm1397, %v1367, %v1335
    %v1433 = vsel %vm1397, %v1368, %v1336
    %v1434 = vsel %vm1397, %v1369, %v1337
    %v1435 = vsel %vm1397, %v1370, %v1338
    %v1436 = vsel %vm1397, %v1371, %v1339
    %v1437 = vsel %vm1397, %v1372, %v1340
    %v1438 = vsel %vm1397, %v1373, %v1341
    %v1439 = vsel %vm1397, %v1374, %v1342
    %v1440 = vsel %vm1397, %v1375, %v1343
    %v1441 = vsel %vm1397, %v1376, %v1344
    %v1442 = vsel %vm1397, %v1377, %v1345
    %v1443 = vsel %vm1397, %v1378, %v1346
    %v1444 = vsel %vm1397, %v1379, %v1347
    %v1445 = vsel %vm1397, %v1380, %v1348
    %v1446 = vsel %vm1397, %v1381, %v1349
    %v1447 = vsel %vm1397, %v1382, %v1350
    %v1448 = vsel %vm1397, %v1383, %v1351
    %v1449 = vsel %vm1397, %v1384, %v1352
    %v1450 = vsel %vm1397, %v1385, %v1353
    %v1451 = vsel %vm1397, %v1386, %v1354
    %v1452 = vsel %vm1397, %v1387, %v1355
    %v1453 = vsel %vm1397, %v1388, %v1356
    %v1454 = vsel %vm1397, %v1389, %v1357
    %v1455 = vsel %vm1397, %v1390, %v1358
    %v1456 = vsel %vm1397, %v1391, %v1359
    %v1457 = vsel %vm1397, %v1392, %v1360
    %v1458 = vsel %vm1397, %v1393, %v1361
    %v1459 = vsel %vm1397, %v1394, %v1362
    %v1460 = vsel %vm1397, %v1395, %v1363
    %v1461 = vsel %vm1397, %v1396, %v1364
    %v1462 = vsel %vm1331, 0.0, %v1398
    %v1463 = vsel %vm1332, 0.0, %v1430
    %v1464 = vsel %vm1331, 0.0, %v1399
    %v1465 = vsel %vm1332, 0.0, %v1431
    %v1466 = vsel %vm1331, 0.0, %v1400
    %v1467 = vsel %vm1332, 0.0, %v1432
    %v1468 = vsel %vm1331, 0.0, %v1401
    %v1469 = vsel %vm1332, 0.0, %v1433
    %v1470 = vsel %vm1331, 0.0, %v1402
    %v1471 = vsel %vm1332, 0.0, %v1434
    %v1472 = vsel %vm1331, 0.0, %v1403
    %v1473 = vsel %vm1332, 0.0, %v1435
    %v1474 = vsel %vm1331, 0.0, %v1404
    %v1475 = vsel %vm1332, 0.0, %v1436
    %v1476 = vsel %vm1331, 0.0, %v1405
    %v1477 = vsel %vm1332, 0.0, %v1437
    %v1478 = vsel %vm1331, 0.0, %v1406
    %v1479 = vsel %vm1332, 0.0, %v1438
    %v1480 = vsel %vm1331, 0.0, %v1407
    %v1481 = vsel %vm1332, 0.0, %v1439
    %v1482 = vsel %vm1331, 0.0, %v1408
    %v1483 = vsel %vm1332, 0.0, %v1440
    %v1484 = vsel %vm1331, 0.0, %v1409
    %v1485 = vsel %vm1332, 0.0, %v1441
    %v1486 = vsel %vm1331, 0.0, %v1410
    %v1487 = vsel %vm1332, 0.0, %v1442
    %v1488 = vsel %vm1331, 0.0, %v1411
    %v1489 = vsel %vm1332, 0.0, %v1443
    %v1490 = vsel %vm1331, 0.0, %v1412
    %v1491 = vsel %vm1332, 0.0, %v1444
    %v1492 = vsel %vm1331, 0.0, %v1413
    %v1493 = vsel %vm1332, 0.0, %v1445
    %v1494 = vsel %vm1331, 0.0, %v1414
    %v1495 = vsel %vm1332, 0.0, %v1446
    %v1496 = vsel %vm1331, 0.0, %v1415
    %v1497 = vsel %vm1332, 0.0, %v1447
    %v1498 = vsel %vm1331, 0.0, %v1416
    %v1499 = vsel %vm1332, 0.0, %v1448
    %v1500 = vsel %vm1331, 0.0, %v1417
    %v1501 = vsel %vm1332, 0.0, %v1449
    %v1502 = vsel %vm1331, 0.0, %v1418
    %v1503 = vsel %vm1332, 0.0, %v1450
    %v1504 = vsel %vm1331, 0.0, %v1419
    %v1505 = vsel %vm1332, 0.0, %v1451
    %v1506 = vsel %vm1331, 0.0, %v1420
    %v1507 = vsel %vm1332, 0.0, %v1452
    %v1508 = vsel %vm1331, 0.0, %v1421
    %v1509 = vsel %vm1332, 0.0, %v1453
    %v1510 = vsel %vm1331, 0.0, %v1422
    %v1511 = vsel %vm1332, 0.0, %v1454
    %v1512 = vsel %vm1331, 0.0, %v1423
    %v1513 = vsel %vm1332, 0.0, %v1455
    %v1514 = vsel %vm1331, 0.0, %v1424
    %v1515 = vsel %vm1332, 0.0, %v1456
    %v1516 = vsel %vm1331, 0.0, %v1425
    %v1517 = vsel %vm1332, 0.0, %v1457
    %v1518 = vsel %vm1331, 0.0, %v1426
    %v1519 = vsel %vm1332, 0.0, %v1458
    %v1520 = vsel %vm1331, 0.0, %v1427
    %v1521 = vsel %vm1332, 0.0, %v1459
    %v1522 = vsel %vm1331, 0.0, %v1428
    %v1523 = vsel %vm1332, 0.0, %v1460
    %v1524 = vsel %vm1331, 0.0, %v1429
    %v1525 = vsel %vm1332, 0.0, %v1461
    %1526 = vst [vmem:[#allocation2] sm:$0xff] 0.0
    %1527 = vst [vmem:[#allocation2 + $0x8] sm:$0xff] 0.0
    %1528 = vst [vmem:[#allocation2 + $0x120] sm:$0xff] 0.0
    %1529 = vst [vmem:[#allocation2 + $0x128] sm:$0xff] 0.0
    %1530 = vst [vmem:[#allocation2 + $0x240] sm:$0xff] 0.0
    %1531 = vst [vmem:[#allocation2 + $0x248] sm:$0xff] 0.0
    %1532 = vst [vmem:[#allocation2 + $0x360] sm:$0xff] 0.0
    %1533 = vst [vmem:[#allocation2 + $0x368] sm:$0xff] 0.0
    %1534 = vst [vmem:[#allocation2 + $0x480] sm:$0xff] 0.0
    %1535 = vst [vmem:[#allocation2 + $0x488] sm:$0xff] 0.0
    %1536 = vst [vmem:[#allocation2 + $0x5a0] sm:$0xff] 0.0
    %1537 = vst [vmem:[#allocation2 + $0x5a8] sm:$0xff] 0.0
    %s1538 = scalar_lea.vmem [#allocation2], 272
    %1539 = vst [vmem:[%s1538] sm:$0xff] 0.0
    %1540 = vst [vmem:[%s1538 + $0x8] sm:$0xff] 0.0
    %1541 = vst [vmem:[%s1538 + $0x120] sm:$0xff] 0.0
    %1542 = vst [vmem:[%s1538 + $0x128] sm:$0xff] 0.0
    %1543 = vst [vmem:[%s1538 + $0x240] sm:$0xff] 0.0
    %1544 = vst [vmem:[%s1538 + $0x248] sm:$0xff] 0.0
    %1545 = vst [vmem:[%s1538 + $0x360] sm:$0xff] 0.0
    %1546 = vst [vmem:[%s1538 + $0x368] sm:$0xff] 0.0
    %1547 = vst [vmem:[%s1538 + $0x480] sm:$0xff] 0.0
    %1548 = vst [vmem:[%s1538 + $0x488] sm:$0xff] 0.0
    %1549 = vst [vmem:[%s1538 + $0x5a0] sm:$0xff] 0.0
    %1550 = vst [vmem:[%s1538 + $0x5a8] sm:$0xff] 0.0
    %s1551 = scalar_lea.vmem [#allocation2], 16
    %1552 = vst [vmem:[%s1551] sm:$0xff] %v1267
    %1553 = vst [vmem:[%s1551 + $0x8] sm:$0xff] %v1268
    %1554 = vst [vmem:[%s1551 + $0x10] sm:$0xff] %v1269
    %1555 = vst [vmem:[%s1551 + $0x18] sm:$0xff] %v1270
    %1556 = vst [vmem:[%s1551 + $0x20] sm:$0xff] %v1271
    %1557 = vst [vmem:[%s1551 + $0x28] sm:$0xff] %v1272
    %1558 = vst [vmem:[%s1551 + $0x30] sm:$0xff] %v1273
    %1559 = vst [vmem:[%s1551 + $0x38] sm:$0xff] %v1274
    %1560 = vst [vmem:[%s1551 + $0x40] sm:$0xff] %v1275
    %1561 = vst [vmem:[%s1551 + $0x48] sm:$0xff] %v1276
    %1562 = vst [vmem:[%s1551 + $0x50] sm:$0xff] %v1277
    %1563 = vst [vmem:[%s1551 + $0x58] sm:$0xff] %v1278
    %1564 = vst [vmem:[%s1551 + $0x60] sm:$0xff] %v1279
    %1565 = vst [vmem:[%s1551 + $0x68] sm:$0xff] %v1280
    %1566 = vst [vmem:[%s1551 + $0x70] sm:$0xff] %v1281
    %1567 = vst [vmem:[%s1551 + $0x78] sm:$0xff] %v1282
    %1568 = vst [vmem:[%s1551 + $0x80] sm:$0xff] %v1283
    %1569 = vst [vmem:[%s1551 + $0x88] sm:$0xff] %v1284
    %1570 = vst [vmem:[%s1551 + $0x90] sm:$0xff] %v1285
    %1571 = vst [vmem:[%s1551 + $0x98] sm:$0xff] %v1286
    %1572 = vst [vmem:[%s1551 + $0xa0] sm:$0xff] %v1287
    %1573 = vst [vmem:[%s1551 + $0xa8] sm:$0xff] %v1288
    %1574 = vst [vmem:[%s1551 + $0xb0] sm:$0xff] %v1289
    %1575 = vst [vmem:[%s1551 + $0xb8] sm:$0xff] %v1290
    %1576 = vst [vmem:[%s1551 + $0xc0] sm:$0xff] %v1291
    %1577 = vst [vmem:[%s1551 + $0xc8] sm:$0xff] %v1292
    %1578 = vst [vmem:[%s1551 + $0xd0] sm:$0xff] %v1293
    %1579 = vst [vmem:[%s1551 + $0xd8] sm:$0xff] %v1294
    %1580 = vst [vmem:[%s1551 + $0xe0] sm:$0xff] %v1295
    %1581 = vst [vmem:[%s1551 + $0xe8] sm:$0xff] %v1296
    %1582 = vst [vmem:[%s1551 + $0xf0] sm:$0xff] %v1297
    %1583 = vst [vmem:[%s1551 + $0xf8] sm:$0xff] %v1298
    %1584 = vst [vmem:[%s1551 + $0x120] sm:$0xff] %v1299
    %1585 = vst [vmem:[%s1551 + $0x128] sm:$0xff] %v1300
    %1586 = vst [vmem:[%s1551 + $0x130] sm:$0xff] %v1301
    %1587 = vst [vmem:[%s1551 + $0x138] sm:$0xff] %v1302
    %1588 = vst [vmem:[%s1551 + $0x140] sm:$0xff] %v1303
    %1589 = vst [vmem:[%s1551 + $0x148] sm:$0xff] %v1304
    %1590 = vst [vmem:[%s1551 + $0x150] sm:$0xff] %v1305
    %1591 = vst [vmem:[%s1551 + $0x158] sm:$0xff] %v1306
    %1592 = vst [vmem:[%s1551 + $0x160] sm:$0xff] %v1307
    %1593 = vst [vmem:[%s1551 + $0x168] sm:$0xff] %v1308
    %1594 = vst [vmem:[%s1551 + $0x170] sm:$0xff] %v1309
    %1595 = vst [vmem:[%s1551 + $0x178] sm:$0xff] %v1310
    %1596 = vst [vmem:[%s1551 + $0x180] sm:$0xff] %v1311
    %1597 = vst [vmem:[%s1551 + $0x188] sm:$0xff] %v1312
    %1598 = vst [vmem:[%s1551 + $0x190] sm:$0xff] %v1313
    %1599 = vst [vmem:[%s1551 + $0x198] sm:$0xff] %v1314
    %1600 = vst [vmem:[%s1551 + $0x1a0] sm:$0xff] %v1315
    %1601 = vst [vmem:[%s1551 + $0x1a8] sm:$0xff] %v1316
    %1602 = vst [vmem:[%s1551 + $0x1b0] sm:$0xff] %v1317
    %1603 = vst [vmem:[%s1551 + $0x1b8] sm:$0xff] %v1318
    %1604 = vst [vmem:[%s1551 + $0x1c0] sm:$0xff] %v1319
    %1605 = vst [vmem:[%s1551 + $0x1c8] sm:$0xff] %v1320
    %1606 = vst [vmem:[%s1551 + $0x1d0] sm:$0xff] %v1321
    %1607 = vst [vmem:[%s1551 + $0x1d8] sm:$0xff] %v1322
    %1608 = vst [vmem:[%s1551 + $0x1e0] sm:$0xff] %v1323
    %1609 = vst [vmem:[%s1551 + $0x1e8] sm:$0xff] %v1324
    %1610 = vst [vmem:[%s1551 + $0x1f0] sm:$0xff] %v1325
    %1611 = vst [vmem:[%s1551 + $0x1f8] sm:$0xff] %v1326
    %1612 = vst [vmem:[%s1551 + $0x200] sm:$0xff] %v1327
    %1613 = vst [vmem:[%s1551 + $0x208] sm:$0xff] %v1328
    %1614 = vst [vmem:[%s1551 + $0x210] sm:$0xff] %v1329
    %1615 = vst [vmem:[%s1551 + $0x218] sm:$0xff] %v1330
    %s1616 = scalar_lea.vmem [#allocation2], 592
    %1617 = vst [vmem:[%s1616] sm:$0xff] %v1069
    %1618 = vst [vmem:[%s1616 + $0x8] sm:$0xff] %v1070
    %1619 = vst [vmem:[%s1616 + $0x10] sm:$0xff] %v1071
    %1620 = vst [vmem:[%s1616 + $0x18] sm:$0xff] %v1072
    %1621 = vst [vmem:[%s1616 + $0x20] sm:$0xff] %v1073
    %1622 = vst [vmem:[%s1616 + $0x28] sm:$0xff] %v1074
    %1623 = vst [vmem:[%s1616 + $0x30] sm:$0xff] %v1075
    %1624 = vst [vmem:[%s1616 + $0x38] sm:$0xff] %v1076
    %1625 = vst [vmem:[%s1616 + $0x40] sm:$0xff] %v1077
    %1626 = vst [vmem:[%s1616 + $0x48] sm:$0xff] %v1078
    %1627 = vst [vmem:[%s1616 + $0x50] sm:$0xff] %v1079
    %1628 = vst [vmem:[%s1616 + $0x58] sm:$0xff] %v1080
    %1629 = vst [vmem:[%s1616 + $0x60] sm:$0xff] %v1081
    %1630 = vst [vmem:[%s1616 + $0x68] sm:$0xff] %v1082
    %1631 = vst [vmem:[%s1616 + $0x70] sm:$0xff] %v1083
    %1632 = vst [vmem:[%s1616 + $0x78] sm:$0xff] %v1084
    %1633 = vst [vmem:[%s1616 + $0x80] sm:$0xff] %v1085
    %1634 = vst [vmem:[%s1616 + $0x88] sm:$0xff] %v1086
    %1635 = vst [vmem:[%s1616 + $0x90] sm:$0xff] %v1087
    %1636 = vst [vmem:[%s1616 + $0x98] sm:$0xff] %v1088
    %1637 = vst [vmem:[%s1616 + $0xa0] sm:$0xff] %v1089
    %1638 = vst [vmem:[%s1616 + $0xa8] sm:$0xff] %v1090
    %1639 = vst [vmem:[%s1616 + $0xb0] sm:$0xff] %v1091
    %1640 = vst [vmem:[%s1616 + $0xb8] sm:$0xff] %v1092
    %1641 = vst [vmem:[%s1616 + $0xc0] sm:$0xff] %v1093
    %1642 = vst [vmem:[%s1616 + $0xc8] sm:$0xff] %v1094
    %1643 = vst [vmem:[%s1616 + $0xd0] sm:$0xff] %v1095
    %1644 = vst [vmem:[%s1616 + $0xd8] sm:$0xff] %v1096
    %1645 = vst [vmem:[%s1616 + $0xe0] sm:$0xff] %v1097
    %1646 = vst [vmem:[%s1616 + $0xe8] sm:$0xff] %v1098
    %1647 = vst [vmem:[%s1616 + $0xf0] sm:$0xff] %v1099
    %1648 = vst [vmem:[%s1616 + $0xf8] sm:$0xff] %v1100
    %1649 = vst [vmem:[%s1616 + $0x120] sm:$0xff] %v1101
    %1650 = vst [vmem:[%s1616 + $0x128] sm:$0xff] %v1102
    %1651 = vst [vmem:[%s1616 + $0x130] sm:$0xff] %v1103
    %1652 = vst [vmem:[%s1616 + $0x138] sm:$0xff] %v1104
    %1653 = vst [vmem:[%s1616 + $0x140] sm:$0xff] %v1105
    %1654 = vst [vmem:[%s1616 + $0x148] sm:$0xff] %v1106
    %1655 = vst [vmem:[%s1616 + $0x150] sm:$0xff] %v1107
    %1656 = vst [vmem:[%s1616 + $0x158] sm:$0xff] %v1108
    %1657 = vst [vmem:[%s1616 + $0x160] sm:$0xff] %v1109
    %1658 = vst [vmem:[%s1616 + $0x168] sm:$0xff] %v1110
    %1659 = vst [vmem:[%s1616 + $0x170] sm:$0xff] %v1111
    %1660 = vst [vmem:[%s1616 + $0x178] sm:$0xff] %v1112
    %1661 = vst [vmem:[%s1616 + $0x180] sm:$0xff] %v1113
    %1662 = vst [vmem:[%s1616 + $0x188] sm:$0xff] %v1114
    %1663 = vst [vmem:[%s1616 + $0x190] sm:$0xff] %v1115
    %1664 = vst [vmem:[%s1616 + $0x198] sm:$0xff] %v1116
    %1665 = vst [vmem:[%s1616 + $0x1a0] sm:$0xff] %v1117
    %1666 = vst [vmem:[%s1616 + $0x1a8] sm:$0xff] %v1118
    %1667 = vst [vmem:[%s1616 + $0x1b0] sm:$0xff] %v1119
    %1668 = vst [vmem:[%s1616 + $0x1b8] sm:$0xff] %v1120
    %1669 = vst [vmem:[%s1616 + $0x1c0] sm:$0xff] %v1121
    %1670 = vst [vmem:[%s1616 + $0x1c8] sm:$0xff] %v1122
    %1671 = vst [vmem:[%s1616 + $0x1d0] sm:$0xff] %v1123
    %1672 = vst [vmem:[%s1616 + $0x1d8] sm:$0xff] %v1124
    %1673 = vst [vmem:[%s1616 + $0x1e0] sm:$0xff] %v1125
    %1674 = vst [vmem:[%s1616 + $0x1e8] sm:$0xff] %v1126
    %1675 = vst [vmem:[%s1616 + $0x1f0] sm:$0xff] %v1127
    %1676 = vst [vmem:[%s1616 + $0x1f8] sm:$0xff] %v1128
    %1677 = vst [vmem:[%s1616 + $0x200] sm:$0xff] %v1129
    %1678 = vst [vmem:[%s1616 + $0x208] sm:$0xff] %v1130
    %1679 = vst [vmem:[%s1616 + $0x210] sm:$0xff] %v1131
    %1680 = vst [vmem:[%s1616 + $0x218] sm:$0xff] %v1132
    %s1681 = scalar_lea.vmem [#allocation2], 1168
    %1682 = vst [vmem:[%s1681] sm:$0xff] %v1462
    %1683 = vst [vmem:[%s1681 + $0x8] sm:$0xff] %v1463
    %1684 = vst [vmem:[%s1681 + $0x10] sm:$0xff] %v1464
    %1685 = vst [vmem:[%s1681 + $0x18] sm:$0xff] %v1465
    %1686 = vst [vmem:[%s1681 + $0x20] sm:$0xff] %v1466
    %1687 = vst [vmem:[%s1681 + $0x28] sm:$0xff] %v1467
    %1688 = vst [vmem:[%s1681 + $0x30] sm:$0xff] %v1468
    %1689 = vst [vmem:[%s1681 + $0x38] sm:$0xff] %v1469
    %1690 = vst [vmem:[%s1681 + $0x40] sm:$0xff] %v1470
    %1691 = vst [vmem:[%s1681 + $0x48] sm:$0xff] %v1471
    %1692 = vst [vmem:[%s1681 + $0x50] sm:$0xff] %v1472
    %1693 = vst [vmem:[%s1681 + $0x58] sm:$0xff] %v1473
    %1694 = vst [vmem:[%s1681 + $0x60] sm:$0xff] %v1474
    %1695 = vst [vmem:[%s1681 + $0x68] sm:$0xff] %v1475
    %1696 = vst [vmem:[%s1681 + $0x70] sm:$0xff] %v1476
    %1697 = vst [vmem:[%s1681 + $0x78] sm:$0xff] %v1477
    %1698 = vst [vmem:[%s1681 + $0x80] sm:$0xff] %v1478
    %1699 = vst [vmem:[%s1681 + $0x88] sm:$0xff] %v1479
    %1700 = vst [vmem:[%s1681 + $0x90] sm:$0xff] %v1480
    %1701 = vst [vmem:[%s1681 + $0x98] sm:$0xff] %v1481
    %1702 = vst [vmem:[%s1681 + $0xa0] sm:$0xff] %v1482
    %1703 = vst [vmem:[%s1681 + $0xa8] sm:$0xff] %v1483
    %1704 = vst [vmem:[%s1681 + $0xb0] sm:$0xff] %v1484
    %1705 = vst [vmem:[%s1681 + $0xb8] sm:$0xff] %v1485
    %1706 = vst [vmem:[%s1681 + $0xc0] sm:$0xff] %v1486
    %1707 = vst [vmem:[%s1681 + $0xc8] sm:$0xff] %v1487
    %1708 = vst [vmem:[%s1681 + $0xd0] sm:$0xff] %v1488
    %1709 = vst [vmem:[%s1681 + $0xd8] sm:$0xff] %v1489
    %1710 = vst [vmem:[%s1681 + $0xe0] sm:$0xff] %v1490
    %1711 = vst [vmem:[%s1681 + $0xe8] sm:$0xff] %v1491
    %1712 = vst [vmem:[%s1681 + $0xf0] sm:$0xff] %v1492
    %1713 = vst [vmem:[%s1681 + $0xf8] sm:$0xff] %v1493
    %1714 = vst [vmem:[%s1681 + $0x120] sm:$0xff] %v1494
    %1715 = vst [vmem:[%s1681 + $0x128] sm:$0xff] %v1495
    %1716 = vst [vmem:[%s1681 + $0x130] sm:$0xff] %v1496
    %1717 = vst [vmem:[%s1681 + $0x138] sm:$0xff] %v1497
    %1718 = vst [vmem:[%s1681 + $0x140] sm:$0xff] %v1498
    %1719 = vst [vmem:[%s1681 + $0x148] sm:$0xff] %v1499
    %1720 = vst [vmem:[%s1681 + $0x150] sm:$0xff] %v1500
    %1721 = vst [vmem:[%s1681 + $0x158] sm:$0xff] %v1501
    %1722 = vst [vmem:[%s1681 + $0x160] sm:$0xff] %v1502
    %1723 = vst [vmem:[%s1681 + $0x168] sm:$0xff] %v1503
    %1724 = vst [vmem:[%s1681 + $0x170] sm:$0xff] %v1504
    %1725 = vst [vmem:[%s1681 + $0x178] sm:$0xff] %v1505
    %1726 = vst [vmem:[%s1681 + $0x180] sm:$0xff] %v1506
    %1727 = vst [vmem:[%s1681 + $0x188] sm:$0xff] %v1507
    %1728 = vst [vmem:[%s1681 + $0x190] sm:$0xff] %v1508
    %1729 = vst [vmem:[%s1681 + $0x198] sm:$0xff] %v1509
    %1730 = vst [vmem:[%s1681 + $0x1a0] sm:$0xff] %v1510
    %1731 = vst [vmem:[%s1681 + $0x1a8] sm:$0xff] %v1511
    %1732 = vst [vmem:[%s1681 + $0x1b0] sm:$0xff] %v1512
    %1733 = vst [vmem:[%s1681 + $0x1b8] sm:$0xff] %v1513
    %1734 = vst [vmem:[%s1681 + $0x1c0] sm:$0xff] %v1514
    %1735 = vst [vmem:[%s1681 + $0x1c8] sm:$0xff] %v1515
    %1736 = vst [vmem:[%s1681 + $0x1d0] sm:$0xff] %v1516
    %1737 = vst [vmem:[%s1681 + $0x1d8] sm:$0xff] %v1517
    %1738 = vst [vmem:[%s1681 + $0x1e0] sm:$0xff] %v1518
    %1739 = vst [vmem:[%s1681 + $0x1e8] sm:$0xff] %v1519
    %1740 = vst [vmem:[%s1681 + $0x1f0] sm:$0xff] %v1520
    %1741 = vst [vmem:[%s1681 + $0x1f8] sm:$0xff] %v1521
    %1742 = vst [vmem:[%s1681 + $0x200] sm:$0xff] %v1522
    %1743 = vst [vmem:[%s1681 + $0x208] sm:$0xff] %v1523
    %1744 = vst [vmem:[%s1681 + $0x210] sm:$0xff] %v1524
    %1745 = vst [vmem:[%s1681 + $0x218] sm:$0xff] %v1525
    %v1746 = vld [vmem:[#allocation2] sm:$0xff]
    %v1747 = vld [vmem:[#allocation2 + $0x8] sm:$0xff]
    %v1748 = vld [vmem:[#allocation2 + $0x10] sm:$0xff]
    %v1749 = vld [vmem:[#allocation2 + $0x18] sm:$0xff]
    %v1750 = vld [vmem:[#allocation2 + $0x20] sm:$0xff]
    %v1751 = vld [vmem:[#allocation2 + $0x28] sm:$0xff]
    %v1752 = vld [vmem:[#allocation2 + $0x30] sm:$0xff]
    %v1753 = vld [vmem:[#allocation2 + $0x38] sm:$0xff]
    %v1754 = vld [vmem:[#allocation2 + $0x40] sm:$0xff]
    %v1755 = vld [vmem:[#allocation2 + $0x48] sm:$0xff]
    %v1756 = vld [vmem:[#allocation2 + $0x50] sm:$0xff]
    %v1757 = vld [vmem:[#allocation2 + $0x58] sm:$0xff]
    %v1758 = vld [vmem:[#allocation2 + $0x60] sm:$0xff]
    %v1759 = vld [vmem:[#allocation2 + $0x68] sm:$0xff]
    %v1760 = vld [vmem:[#allocation2 + $0x70] sm:$0xff]
    %v1761 = vld [vmem:[#allocation2 + $0x78] sm:$0xff]
    %v1762 = vld [vmem:[#allocation2 + $0x80] sm:$0xff]
    %v1763 = vld [vmem:[#allocation2 + $0x88] sm:$0xff]
    %v1764 = vld [vmem:[#allocation2 + $0x90] sm:$0xff]
    %v1765 = vld [vmem:[#allocation2 + $0x98] sm:$0xff]
    %v1766 = vld [vmem:[#allocation2 + $0xa0] sm:$0xff]
    %v1767 = vld [vmem:[#allocation2 + $0xa8] sm:$0xff]
    %v1768 = vld [vmem:[#allocation2 + $0xb0] sm:$0xff]
    %v1769 = vld [vmem:[#allocation2 + $0xb8] sm:$0xff]
    %v1770 = vld [vmem:[#allocation2 + $0xc0] sm:$0xff]
    %v1771 = vld [vmem:[#allocation2 + $0xc8] sm:$0xff]
    %v1772 = vld [vmem:[#allocation2 + $0xd0] sm:$0xff]
    %v1773 = vld [vmem:[#allocation2 + $0xd8] sm:$0xff]
    %v1774 = vld [vmem:[#allocation2 + $0xe0] sm:$0xff]
    %v1775 = vld [vmem:[#allocation2 + $0xe8] sm:$0xff]
    %v1776 = vld [vmem:[#allocation2 + $0xf0] sm:$0xff]
    %v1777 = vld [vmem:[#allocation2 + $0xf8] sm:$0xff]
    %v1778 = vld [vmem:[#allocation2 + $0x120] sm:$0xff]
    %v1779 = vld [vmem:[#allocation2 + $0x128] sm:$0xff]
    %v1780 = vld [vmem:[#allocation2 + $0x130] sm:$0xff]
    %v1781 = vld [vmem:[#allocation2 + $0x138] sm:$0xff]
    %v1782 = vld [vmem:[#allocation2 + $0x140] sm:$0xff]
    %v1783 = vld [vmem:[#allocation2 + $0x148] sm:$0xff]
    %v1784 = vld [vmem:[#allocation2 + $0x150] sm:$0xff]
    %v1785 = vld [vmem:[#allocation2 + $0x158] sm:$0xff]
    %v1786 = vld [vmem:[#allocation2 + $0x160] sm:$0xff]
    %v1787 = vld [vmem:[#allocation2 + $0x168] sm:$0xff]
    %v1788 = vld [vmem:[#allocation2 + $0x170] sm:$0xff]
    %v1789 = vld [vmem:[#allocation2 + $0x178] sm:$0xff]
    %v1790 = vld [vmem:[#allocation2 + $0x180] sm:$0xff]
    %v1791 = vld [vmem:[#allocation2 + $0x188] sm:$0xff]
    %v1792 = vld [vmem:[#allocation2 + $0x190] sm:$0xff]
    %v1793 = vld [vmem:[#allocation2 + $0x198] sm:$0xff]
    %v1794 = vld [vmem:[#allocation2 + $0x1a0] sm:$0xff]
    %v1795 = vld [vmem:[#allocation2 + $0x1a8] sm:$0xff]
    %v1796 = vld [vmem:[#allocation2 + $0x1b0] sm:$0xff]
    %v1797 = vld [vmem:[#allocation2 + $0x1b8] sm:$0xff]
    %v1798 = vld [vmem:[#allocation2 + $0x1c0] sm:$0xff]
    %v1799 = vld [vmem:[#allocation2 + $0x1c8] sm:$0xff]
    %v1800 = vld [vmem:[#allocation2 + $0x1d0] sm:$0xff]
    %v1801 = vld [vmem:[#allocation2 + $0x1d8] sm:$0xff]
    %v1802 = vld [vmem:[#allocation2 + $0x1e0] sm:$0xff]
    %v1803 = vld [vmem:[#allocation2 + $0x1e8] sm:$0xff]
    %v1804 = vld [vmem:[#allocation2 + $0x1f0] sm:$0xff]
    %v1805 = vld [vmem:[#allocation2 + $0x1f8] sm:$0xff]
    %v1806 = vld [vmem:[#allocation2 + $0x200] sm:$0xff]
    %v1807 = vld [vmem:[#allocation2 + $0x208] sm:$0xff]
    %v1808 = vld [vmem:[#allocation2 + $0x210] sm:$0xff]
    %v1809 = vld [vmem:[#allocation2 + $0x218] sm:$0xff]
    %v1810 = vld [vmem:[#allocation8] sm:$0xff]
    %v1811 = vld [vmem:[#allocation8 + $0x8] sm:$0xff]
    %v1812 = vld [vmem:[#allocation8 + $0x10] sm:$0xff]
    %v1813 = vld [vmem:[#allocation8 + $0x18] sm:$0xff]
    %v1814 = vld [vmem:[#allocation8 + $0x20] sm:$0xff]
    %v1815 = vld [vmem:[#allocation8 + $0x28] sm:$0xff]
    %v1816 = vld [vmem:[#allocation8 + $0x30] sm:$0xff]
    %v1817 = vld [vmem:[#allocation8 + $0x38] sm:$0xff]
    %v1818 = vld [vmem:[#allocation8 + $0x40] sm:$0xff]
    %v1819 = vld [vmem:[#allocation8 + $0x48] sm:$0xff]
    %v1820 = vld [vmem:[#allocation8 + $0x50] sm:$0xff]
    %v1821 = vld [vmem:[#allocation8 + $0x58] sm:$0xff]
    %v1822 = vld [vmem:[#allocation8 + $0x60] sm:$0xff]
    %v1823 = vld [vmem:[#allocation8 + $0x68] sm:$0xff]
    %v1824 = vld [vmem:[#allocation8 + $0x70] sm:$0xff]
    %v1825 = vld [vmem:[#allocation8 + $0x78] sm:$0xff]
    %s1826 = scalar_lea.vmem [#allocation2], 576
    %v1827 = vld [vmem:[%s1826] sm:$0xff]
    %v1828 = vld [vmem:[%s1826 + $0x8] sm:$0xff]
    %v1829 = vld [vmem:[%s1826 + $0x10] sm:$0xff]
    %v1830 = vld [vmem:[%s1826 + $0x18] sm:$0xff]
    %v1831 = vld [vmem:[%s1826 + $0x20] sm:$0xff]
    %v1832 = vld [vmem:[%s1826 + $0x28] sm:$0xff]
    %v1833 = vld [vmem:[%s1826 + $0x30] sm:$0xff]
    %v1834 = vld [vmem:[%s1826 + $0x38] sm:$0xff]
    %v1835 = vld [vmem:[%s1826 + $0x40] sm:$0xff]
    %v1836 = vld [vmem:[%s1826 + $0x48] sm:$0xff]
    %v1837 = vld [vmem:[%s1826 + $0x50] sm:$0xff]
    %v1838 = vld [vmem:[%s1826 + $0x58] sm:$0xff]
    %v1839 = vld [vmem:[%s1826 + $0x60] sm:$0xff]
    %v1840 = vld [vmem:[%s1826 + $0x68] sm:$0xff]
    %v1841 = vld [vmem:[%s1826 + $0x70] sm:$0xff]
    %v1842 = vld [vmem:[%s1826 + $0x78] sm:$0xff]
    %v1843 = vld [vmem:[%s1826 + $0x80] sm:$0xff]
    %v1844 = vld [vmem:[%s1826 + $0x88] sm:$0xff]
    %v1845 = vld [vmem:[%s1826 + $0x90] sm:$0xff]
    %v1846 = vld [vmem:[%s1826 + $0x98] sm:$0xff]
    %v1847 = vld [vmem:[%s1826 + $0xa0] sm:$0xff]
    %v1848 = vld [vmem:[%s1826 + $0xa8] sm:$0xff]
    %v1849 = vld [vmem:[%s1826 + $0xb0] sm:$0xff]
    %v1850 = vld [vmem:[%s1826 + $0xb8] sm:$0xff]
    %v1851 = vld [vmem:[%s1826 + $0xc0] sm:$0xff]
    %v1852 = vld [vmem:[%s1826 + $0xc8] sm:$0xff]
    %v1853 = vld [vmem:[%s1826 + $0xd0] sm:$0xff]
    %v1854 = vld [vmem:[%s1826 + $0xd8] sm:$0xff]
    %v1855 = vld [vmem:[%s1826 + $0xe0] sm:$0xff]
    %v1856 = vld [vmem:[%s1826 + $0xe8] sm:$0xff]
    %v1857 = vld [vmem:[%s1826 + $0xf0] sm:$0xff]
    %v1858 = vld [vmem:[%s1826 + $0xf8] sm:$0xff]
    %v1859 = vld [vmem:[%s1826 + $0x120] sm:$0xff]
    %v1860 = vld [vmem:[%s1826 + $0x128] sm:$0xff]
    %v1861 = vld [vmem:[%s1826 + $0x130] sm:$0xff]
    %v1862 = vld [vmem:[%s1826 + $0x138] sm:$0xff]
    %v1863 = vld [vmem:[%s1826 + $0x140] sm:$0xff]
    %v1864 = vld [vmem:[%s1826 + $0x148] sm:$0xff]
    %v1865 = vld [vmem:[%s1826 + $0x150] sm:$0xff]
    %v1866 = vld [vmem:[%s1826 + $0x158] sm:$0xff]
    %v1867 = vld [vmem:[%s1826 + $0x160] sm:$0xff]
    %v1868 = vld [vmem:[%s1826 + $0x168] sm:$0xff]
    %v1869 = vld [vmem:[%s1826 + $0x170] sm:$0xff]
    %v1870 = vld [vmem:[%s1826 + $0x178] sm:$0xff]
    %v1871 = vld [vmem:[%s1826 + $0x180] sm:$0xff]
    %v1872 = vld [vmem:[%s1826 + $0x188] sm:$0xff]
    %v1873 = vld [vmem:[%s1826 + $0x190] sm:$0xff]
    %v1874 = vld [vmem:[%s1826 + $0x198] sm:$0xff]
    %v1875 = vld [vmem:[%s1826 + $0x1a0] sm:$0xff]
    %v1876 = vld [vmem:[%s1826 + $0x1a8] sm:$0xff]
    %v1877 = vld [vmem:[%s1826 + $0x1b0] sm:$0xff]
    %v1878 = vld [vmem:[%s1826 + $0x1b8] sm:$0xff]
    %v1879 = vld [vmem:[%s1826 + $0x1c0] sm:$0xff]
    %v1880 = vld [vmem:[%s1826 + $0x1c8] sm:$0xff]
    %v1881 = vld [vmem:[%s1826 + $0x1d0] sm:$0xff]
    %v1882 = vld [vmem:[%s1826 + $0x1d8] sm:$0xff]
    %v1883 = vld [vmem:[%s1826 + $0x1e0] sm:$0xff]
    %v1884 = vld [vmem:[%s1826 + $0x1e8] sm:$0xff]
    %v1885 = vld [vmem:[%s1826 + $0x1f0] sm:$0xff]
    %v1886 = vld [vmem:[%s1826 + $0x1f8] sm:$0xff]
    %v1887 = vld [vmem:[%s1826 + $0x200] sm:$0xff]
    %v1888 = vld [vmem:[%s1826 + $0x208] sm:$0xff]
    %v1889 = vld [vmem:[%s1826 + $0x210] sm:$0xff]
    %v1890 = vld [vmem:[%s1826 + $0x218] sm:$0xff]
    %s1891 = scalar_lea.vmem [#allocation8], 128
    %v1892 = vld [vmem:[%s1891] sm:$0xff]
    %v1893 = vld [vmem:[%s1891 + $0x8] sm:$0xff]
    %v1894 = vld [vmem:[%s1891 + $0x10] sm:$0xff]
    %v1895 = vld [vmem:[%s1891 + $0x18] sm:$0xff]
    %v1896 = vld [vmem:[%s1891 + $0x20] sm:$0xff]
    %v1897 = vld [vmem:[%s1891 + $0x28] sm:$0xff]
    %v1898 = vld [vmem:[%s1891 + $0x30] sm:$0xff]
    %v1899 = vld [vmem:[%s1891 + $0x38] sm:$0xff]
    %v1900 = vld [vmem:[%s1891 + $0x40] sm:$0xff]
    %v1901 = vld [vmem:[%s1891 + $0x48] sm:$0xff]
    %v1902 = vld [vmem:[%s1891 + $0x50] sm:$0xff]
    %v1903 = vld [vmem:[%s1891 + $0x58] sm:$0xff]
    %v1904 = vld [vmem:[%s1891 + $0x60] sm:$0xff]
    %v1905 = vld [vmem:[%s1891 + $0x68] sm:$0xff]
    %v1906 = vld [vmem:[%s1891 + $0x70] sm:$0xff]
    %v1907 = vld [vmem:[%s1891 + $0x78] sm:$0xff]
    %1908 = vmatpush.msra.mxu0 %v1907
    %1909 = vmatpush.msra.mxu0 %v1906
    %1910 = vmatpush.msra.mxu0 %v1905
    %1911 = vmatpush.msra.mxu0 %v1904
    %1912 = vmatpush.msra.mxu0 %v1903
    %1913 = vmatpush.msra.mxu0 %v1902
    %1914 = vmatpush.msra.mxu0 %v1901
    %1915 = vmatpush.msra.mxu0 %v1900
    %1916 = vmatpush.msra.mxu0 %v1899
    %1917 = vmatpush.msra.mxu0 %v1898
    %1918 = vmatpush.msra.mxu0 %v1897
    %1919 = vmatpush.msra.mxu0 %v1896
    %1920 = vmatpush.msra.mxu0 %v1895
    %1921 = vmatpush.msra.mxu0 %v1894
    %1922 = vmatpush.msra.mxu0 %v1893
    %1923 = vmatpush.msra.mxu0 %v1892
    %1924 = vmatmul.f32.gmra.mxu0 %v1827
    %v1925 = vpop.f32.mrf.mxu0
    %v1926 = vadd.f32 0.0, %v1925
    %1927 = vmatmul.f32.gmra.mxu0 %v1828
    %v1928 = vpop.f32.mrf.mxu0
    %v1929 = vadd.f32 0.0, %v1928
    %1930 = vmatmul.f32.gmra.mxu0 %v1829
    %v1931 = vpop.f32.mrf.mxu0
    %v1932 = vadd.f32 0.0, %v1931
    %1933 = vmatmul.f32.gmra.mxu0 %v1830
    %v1934 = vpop.f32.mrf.mxu0
    %v1935 = vadd.f32 0.0, %v1934
    %1936 = vmatmul.f32.gmra.mxu0 %v1831
    %v1937 = vpop.f32.mrf.mxu0
    %v1938 = vadd.f32 0.0, %v1937
    %1939 = vmatmul.f32.gmra.mxu0 %v1832
    %v1940 = vpop.f32.mrf.mxu0
    %v1941 = vadd.f32 0.0, %v1940
    %1942 = vmatmul.f32.gmra.mxu0 %v1833
    %v1943 = vpop.f32.mrf.mxu0
    %v1944 = vadd.f32 0.0, %v1943
    %1945 = vmatmul.f32.gmra.mxu0 %v1834
    %v1946 = vpop.f32.mrf.mxu0
    %v1947 = vadd.f32 0.0, %v1946
    %1948 = vmatmul.f32.gmra.mxu0 %v1835
    %v1949 = vpop.f32.mrf.mxu0
    %v1950 = vadd.f32 0.0, %v1949
    %1951 = vmatmul.f32.gmra.mxu0 %v1836
    %v1952 = vpop.f32.mrf.mxu0
    %v1953 = vadd.f32 0.0, %v1952
    %1954 = vmatmul.f32.gmra.mxu0 %v1837
    %v1955 = vpop.f32.mrf.mxu0
    %v1956 = vadd.f32 0.0, %v1955
    %1957 = vmatmul.f32.gmra.mxu0 %v1838
    %v1958 = vpop.f32.mrf.mxu0
    %v1959 = vadd.f32 0.0, %v1958
    %1960 = vmatmul.f32.gmra.mxu0 %v1839
    %v1961 = vpop.f32.mrf.mxu0
    %v1962 = vadd.f32 0.0, %v1961
    %1963 = vmatmul.f32.gmra.mxu0 %v1840
    %v1964 = vpop.f32.mrf.mxu0
    %v1965 = vadd.f32 0.0, %v1964
    %1966 = vmatmul.f32.gmra.mxu0 %v1841
    %v1967 = vpop.f32.mrf.mxu0
    %v1968 = vadd.f32 0.0, %v1967
    %1969 = vmatmul.f32.gmra.mxu0 %v1842
    %v1970 = vpop.f32.mrf.mxu0
    %v1971 = vadd.f32 0.0, %v1970
    %1972 = vmatmul.f32.gmra.mxu0 %v1843
    %v1973 = vpop.f32.mrf.mxu0
    %v1974 = vadd.f32 0.0, %v1973
    %1975 = vmatmul.f32.gmra.mxu0 %v1844
    %v1976 = vpop.f32.mrf.mxu0
    %v1977 = vadd.f32 0.0, %v1976
    %1978 = vmatmul.f32.gmra.mxu0 %v1845
    %v1979 = vpop.f32.mrf.mxu0
    %v1980 = vadd.f32 0.0, %v1979
    %1981 = vmatmul.f32.gmra.mxu0 %v1846
    %v1982 = vpop.f32.mrf.mxu0
    %v1983 = vadd.f32 0.0, %v1982
    %1984 = vmatmul.f32.gmra.mxu0 %v1847
    %v1985 = vpop.f32.mrf.mxu0
    %v1986 = vadd.f32 0.0, %v1985
    %1987 = vmatmul.f32.gmra.mxu0 %v1848
    %v1988 = vpop.f32.mrf.mxu0
    %v1989 = vadd.f32 0.0, %v1988
    %1990 = vmatmul.f32.gmra.mxu0 %v1849
    %v1991 = vpop.f32.mrf.mxu0
    %v1992 = vadd.f32 0.0, %v1991
    %1993 = vmatmul.f32.gmra.mxu0 %v1850
    %v1994 = vpop.f32.mrf.mxu0
    %v1995 = vadd.f32 0.0, %v1994
    %1996 = vmatmul.f32.gmra.mxu0 %v1851
    %v1997 = vpop.f32.mrf.mxu0
    %v1998 = vadd.f32 0.0, %v1997
    %1999 = vmatmul.f32.gmra.mxu0 %v1852
    %v2000 = vpop.f32.mrf.mxu0
    %v2001 = vadd.f32 0.0, %v2000
    %2002 = vmatmul.f32.gmra.mxu0 %v1853
    %v2003 = vpop.f32.mrf.mxu0
    %v2004 = vadd.f32 0.0, %v2003
    %2005 = vmatmul.f32.gmra.mxu0 %v1854
    %v2006 = vpop.f32.mrf.mxu0
    %v2007 = vadd.f32 0.0, %v2006
    %2008 = vmatmul.f32.gmra.mxu0 %v1855
    %v2009 = vpop.f32.mrf.mxu0
    %v2010 = vadd.f32 0.0, %v2009
    %2011 = vmatmul.f32.gmra.mxu0 %v1856
    %v2012 = vpop.f32.mrf.mxu0
    %v2013 = vadd.f32 0.0, %v2012
    %2014 = vmatmul.f32.gmra.mxu0 %v1857
    %v2015 = vpop.f32.mrf.mxu0
    %v2016 = vadd.f32 0.0, %v2015
    %2017 = vmatmul.f32.gmra.mxu0 %v1858
    %v2018 = vpop.f32.mrf.mxu0
    %v2019 = vadd.f32 0.0, %v2018
    %2020 = vmatmul.f32.gmra.mxu0 %v1859
    %v2021 = vpop.f32.mrf.mxu0
    %v2022 = vadd.f32 0.0, %v2021
    %2023 = vmatmul.f32.gmra.mxu0 %v1860
    %v2024 = vpop.f32.mrf.mxu0
    %v2025 = vadd.f32 0.0, %v2024
    %2026 = vmatmul.f32.gmra.mxu0 %v1861
    %v2027 = vpop.f32.mrf.mxu0
    %v2028 = vadd.f32 0.0, %v2027
    %2029 = vmatmul.f32.gmra.mxu0 %v1862
    %v2030 = vpop.f32.mrf.mxu0
    %v2031 = vadd.f32 0.0, %v2030
    %2032 = vmatmul.f32.gmra.mxu0 %v1863
    %v2033 = vpop.f32.mrf.mxu0
    %v2034 = vadd.f32 0.0, %v2033
    %2035 = vmatmul.f32.gmra.mxu0 %v1864
    %v2036 = vpop.f32.mrf.mxu0
    %v2037 = vadd.f32 0.0, %v2036
    %2038 = vmatmul.f32.gmra.mxu0 %v1865
    %v2039 = vpop.f32.mrf.mxu0
    %v2040 = vadd.f32 0.0, %v2039
    %2041 = vmatmul.f32.gmra.mxu0 %v1866
    %v2042 = vpop.f32.mrf.mxu0
    %v2043 = vadd.f32 0.0, %v2042
    %2044 = vmatmul.f32.gmra.mxu0 %v1867
    %v2045 = vpop.f32.mrf.mxu0
    %v2046 = vadd.f32 0.0, %v2045
    %2047 = vmatmul.f32.gmra.mxu0 %v1868
    %v2048 = vpop.f32.mrf.mxu0
    %v2049 = vadd.f32 0.0, %v2048
    %2050 = vmatmul.f32.gmra.mxu0 %v1869
    %v2051 = vpop.f32.mrf.mxu0
    %v2052 = vadd.f32 0.0, %v2051
    %2053 = vmatmul.f32.gmra.mxu0 %v1870
    %v2054 = vpop.f32.mrf.mxu0
    %v2055 = vadd.f32 0.0, %v2054
    %2056 = vmatmul.f32.gmra.mxu0 %v1871
    %v2057 = vpop.f32.mrf.mxu0
    %v2058 = vadd.f32 0.0, %v2057
    %2059 = vmatmul.f32.gmra.mxu0 %v1872
    %v2060 = vpop.f32.mrf.mxu0
    %v2061 = vadd.f32 0.0, %v2060
    %2062 = vmatmul.f32.gmra.mxu0 %v1873
    %v2063 = vpop.f32.mrf.mxu0
    %v2064 = vadd.f32 0.0, %v2063
    %2065 = vmatmul.f32.gmra.mxu0 %v1874
    %v2066 = vpop.f32.mrf.mxu0
    %v2067 = vadd.f32 0.0, %v2066
    %2068 = vmatmul.f32.gmra.mxu0 %v1875
    %v2069 = vpop.f32.mrf.mxu0
    %v2070 = vadd.f32 0.0, %v2069
    %2071 = vmatmul.f32.gmra.mxu0 %v1876
    %v2072 = vpop.f32.mrf.mxu0
    %v2073 = vadd.f32 0.0, %v2072
    %2074 = vmatmul.f32.gmra.mxu0 %v1877
    %v2075 = vpop.f32.mrf.mxu0
    %v2076 = vadd.f32 0.0, %v2075
    %2077 = vmatmul.f32.gmra.mxu0 %v1878
    %v2078 = vpop.f32.mrf.mxu0
    %v2079 = vadd.f32 0.0, %v2078
    %2080 = vmatmul.f32.gmra.mxu0 %v1879
    %v2081 = vpop.f32.mrf.mxu0
    %v2082 = vadd.f32 0.0, %v2081
    %2083 = vmatmul.f32.gmra.mxu0 %v1880
    %v2084 = vpop.f32.mrf.mxu0
    %v2085 = vadd.f32 0.0, %v2084
    %2086 = vmatmul.f32.gmra.mxu0 %v1881
    %v2087 = vpop.f32.mrf.mxu0
    %v2088 = vadd.f32 0.0, %v2087
    %2089 = vmatmul.f32.gmra.mxu0 %v1882
    %v2090 = vpop.f32.mrf.mxu0
    %v2091 = vadd.f32 0.0, %v2090
    %2092 = vmatmul.f32.gmra.mxu0 %v1883
    %v2093 = vpop.f32.mrf.mxu0
    %v2094 = vadd.f32 0.0, %v2093
    %2095 = vmatmul.f32.gmra.mxu0 %v1884
    %v2096 = vpop.f32.mrf.mxu0
    %v2097 = vadd.f32 0.0, %v2096
    %2098 = vmatmul.f32.gmra.mxu0 %v1885
    %v2099 = vpop.f32.mrf.mxu0
    %v2100 = vadd.f32 0.0, %v2099
    %2101 = vmatmul.f32.gmra.mxu0 %v1886
    %v2102 = vpop.f32.mrf.mxu0
    %v2103 = vadd.f32 0.0, %v2102
    %2104 = vmatmul.f32.gmra.mxu0 %v1887
    %v2105 = vpop.f32.mrf.mxu0
    %v2106 = vadd.f32 0.0, %v2105
    %2107 = vmatmul.f32.gmra.mxu0 %v1888
    %v2108 = vpop.f32.mrf.mxu0
    %v2109 = vadd.f32 0.0, %v2108
    %2110 = vmatmul.f32.gmra.mxu0 %v1889
    %v2111 = vpop.f32.mrf.mxu0
    %v2112 = vadd.f32 0.0, %v2111
    %2113 = vmatmul.f32.gmra.mxu0 %v1890
    %v2114 = vpop.f32.mrf.mxu0
    %v2115 = vadd.f32 0.0, %v2114
    %2116 = vdwg.mxu0
    %2117 = vmatpush.msra.mxu0 %v1825
    %2118 = vmatpush.msra.mxu0 %v1824
    %2119 = vmatpush.msra.mxu0 %v1823
    %2120 = vmatpush.msra.mxu0 %v1822
    %2121 = vmatpush.msra.mxu0 %v1821
    %2122 = vmatpush.msra.mxu0 %v1820
    %2123 = vmatpush.msra.mxu0 %v1819
    %2124 = vmatpush.msra.mxu0 %v1818
    %2125 = vmatpush.msra.mxu0 %v1817
    %2126 = vmatpush.msra.mxu0 %v1816
    %2127 = vmatpush.msra.mxu0 %v1815
    %2128 = vmatpush.msra.mxu0 %v1814
    %2129 = vmatpush.msra.mxu0 %v1813
    %2130 = vmatpush.msra.mxu0 %v1812
    %2131 = vmatpush.msra.mxu0 %v1811
    %2132 = vmatpush.msra.mxu0 %v1810
    %2133 = vmatmul.f32.gmra.mxu0 %v1746
    %v2134 = vpop.f32.mrf.mxu0
    %v2135 = vadd.f32 %v1926, %v2134
    %2136 = vmatmul.f32.gmra.mxu0 %v1747
    %v2137 = vpop.f32.mrf.mxu0
    %v2138 = vadd.f32 %v1929, %v2137
    %2139 = vmatmul.f32.gmra.mxu0 %v1748
    %v2140 = vpop.f32.mrf.mxu0
    %v2141 = vadd.f32 %v1932, %v2140
    %2142 = vmatmul.f32.gmra.mxu0 %v1749
    %v2143 = vpop.f32.mrf.mxu0
    %v2144 = vadd.f32 %v1935, %v2143
    %2145 = vmatmul.f32.gmra.mxu0 %v1750
    %v2146 = vpop.f32.mrf.mxu0
    %v2147 = vadd.f32 %v1938, %v2146
    %2148 = vmatmul.f32.gmra.mxu0 %v1751
    %v2149 = vpop.f32.mrf.mxu0
    %v2150 = vadd.f32 %v1941, %v2149
    %2151 = vmatmul.f32.gmra.mxu0 %v1752
    %v2152 = vpop.f32.mrf.mxu0
    %v2153 = vadd.f32 %v1944, %v2152
    %2154 = vmatmul.f32.gmra.mxu0 %v1753
    %v2155 = vpop.f32.mrf.mxu0
    %v2156 = vadd.f32 %v1947, %v2155
    %2157 = vmatmul.f32.gmra.mxu0 %v1754
    %v2158 = vpop.f32.mrf.mxu0
    %v2159 = vadd.f32 %v1950, %v2158
    %2160 = vmatmul.f32.gmra.mxu0 %v1755
    %v2161 = vpop.f32.mrf.mxu0
    %v2162 = vadd.f32 %v1953, %v2161
    %2163 = vmatmul.f32.gmra.mxu0 %v1756
    %v2164 = vpop.f32.mrf.mxu0
    %v2165 = vadd.f32 %v1956, %v2164
    %2166 = vmatmul.f32.gmra.mxu0 %v1757
    %v2167 = vpop.f32.mrf.mxu0
    %v2168 = vadd.f32 %v1959, %v2167
    %2169 = vmatmul.f32.gmra.mxu0 %v1758
    %v2170 = vpop.f32.mrf.mxu0
    %v2171 = vadd.f32 %v1962, %v2170
    %2172 = vmatmul.f32.gmra.mxu0 %v1759
    %v2173 = vpop.f32.mrf.mxu0
    %v2174 = vadd.f32 %v1965, %v2173
    %2175 = vmatmul.f32.gmra.mxu0 %v1760
    %v2176 = vpop.f32.mrf.mxu0
    %v2177 = vadd.f32 %v1968, %v2176
    %2178 = vmatmul.f32.gmra.mxu0 %v1761
    %v2179 = vpop.f32.mrf.mxu0
    %v2180 = vadd.f32 %v1971, %v2179
    %2181 = vmatmul.f32.gmra.mxu0 %v1762
    %v2182 = vpop.f32.mrf.mxu0
    %v2183 = vadd.f32 %v1974, %v2182
    %2184 = vmatmul.f32.gmra.mxu0 %v1763
    %v2185 = vpop.f32.mrf.mxu0
    %v2186 = vadd.f32 %v1977, %v2185
    %2187 = vmatmul.f32.gmra.mxu0 %v1764
    %v2188 = vpop.f32.mrf.mxu0
    %v2189 = vadd.f32 %v1980, %v2188
    %2190 = vmatmul.f32.gmra.mxu0 %v1765
    %v2191 = vpop.f32.mrf.mxu0
    %v2192 = vadd.f32 %v1983, %v2191
    %2193 = vmatmul.f32.gmra.mxu0 %v1766
    %v2194 = vpop.f32.mrf.mxu0
    %v2195 = vadd.f32 %v1986, %v2194
    %2196 = vmatmul.f32.gmra.mxu0 %v1767
    %v2197 = vpop.f32.mrf.mxu0
    %v2198 = vadd.f32 %v1989, %v2197
    %2199 = vmatmul.f32.gmra.mxu0 %v1768
    %v2200 = vpop.f32.mrf.mxu0
    %v2201 = vadd.f32 %v1992, %v2200
    %2202 = vmatmul.f32.gmra.mxu0 %v1769
    %v2203 = vpop.f32.mrf.mxu0
    %v2204 = vadd.f32 %v1995, %v2203
    %2205 = vmatmul.f32.gmra.mxu0 %v1770
    %v2206 = vpop.f32.mrf.mxu0
    %v2207 = vadd.f32 %v1998, %v2206
    %2208 = vmatmul.f32.gmra.mxu0 %v1771
    %v2209 = vpop.f32.mrf.mxu0
    %v2210 = vadd.f32 %v2001, %v2209
    %2211 = vmatmul.f32.gmra.mxu0 %v1772
    %v2212 = vpop.f32.mrf.mxu0
    %v2213 = vadd.f32 %v2004, %v2212
    %2214 = vmatmul.f32.gmra.mxu0 %v1773
    %v2215 = vpop.f32.mrf.mxu0
    %v2216 = vadd.f32 %v2007, %v2215
    %2217 = vmatmul.f32.gmra.mxu0 %v1774
    %v2218 = vpop.f32.mrf.mxu0
    %v2219 = vadd.f32 %v2010, %v2218
    %2220 = vmatmul.f32.gmra.mxu0 %v1775
    %v2221 = vpop.f32.mrf.mxu0
    %v2222 = vadd.f32 %v2013, %v2221
    %2223 = vmatmul.f32.gmra.mxu0 %v1776
    %v2224 = vpop.f32.mrf.mxu0
    %v2225 = vadd.f32 %v2016, %v2224
    %2226 = vmatmul.f32.gmra.mxu0 %v1777
    %v2227 = vpop.f32.mrf.mxu0
    %v2228 = vadd.f32 %v2019, %v2227
    %2229 = vmatmul.f32.gmra.mxu0 %v1778
    %v2230 = vpop.f32.mrf.mxu0
    %v2231 = vadd.f32 %v2022, %v2230
    %2232 = vmatmul.f32.gmra.mxu0 %v1779
    %v2233 = vpop.f32.mrf.mxu0
    %v2234 = vadd.f32 %v2025, %v2233
    %2235 = vmatmul.f32.gmra.mxu0 %v1780
    %v2236 = vpop.f32.mrf.mxu0
    %v2237 = vadd.f32 %v2028, %v2236
    %2238 = vmatmul.f32.gmra.mxu0 %v1781
    %v2239 = vpop.f32.mrf.mxu0
    %v2240 = vadd.f32 %v2031, %v2239
    %2241 = vmatmul.f32.gmra.mxu0 %v1782
    %v2242 = vpop.f32.mrf.mxu0
    %v2243 = vadd.f32 %v2034, %v2242
    %2244 = vmatmul.f32.gmra.mxu0 %v1783
    %v2245 = vpop.f32.mrf.mxu0
    %v2246 = vadd.f32 %v2037, %v2245
    %2247 = vmatmul.f32.gmra.mxu0 %v1784
    %v2248 = vpop.f32.mrf.mxu0
    %v2249 = vadd.f32 %v2040, %v2248
    %2250 = vmatmul.f32.gmra.mxu0 %v1785
    %v2251 = vpop.f32.mrf.mxu0
    %v2252 = vadd.f32 %v2043, %v2251
    %2253 = vmatmul.f32.gmra.mxu0 %v1786
    %v2254 = vpop.f32.mrf.mxu0
    %v2255 = vadd.f32 %v2046, %v2254
    %2256 = vmatmul.f32.gmra.mxu0 %v1787
    %v2257 = vpop.f32.mrf.mxu0
    %v2258 = vadd.f32 %v2049, %v2257
    %2259 = vmatmul.f32.gmra.mxu0 %v1788
    %v2260 = vpop.f32.mrf.mxu0
    %v2261 = vadd.f32 %v2052, %v2260
    %2262 = vmatmul.f32.gmra.mxu0 %v1789
    %v2263 = vpop.f32.mrf.mxu0
    %v2264 = vadd.f32 %v2055, %v2263
    %2265 = vmatmul.f32.gmra.mxu0 %v1790
    %v2266 = vpop.f32.mrf.mxu0
    %v2267 = vadd.f32 %v2058, %v2266
    %2268 = vmatmul.f32.gmra.mxu0 %v1791
    %v2269 = vpop.f32.mrf.mxu0
    %v2270 = vadd.f32 %v2061, %v2269
    %2271 = vmatmul.f32.gmra.mxu0 %v1792
    %v2272 = vpop.f32.mrf.mxu0
    %v2273 = vadd.f32 %v2064, %v2272
    %2274 = vmatmul.f32.gmra.mxu0 %v1793
    %v2275 = vpop.f32.mrf.mxu0
    %v2276 = vadd.f32 %v2067, %v2275
    %2277 = vmatmul.f32.gmra.mxu0 %v1794
    %v2278 = vpop.f32.mrf.mxu0
    %v2279 = vadd.f32 %v2070, %v2278
    %2280 = vmatmul.f32.gmra.mxu0 %v1795
    %v2281 = vpop.f32.mrf.mxu0
    %v2282 = vadd.f32 %v2073, %v2281
    %2283 = vmatmul.f32.gmra.mxu0 %v1796
    %v2284 = vpop.f32.mrf.mxu0
    %v2285 = vadd.f32 %v2076, %v2284
    %2286 = vmatmul.f32.gmra.mxu0 %v1797
    %v2287 = vpop.f32.mrf.mxu0
    %v2288 = vadd.f32 %v2079, %v2287
    %2289 = vmatmul.f32.gmra.mxu0 %v1798
    %v2290 = vpop.f32.mrf.mxu0
    %v2291 = vadd.f32 %v2082, %v2290
    %2292 = vmatmul.f32.gmra.mxu0 %v1799
    %v2293 = vpop.f32.mrf.mxu0
    %v2294 = vadd.f32 %v2085, %v2293
    %2295 = vmatmul.f32.gmra.mxu0 %v1800
    %v2296 = vpop.f32.mrf.mxu0
    %v2297 = vadd.f32 %v2088, %v2296
    %2298 = vmatmul.f32.gmra.mxu0 %v1801
    %v2299 = vpop.f32.mrf.mxu0
    %v2300 = vadd.f32 %v2091, %v2299
    %2301 = vmatmul.f32.gmra.mxu0 %v1802
    %v2302 = vpop.f32.mrf.mxu0
    %v2303 = vadd.f32 %v2094, %v2302
    %2304 = vmatmul.f32.gmra.mxu0 %v1803
    %v2305 = vpop.f32.mrf.mxu0
    %v2306 = vadd.f32 %v2097, %v2305
    %2307 = vmatmul.f32.gmra.mxu0 %v1804
    %v2308 = vpop.f32.mrf.mxu0
    %v2309 = vadd.f32 %v2100, %v2308
    %2310 = vmatmul.f32.gmra.mxu0 %v1805
    %v2311 = vpop.f32.mrf.mxu0
    %v2312 = vadd.f32 %v2103, %v2311
    %2313 = vmatmul.f32.gmra.mxu0 %v1806
    %v2314 = vpop.f32.mrf.mxu0
    %v2315 = vadd.f32 %v2106, %v2314
    %2316 = vmatmul.f32.gmra.mxu0 %v1807
    %v2317 = vpop.f32.mrf.mxu0
    %v2318 = vadd.f32 %v2109, %v2317
    %2319 = vmatmul.f32.gmra.mxu0 %v1808
    %v2320 = vpop.f32.mrf.mxu0
    %v2321 = vadd.f32 %v2112, %v2320
    %2322 = vmatmul.f32.gmra.mxu0 %v1809
    %v2323 = vpop.f32.mrf.mxu0
    %v2324 = vadd.f32 %v2115, %v2323
    %2325 = vdwg.mxu0
    %s2326 = scalar_lea.vmem [#allocation2], 1152
    %v2327 = vld [vmem:[%s2326] sm:$0xff]
    %v2328 = vld [vmem:[%s2326 + $0x8] sm:$0xff]
    %v2329 = vld [vmem:[%s2326 + $0x10] sm:$0xff]
    %v2330 = vld [vmem:[%s2326 + $0x18] sm:$0xff]
    %v2331 = vld [vmem:[%s2326 + $0x20] sm:$0xff]
    %v2332 = vld [vmem:[%s2326 + $0x28] sm:$0xff]
    %v2333 = vld [vmem:[%s2326 + $0x30] sm:$0xff]
    %v2334 = vld [vmem:[%s2326 + $0x38] sm:$0xff]
    %v2335 = vld [vmem:[%s2326 + $0x40] sm:$0xff]
    %v2336 = vld [vmem:[%s2326 + $0x48] sm:$0xff]
    %v2337 = vld [vmem:[%s2326 + $0x50] sm:$0xff]
    %v2338 = vld [vmem:[%s2326 + $0x58] sm:$0xff]
    %v2339 = vld [vmem:[%s2326 + $0x60] sm:$0xff]
    %v2340 = vld [vmem:[%s2326 + $0x68] sm:$0xff]
    %v2341 = vld [vmem:[%s2326 + $0x70] sm:$0xff]
    %v2342 = vld [vmem:[%s2326 + $0x78] sm:$0xff]
    %v2343 = vld [vmem:[%s2326 + $0x80] sm:$0xff]
    %v2344 = vld [vmem:[%s2326 + $0x88] sm:$0xff]
    %v2345 = vld [vmem:[%s2326 + $0x90] sm:$0xff]
    %v2346 = vld [vmem:[%s2326 + $0x98] sm:$0xff]
    %v2347 = vld [vmem:[%s2326 + $0xa0] sm:$0xff]
    %v2348 = vld [vmem:[%s2326 + $0xa8] sm:$0xff]
    %v2349 = vld [vmem:[%s2326 + $0xb0] sm:$0xff]
    %v2350 = vld [vmem:[%s2326 + $0xb8] sm:$0xff]
    %v2351 = vld [vmem:[%s2326 + $0xc0] sm:$0xff]
    %v2352 = vld [vmem:[%s2326 + $0xc8] sm:$0xff]
    %v2353 = vld [vmem:[%s2326 + $0xd0] sm:$0xff]
    %v2354 = vld [vmem:[%s2326 + $0xd8] sm:$0xff]
    %v2355 = vld [vmem:[%s2326 + $0xe0] sm:$0xff]
    %v2356 = vld [vmem:[%s2326 + $0xe8] sm:$0xff]
    %v2357 = vld [vmem:[%s2326 + $0xf0] sm:$0xff]
    %v2358 = vld [vmem:[%s2326 + $0xf8] sm:$0xff]
    %v2359 = vld [vmem:[%s2326 + $0x120] sm:$0xff]
    %v2360 = vld [vmem:[%s2326 + $0x128] sm:$0xff]
    %v2361 = vld [vmem:[%s2326 + $0x130] sm:$0xff]
    %v2362 = vld [vmem:[%s2326 + $0x138] sm:$0xff]
    %v2363 = vld [vmem:[%s2326 + $0x140] sm:$0xff]
    %v2364 = vld [vmem:[%s2326 + $0x148] sm:$0xff]
    %v2365 = vld [vmem:[%s2326 + $0x150] sm:$0xff]
    %v2366 = vld [vmem:[%s2326 + $0x158] sm:$0xff]
    %v2367 = vld [vmem:[%s2326 + $0x160] sm:$0xff]
    %v2368 = vld [vmem:[%s2326 + $0x168] sm:$0xff]
    %v2369 = vld [vmem:[%s2326 + $0x170] sm:$0xff]
    %v2370 = vld [vmem:[%s2326 + $0x178] sm:$0xff]
    %v2371 = vld [vmem:[%s2326 + $0x180] sm:$0xff]
    %v2372 = vld [vmem:[%s2326 + $0x188] sm:$0xff]
    %v2373 = vld [vmem:[%s2326 + $0x190] sm:$0xff]
    %v2374 = vld [vmem:[%s2326 + $0x198] sm:$0xff]
    %v2375 = vld [vmem:[%s2326 + $0x1a0] sm:$0xff]
    %v2376 = vld [vmem:[%s2326 + $0x1a8] sm:$0xff]
    %v2377 = vld [vmem:[%s2326 + $0x1b0] sm:$0xff]
    %v2378 = vld [vmem:[%s2326 + $0x1b8] sm:$0xff]
    %v2379 = vld [vmem:[%s2326 + $0x1c0] sm:$0xff]
    %v2380 = vld [vmem:[%s2326 + $0x1c8] sm:$0xff]
    %v2381 = vld [vmem:[%s2326 + $0x1d0] sm:$0xff]
    %v2382 = vld [vmem:[%s2326 + $0x1d8] sm:$0xff]
    %v2383 = vld [vmem:[%s2326 + $0x1e0] sm:$0xff]
    %v2384 = vld [vmem:[%s2326 + $0x1e8] sm:$0xff]
    %v2385 = vld [vmem:[%s2326 + $0x1f0] sm:$0xff]
    %v2386 = vld [vmem:[%s2326 + $0x1f8] sm:$0xff]
    %v2387 = vld [vmem:[%s2326 + $0x200] sm:$0xff]
    %v2388 = vld [vmem:[%s2326 + $0x208] sm:$0xff]
    %v2389 = vld [vmem:[%s2326 + $0x210] sm:$0xff]
    %v2390 = vld [vmem:[%s2326 + $0x218] sm:$0xff]
    %s2391 = scalar_lea.vmem [#allocation8], 256
    %v2392 = vld [vmem:[%s2391] sm:$0xff]
    %v2393 = vld [vmem:[%s2391 + $0x8] sm:$0xff]
    %v2394 = vld [vmem:[%s2391 + $0x10] sm:$0xff]
    %v2395 = vld [vmem:[%s2391 + $0x18] sm:$0xff]
    %v2396 = vld [vmem:[%s2391 + $0x20] sm:$0xff]
    %v2397 = vld [vmem:[%s2391 + $0x28] sm:$0xff]
    %v2398 = vld [vmem:[%s2391 + $0x30] sm:$0xff]
    %v2399 = vld [vmem:[%s2391 + $0x38] sm:$0xff]
    %v2400 = vld [vmem:[%s2391 + $0x40] sm:$0xff]
    %v2401 = vld [vmem:[%s2391 + $0x48] sm:$0xff]
    %v2402 = vld [vmem:[%s2391 + $0x50] sm:$0xff]
    %v2403 = vld [vmem:[%s2391 + $0x58] sm:$0xff]
    %v2404 = vld [vmem:[%s2391 + $0x60] sm:$0xff]
    %v2405 = vld [vmem:[%s2391 + $0x68] sm:$0xff]
    %v2406 = vld [vmem:[%s2391 + $0x70] sm:$0xff]
    %v2407 = vld [vmem:[%s2391 + $0x78] sm:$0xff]
    %2408 = vmatpush.msra.mxu0 %v2407
    %2409 = vmatpush.msra.mxu0 %v2406
    %2410 = vmatpush.msra.mxu0 %v2405
    %2411 = vmatpush.msra.mxu0 %v2404
    %2412 = vmatpush.msra.mxu0 %v2403
    %2413 = vmatpush.msra.mxu0 %v2402
    %2414 = vmatpush.msra.mxu0 %v2401
    %2415 = vmatpush.msra.mxu0 %v2400
    %2416 = vmatpush.msra.mxu0 %v2399
    %2417 = vmatpush.msra.mxu0 %v2398
    %2418 = vmatpush.msra.mxu0 %v2397
    %2419 = vmatpush.msra.mxu0 %v2396
    %2420 = vmatpush.msra.mxu0 %v2395
    %2421 = vmatpush.msra.mxu0 %v2394
    %2422 = vmatpush.msra.mxu0 %v2393
    %2423 = vmatpush.msra.mxu0 %v2392
    %2424 = vmatmul.f32.gmra.mxu0 %v2327
    %v2425 = vpop.f32.mrf.mxu0
    %v2426 = vadd.f32 0.0, %v2425
    %2427 = vmatmul.f32.gmra.mxu0 %v2328
    %v2428 = vpop.f32.mrf.mxu0
    %v2429 = vadd.f32 0.0, %v2428
    %2430 = vmatmul.f32.gmra.mxu0 %v2329
    %v2431 = vpop.f32.mrf.mxu0
    %v2432 = vadd.f32 0.0, %v2431
    %2433 = vmatmul.f32.gmra.mxu0 %v2330
    %v2434 = vpop.f32.mrf.mxu0
    %v2435 = vadd.f32 0.0, %v2434
    %2436 = vmatmul.f32.gmra.mxu0 %v2331
    %v2437 = vpop.f32.mrf.mxu0
    %v2438 = vadd.f32 0.0, %v2437
    %2439 = vmatmul.f32.gmra.mxu0 %v2332
    %v2440 = vpop.f32.mrf.mxu0
    %v2441 = vadd.f32 0.0, %v2440
    %2442 = vmatmul.f32.gmra.mxu0 %v2333
    %v2443 = vpop.f32.mrf.mxu0
    %v2444 = vadd.f32 0.0, %v2443
    %2445 = vmatmul.f32.gmra.mxu0 %v2334
    %v2446 = vpop.f32.mrf.mxu0
    %v2447 = vadd.f32 0.0, %v2446
    %2448 = vmatmul.f32.gmra.mxu0 %v2335
    %v2449 = vpop.f32.mrf.mxu0
    %v2450 = vadd.f32 0.0, %v2449
    %2451 = vmatmul.f32.gmra.mxu0 %v2336
    %v2452 = vpop.f32.mrf.mxu0
    %v2453 = vadd.f32 0.0, %v2452
    %2454 = vmatmul.f32.gmra.mxu0 %v2337
    %v2455 = vpop.f32.mrf.mxu0
    %v2456 = vadd.f32 0.0, %v2455
    %2457 = vmatmul.f32.gmra.mxu0 %v2338
    %v2458 = vpop.f32.mrf.mxu0
    %v2459 = vadd.f32 0.0, %v2458
    %2460 = vmatmul.f32.gmra.mxu0 %v2339
    %v2461 = vpop.f32.mrf.mxu0
    %v2462 = vadd.f32 0.0, %v2461
    %2463 = vmatmul.f32.gmra.mxu0 %v2340
    %v2464 = vpop.f32.mrf.mxu0
    %v2465 = vadd.f32 0.0, %v2464
    %2466 = vmatmul.f32.gmra.mxu0 %v2341
    %v2467 = vpop.f32.mrf.mxu0
    %v2468 = vadd.f32 0.0, %v2467
    %2469 = vmatmul.f32.gmra.mxu0 %v2342
    %v2470 = vpop.f32.mrf.mxu0
    %v2471 = vadd.f32 0.0, %v2470
    %2472 = vmatmul.f32.gmra.mxu0 %v2343
    %v2473 = vpop.f32.mrf.mxu0
    %v2474 = vadd.f32 0.0, %v2473
    %2475 = vmatmul.f32.gmra.mxu0 %v2344
    %v2476 = vpop.f32.mrf.mxu0
    %v2477 = vadd.f32 0.0, %v2476
    %2478 = vmatmul.f32.gmra.mxu0 %v2345
    %v2479 = vpop.f32.mrf.mxu0
    %v2480 = vadd.f32 0.0, %v2479
    %2481 = vmatmul.f32.gmra.mxu0 %v2346
    %v2482 = vpop.f32.mrf.mxu0
    %v2483 = vadd.f32 0.0, %v2482
    %2484 = vmatmul.f32.gmra.mxu0 %v2347
    %v2485 = vpop.f32.mrf.mxu0
    %v2486 = vadd.f32 0.0, %v2485
    %2487 = vmatmul.f32.gmra.mxu0 %v2348
    %v2488 = vpop.f32.mrf.mxu0
    %v2489 = vadd.f32 0.0, %v2488
    %2490 = vmatmul.f32.gmra.mxu0 %v2349
    %v2491 = vpop.f32.mrf.mxu0
    %v2492 = vadd.f32 0.0, %v2491
    %2493 = vmatmul.f32.gmra.mxu0 %v2350
    %v2494 = vpop.f32.mrf.mxu0
    %v2495 = vadd.f32 0.0, %v2494
    %2496 = vmatmul.f32.gmra.mxu0 %v2351
    %v2497 = vpop.f32.mrf.mxu0
    %v2498 = vadd.f32 0.0, %v2497
    %2499 = vmatmul.f32.gmra.mxu0 %v2352
    %v2500 = vpop.f32.mrf.mxu0
    %v2501 = vadd.f32 0.0, %v2500
    %2502 = vmatmul.f32.gmra.mxu0 %v2353
    %v2503 = vpop.f32.mrf.mxu0
    %v2504 = vadd.f32 0.0, %v2503
    %2505 = vmatmul.f32.gmra.mxu0 %v2354
    %v2506 = vpop.f32.mrf.mxu0
    %v2507 = vadd.f32 0.0, %v2506
    %2508 = vmatmul.f32.gmra.mxu0 %v2355
    %v2509 = vpop.f32.mrf.mxu0
    %v2510 = vadd.f32 0.0, %v2509
    %2511 = vmatmul.f32.gmra.mxu0 %v2356
    %v2512 = vpop.f32.mrf.mxu0
    %v2513 = vadd.f32 0.0, %v2512
    %2514 = vmatmul.f32.gmra.mxu0 %v2357
    %v2515 = vpop.f32.mrf.mxu0
    %v2516 = vadd.f32 0.0, %v2515
    %2517 = vmatmul.f32.gmra.mxu0 %v2358
    %v2518 = vpop.f32.mrf.mxu0
    %v2519 = vadd.f32 0.0, %v2518
    %2520 = vmatmul.f32.gmra.mxu0 %v2359
    %v2521 = vpop.f32.mrf.mxu0
    %v2522 = vadd.f32 0.0, %v2521
    %2523 = vmatmul.f32.gmra.mxu0 %v2360
    %v2524 = vpop.f32.mrf.mxu0
    %v2525 = vadd.f32 0.0, %v2524
    %2526 = vmatmul.f32.gmra.mxu0 %v2361
    %v2527 = vpop.f32.mrf.mxu0
    %v2528 = vadd.f32 0.0, %v2527
    %2529 = vmatmul.f32.gmra.mxu0 %v2362
    %v2530 = vpop.f32.mrf.mxu0
    %v2531 = vadd.f32 0.0, %v2530
    %2532 = vmatmul.f32.gmra.mxu0 %v2363
    %v2533 = vpop.f32.mrf.mxu0
    %v2534 = vadd.f32 0.0, %v2533
    %2535 = vmatmul.f32.gmra.mxu0 %v2364
    %v2536 = vpop.f32.mrf.mxu0
    %v2537 = vadd.f32 0.0, %v2536
    %2538 = vmatmul.f32.gmra.mxu0 %v2365
    %v2539 = vpop.f32.mrf.mxu0
    %v2540 = vadd.f32 0.0, %v2539
    %2541 = vmatmul.f32.gmra.mxu0 %v2366
    %v2542 = vpop.f32.mrf.mxu0
    %v2543 = vadd.f32 0.0, %v2542
    %2544 = vmatmul.f32.gmra.mxu0 %v2367
    %v2545 = vpop.f32.mrf.mxu0
    %v2546 = vadd.f32 0.0, %v2545
    %2547 = vmatmul.f32.gmra.mxu0 %v2368
    %v2548 = vpop.f32.mrf.mxu0
    %v2549 = vadd.f32 0.0, %v2548
    %2550 = vmatmul.f32.gmra.mxu0 %v2369
    %v2551 = vpop.f32.mrf.mxu0
    %v2552 = vadd.f32 0.0, %v2551
    %2553 = vmatmul.f32.gmra.mxu0 %v2370
    %v2554 = vpop.f32.mrf.mxu0
    %v2555 = vadd.f32 0.0, %v2554
    %2556 = vmatmul.f32.gmra.mxu0 %v2371
    %v2557 = vpop.f32.mrf.mxu0
    %v2558 = vadd.f32 0.0, %v2557
    %2559 = vmatmul.f32.gmra.mxu0 %v2372
    %v2560 = vpop.f32.mrf.mxu0
    %v2561 = vadd.f32 0.0, %v2560
    %2562 = vmatmul.f32.gmra.mxu0 %v2373
    %v2563 = vpop.f32.mrf.mxu0
    %v2564 = vadd.f32 0.0, %v2563
    %2565 = vmatmul.f32.gmra.mxu0 %v2374
    %v2566 = vpop.f32.mrf.mxu0
    %v2567 = vadd.f32 0.0, %v2566
    %2568 = vmatmul.f32.gmra.mxu0 %v2375
    %v2569 = vpop.f32.mrf.mxu0
    %v2570 = vadd.f32 0.0, %v2569
    %2571 = vmatmul.f32.gmra.mxu0 %v2376
    %v2572 = vpop.f32.mrf.mxu0
    %v2573 = vadd.f32 0.0, %v2572
    %2574 = vmatmul.f32.gmra.mxu0 %v2377
    %v2575 = vpop.f32.mrf.mxu0
    %v2576 = vadd.f32 0.0, %v2575
    %2577 = vmatmul.f32.gmra.mxu0 %v2378
    %v2578 = vpop.f32.mrf.mxu0
    %v2579 = vadd.f32 0.0, %v2578
    %2580 = vmatmul.f32.gmra.mxu0 %v2379
    %v2581 = vpop.f32.mrf.mxu0
    %v2582 = vadd.f32 0.0, %v2581
    %2583 = vmatmul.f32.gmra.mxu0 %v2380
    %v2584 = vpop.f32.mrf.mxu0
    %v2585 = vadd.f32 0.0, %v2584
    %2586 = vmatmul.f32.gmra.mxu0 %v2381
    %v2587 = vpop.f32.mrf.mxu0
    %v2588 = vadd.f32 0.0, %v2587
    %2589 = vmatmul.f32.gmra.mxu0 %v2382
    %v2590 = vpop.f32.mrf.mxu0
    %v2591 = vadd.f32 0.0, %v2590
    %2592 = vmatmul.f32.gmra.mxu0 %v2383
    %v2593 = vpop.f32.mrf.mxu0
    %v2594 = vadd.f32 0.0, %v2593
    %2595 = vmatmul.f32.gmra.mxu0 %v2384
    %v2596 = vpop.f32.mrf.mxu0
    %v2597 = vadd.f32 0.0, %v2596
    %2598 = vmatmul.f32.gmra.mxu0 %v2385
    %v2599 = vpop.f32.mrf.mxu0
    %v2600 = vadd.f32 0.0, %v2599
    %2601 = vmatmul.f32.gmra.mxu0 %v2386
    %v2602 = vpop.f32.mrf.mxu0
    %v2603 = vadd.f32 0.0, %v2602
    %2604 = vmatmul.f32.gmra.mxu0 %v2387
    %v2605 = vpop.f32.mrf.mxu0
    %v2606 = vadd.f32 0.0, %v2605
    %2607 = vmatmul.f32.gmra.mxu0 %v2388
    %v2608 = vpop.f32.mrf.mxu0
    %v2609 = vadd.f32 0.0, %v2608
    %2610 = vmatmul.f32.gmra.mxu0 %v2389
    %v2611 = vpop.f32.mrf.mxu0
    %v2612 = vadd.f32 0.0, %v2611
    %2613 = vmatmul.f32.gmra.mxu0 %v2390
    %v2614 = vpop.f32.mrf.mxu0
    %v2615 = vadd.f32 0.0, %v2614
    %2616 = vdwg.mxu0
    %v2617 = vadd.f32 %v2135, %v2426
    %v2618 = vadd.f32 %v2138, %v2429
    %v2619 = vadd.f32 %v2141, %v2432
    %v2620 = vadd.f32 %v2144, %v2435
    %v2621 = vadd.f32 %v2147, %v2438
    %v2622 = vadd.f32 %v2150, %v2441
    %v2623 = vadd.f32 %v2153, %v2444
    %v2624 = vadd.f32 %v2156, %v2447
    %v2625 = vadd.f32 %v2159, %v2450
    %v2626 = vadd.f32 %v2162, %v2453
    %v2627 = vadd.f32 %v2165, %v2456
    %v2628 = vadd.f32 %v2168, %v2459
    %v2629 = vadd.f32 %v2171, %v2462
    %v2630 = vadd.f32 %v2174, %v2465
    %v2631 = vadd.f32 %v2177, %v2468
    %v2632 = vadd.f32 %v2180, %v2471
    %v2633 = vadd.f32 %v2183, %v2474
    %v2634 = vadd.f32 %v2186, %v2477
    %v2635 = vadd.f32 %v2189, %v2480
    %v2636 = vadd.f32 %v2192, %v2483
    %v2637 = vadd.f32 %v2195, %v2486
    %v2638 = vadd.f32 %v2198, %v2489
    %v2639 = vadd.f32 %v2201, %v2492
    %v2640 = vadd.f32 %v2204, %v2495
    %v2641 = vadd.f32 %v2207, %v2498
    %v2642 = vadd.f32 %v2210, %v2501
    %v2643 = vadd.f32 %v2213, %v2504
    %v2644 = vadd.f32 %v2216, %v2507
    %v2645 = vadd.f32 %v2219, %v2510
    %v2646 = vadd.f32 %v2222, %v2513
    %v2647 = vadd.f32 %v2225, %v2516
    %v2648 = vadd.f32 %v2228, %v2519
    %v2649 = vadd.f32 %v2231, %v2522
    %v2650 = vadd.f32 %v2234, %v2525
    %v2651 = vadd.f32 %v2237, %v2528
    %v2652 = vadd.f32 %v2240, %v2531
    %v2653 = vadd.f32 %v2243, %v2534
    %v2654 = vadd.f32 %v2246, %v2537
    %v2655 = vadd.f32 %v2249, %v2540
    %v2656 = vadd.f32 %v2252, %v2543
    %v2657 = vadd.f32 %v2255, %v2546
    %v2658 = vadd.f32 %v2258, %v2549
    %v2659 = vadd.f32 %v2261, %v2552
    %v2660 = vadd.f32 %v2264, %v2555
    %v2661 = vadd.f32 %v2267, %v2558
    %v2662 = vadd.f32 %v2270, %v2561
    %v2663 = vadd.f32 %v2273, %v2564
    %v2664 = vadd.f32 %v2276, %v2567
    %v2665 = vadd.f32 %v2279, %v2570
    %v2666 = vadd.f32 %v2282, %v2573
    %v2667 = vadd.f32 %v2285, %v2576
    %v2668 = vadd.f32 %v2288, %v2579
    %v2669 = vadd.f32 %v2291, %v2582
    %v2670 = vadd.f32 %v2294, %v2585
    %v2671 = vadd.f32 %v2297, %v2588
    %v2672 = vadd.f32 %v2300, %v2591
    %v2673 = vadd.f32 %v2303, %v2594
    %v2674 = vadd.f32 %v2306, %v2597
    %v2675 = vadd.f32 %v2309, %v2600
    %v2676 = vadd.f32 %v2312, %v2603
    %v2677 = vadd.f32 %v2315, %v2606
    %v2678 = vadd.f32 %v2318, %v2609
    %v2679 = vadd.f32 %v2321, %v2612
    %v2680 = vadd.f32 %v2324, %v2615
    %v2681 = vld [vmem:[%s1551] sm:$0xff]
    %v2682 = vld [vmem:[%s1551 + $0x8] sm:$0xff]
    %v2683 = vld [vmem:[%s1551 + $0x10] sm:$0xff]
    %v2684 = vld [vmem:[%s1551 + $0x18] sm:$0xff]
    %v2685 = vld [vmem:[%s1551 + $0x20] sm:$0xff]
    %v2686 = vld [vmem:[%s1551 + $0x28] sm:$0xff]
    %v2687 = vld [vmem:[%s1551 + $0x30] sm:$0xff]
    %v2688 = vld [vmem:[%s1551 + $0x38] sm:$0xff]
    %v2689 = vld [vmem:[%s1551 + $0x40] sm:$0xff]
    %v2690 = vld [vmem:[%s1551 + $0x48] sm:$0xff]
    %v2691 = vld [vmem:[%s1551 + $0x50] sm:$0xff]
    %v2692 = vld [vmem:[%s1551 + $0x58] sm:$0xff]
    %v2693 = vld [vmem:[%s1551 + $0x60] sm:$0xff]
    %v2694 = vld [vmem:[%s1551 + $0x68] sm:$0xff]
    %v2695 = vld [vmem:[%s1551 + $0x70] sm:$0xff]
    %v2696 = vld [vmem:[%s1551 + $0x78] sm:$0xff]
    %v2697 = vld [vmem:[%s1551 + $0x80] sm:$0xff]
    %v2698 = vld [vmem:[%s1551 + $0x88] sm:$0xff]
    %v2699 = vld [vmem:[%s1551 + $0x90] sm:$0xff]
    %v2700 = vld [vmem:[%s1551 + $0x98] sm:$0xff]
    %v2701 = vld [vmem:[%s1551 + $0xa0] sm:$0xff]
    %v2702 = vld [vmem:[%s1551 + $0xa8] sm:$0xff]
    %v2703 = vld [vmem:[%s1551 + $0xb0] sm:$0xff]
    %v2704 = vld [vmem:[%s1551 + $0xb8] sm:$0xff]
    %v2705 = vld [vmem:[%s1551 + $0xc0] sm:$0xff]
    %v2706 = vld [vmem:[%s1551 + $0xc8] sm:$0xff]
    %v2707 = vld [vmem:[%s1551 + $0xd0] sm:$0xff]
    %v2708 = vld [vmem:[%s1551 + $0xd8] sm:$0xff]
    %v2709 = vld [vmem:[%s1551 + $0xe0] sm:$0xff]
    %v2710 = vld [vmem:[%s1551 + $0xe8] sm:$0xff]
    %v2711 = vld [vmem:[%s1551 + $0xf0] sm:$0xff]
    %v2712 = vld [vmem:[%s1551 + $0xf8] sm:$0xff]
    %v2713 = vld [vmem:[%s1551 + $0x120] sm:$0xff]
    %v2714 = vld [vmem:[%s1551 + $0x128] sm:$0xff]
    %v2715 = vld [vmem:[%s1551 + $0x130] sm:$0xff]
    %v2716 = vld [vmem:[%s1551 + $0x138] sm:$0xff]
    %v2717 = vld [vmem:[%s1551 + $0x140] sm:$0xff]
    %v2718 = vld [vmem:[%s1551 + $0x148] sm:$0xff]
    %v2719 = vld [vmem:[%s1551 + $0x150] sm:$0xff]
    %v2720 = vld [vmem:[%s1551 + $0x158] sm:$0xff]
    %v2721 = vld [vmem:[%s1551 + $0x160] sm:$0xff]
    %v2722 = vld [vmem:[%s1551 + $0x168] sm:$0xff]
    %v2723 = vld [vmem:[%s1551 + $0x170] sm:$0xff]
    %v2724 = vld [vmem:[%s1551 + $0x178] sm:$0xff]
    %v2725 = vld [vmem:[%s1551 + $0x180] sm:$0xff]
    %v2726 = vld [vmem:[%s1551 + $0x188] sm:$0xff]
    %v2727 = vld [vmem:[%s1551 + $0x190] sm:$0xff]
    %v2728 = vld [vmem:[%s1551 + $0x198] sm:$0xff]
    %v2729 = vld [vmem:[%s1551 + $0x1a0] sm:$0xff]
    %v2730 = vld [vmem:[%s1551 + $0x1a8] sm:$0xff]
    %v2731 = vld [vmem:[%s1551 + $0x1b0] sm:$0xff]
    %v2732 = vld [vmem:[%s1551 + $0x1b8] sm:$0xff]
    %v2733 = vld [vmem:[%s1551 + $0x1c0] sm:$0xff]
    %v2734 = vld [vmem:[%s1551 + $0x1c8] sm:$0xff]
    %v2735 = vld [vmem:[%s1551 + $0x1d0] sm:$0xff]
    %v2736 = vld [vmem:[%s1551 + $0x1d8] sm:$0xff]
    %v2737 = vld [vmem:[%s1551 + $0x1e0] sm:$0xff]
    %v2738 = vld [vmem:[%s1551 + $0x1e8] sm:$0xff]
    %v2739 = vld [vmem:[%s1551 + $0x1f0] sm:$0xff]
    %v2740 = vld [vmem:[%s1551 + $0x1f8] sm:$0xff]
    %v2741 = vld [vmem:[%s1551 + $0x200] sm:$0xff]
    %v2742 = vld [vmem:[%s1551 + $0x208] sm:$0xff]
    %v2743 = vld [vmem:[%s1551 + $0x210] sm:$0xff]
    %v2744 = vld [vmem:[%s1551 + $0x218] sm:$0xff]
    %s2745 = scalar_lea.vmem [#allocation8], 384
    %v2746 = vld [vmem:[%s2745] sm:$0xff]
    %v2747 = vld [vmem:[%s2745 + $0x8] sm:$0xff]
    %v2748 = vld [vmem:[%s2745 + $0x10] sm:$0xff]
    %v2749 = vld [vmem:[%s2745 + $0x18] sm:$0xff]
    %v2750 = vld [vmem:[%s2745 + $0x20] sm:$0xff]
    %v2751 = vld [vmem:[%s2745 + $0x28] sm:$0xff]
    %v2752 = vld [vmem:[%s2745 + $0x30] sm:$0xff]
    %v2753 = vld [vmem:[%s2745 + $0x38] sm:$0xff]
    %v2754 = vld [vmem:[%s2745 + $0x40] sm:$0xff]
    %v2755 = vld [vmem:[%s2745 + $0x48] sm:$0xff]
    %v2756 = vld [vmem:[%s2745 + $0x50] sm:$0xff]
    %v2757 = vld [vmem:[%s2745 + $0x58] sm:$0xff]
    %v2758 = vld [vmem:[%s2745 + $0x60] sm:$0xff]
    %v2759 = vld [vmem:[%s2745 + $0x68] sm:$0xff]
    %v2760 = vld [vmem:[%s2745 + $0x70] sm:$0xff]
    %v2761 = vld [vmem:[%s2745 + $0x78] sm:$0xff]
    %2762 = vmatpush.msra.mxu0 %v2761
    %2763 = vmatpush.msra.mxu0 %v2760
    %2764 = vmatpush.msra.mxu0 %v2759
    %2765 = vmatpush.msra.mxu0 %v2758
    %2766 = vmatpush.msra.mxu0 %v2757
    %2767 = vmatpush.msra.mxu0 %v2756
    %2768 = vmatpush.msra.mxu0 %v2755
    %2769 = vmatpush.msra.mxu0 %v2754
    %2770 = vmatpush.msra.mxu0 %v2753
    %2771 = vmatpush.msra.mxu0 %v2752
    %2772 = vmatpush.msra.mxu0 %v2751
    %2773 = vmatpush.msra.mxu0 %v2750
    %2774 = vmatpush.msra.mxu0 %v2749
    %2775 = vmatpush.msra.mxu0 %v2748
    %2776 = vmatpush.msra.mxu0 %v2747
    %2777 = vmatpush.msra.mxu0 %v2746
    %2778 = vmatmul.f32.gmra.mxu0 %v2681
    %v2779 = vpop.f32.mrf.mxu0
    %v2780 = vadd.f32 0.0, %v2779
    %2781 = vmatmul.f32.gmra.mxu0 %v2682
    %v2782 = vpop.f32.mrf.mxu0
    %v2783 = vadd.f32 0.0, %v2782
    %2784 = vmatmul.f32.gmra.mxu0 %v2683
    %v2785 = vpop.f32.mrf.mxu0
    %v2786 = vadd.f32 0.0, %v2785
    %2787 = vmatmul.f32.gmra.mxu0 %v2684
    %v2788 = vpop.f32.mrf.mxu0
    %v2789 = vadd.f32 0.0, %v2788
    %2790 = vmatmul.f32.gmra.mxu0 %v2685
    %v2791 = vpop.f32.mrf.mxu0
    %v2792 = vadd.f32 0.0, %v2791
    %2793 = vmatmul.f32.gmra.mxu0 %v2686
    %v2794 = vpop.f32.mrf.mxu0
    %v2795 = vadd.f32 0.0, %v2794
    %2796 = vmatmul.f32.gmra.mxu0 %v2687
    %v2797 = vpop.f32.mrf.mxu0
    %v2798 = vadd.f32 0.0, %v2797
    %2799 = vmatmul.f32.gmra.mxu0 %v2688
    %v2800 = vpop.f32.mrf.mxu0
    %v2801 = vadd.f32 0.0, %v2800
    %2802 = vmatmul.f32.gmra.mxu0 %v2689
    %v2803 = vpop.f32.mrf.mxu0
    %v2804 = vadd.f32 0.0, %v2803
    %2805 = vmatmul.f32.gmra.mxu0 %v2690
    %v2806 = vpop.f32.mrf.mxu0
    %v2807 = vadd.f32 0.0, %v2806
    %2808 = vmatmul.f32.gmra.mxu0 %v2691
    %v2809 = vpop.f32.mrf.mxu0
    %v2810 = vadd.f32 0.0, %v2809
    %2811 = vmatmul.f32.gmra.mxu0 %v2692
    %v2812 = vpop.f32.mrf.mxu0
    %v2813 = vadd.f32 0.0, %v2812
    %2814 = vmatmul.f32.gmra.mxu0 %v2693
    %v2815 = vpop.f32.mrf.mxu0
    %v2816 = vadd.f32 0.0, %v2815
    %2817 = vmatmul.f32.gmra.mxu0 %v2694
    %v2818 = vpop.f32.mrf.mxu0
    %v2819 = vadd.f32 0.0, %v2818
    %2820 = vmatmul.f32.gmra.mxu0 %v2695
    %v2821 = vpop.f32.mrf.mxu0
    %v2822 = vadd.f32 0.0, %v2821
    %2823 = vmatmul.f32.gmra.mxu0 %v2696
    %v2824 = vpop.f32.mrf.mxu0
    %v2825 = vadd.f32 0.0, %v2824
    %2826 = vmatmul.f32.gmra.mxu0 %v2697
    %v2827 = vpop.f32.mrf.mxu0
    %v2828 = vadd.f32 0.0, %v2827
    %2829 = vmatmul.f32.gmra.mxu0 %v2698
    %v2830 = vpop.f32.mrf.mxu0
    %v2831 = vadd.f32 0.0, %v2830
    %2832 = vmatmul.f32.gmra.mxu0 %v2699
    %v2833 = vpop.f32.mrf.mxu0
    %v2834 = vadd.f32 0.0, %v2833
    %2835 = vmatmul.f32.gmra.mxu0 %v2700
    %v2836 = vpop.f32.mrf.mxu0
    %v2837 = vadd.f32 0.0, %v2836
    %2838 = vmatmul.f32.gmra.mxu0 %v2701
    %v2839 = vpop.f32.mrf.mxu0
    %v2840 = vadd.f32 0.0, %v2839
    %2841 = vmatmul.f32.gmra.mxu0 %v2702
    %v2842 = vpop.f32.mrf.mxu0
    %v2843 = vadd.f32 0.0, %v2842
    %2844 = vmatmul.f32.gmra.mxu0 %v2703
    %v2845 = vpop.f32.mrf.mxu0
    %v2846 = vadd.f32 0.0, %v2845
    %2847 = vmatmul.f32.gmra.mxu0 %v2704
    %v2848 = vpop.f32.mrf.mxu0
    %v2849 = vadd.f32 0.0, %v2848
    %2850 = vmatmul.f32.gmra.mxu0 %v2705
    %v2851 = vpop.f32.mrf.mxu0
    %v2852 = vadd.f32 0.0, %v2851
    %2853 = vmatmul.f32.gmra.mxu0 %v2706
    %v2854 = vpop.f32.mrf.mxu0
    %v2855 = vadd.f32 0.0, %v2854
    %2856 = vmatmul.f32.gmra.mxu0 %v2707
    %v2857 = vpop.f32.mrf.mxu0
    %v2858 = vadd.f32 0.0, %v2857
    %2859 = vmatmul.f32.gmra.mxu0 %v2708
    %v2860 = vpop.f32.mrf.mxu0
    %v2861 = vadd.f32 0.0, %v2860
    %2862 = vmatmul.f32.gmra.mxu0 %v2709
    %v2863 = vpop.f32.mrf.mxu0
    %v2864 = vadd.f32 0.0, %v2863
    %2865 = vmatmul.f32.gmra.mxu0 %v2710
    %v2866 = vpop.f32.mrf.mxu0
    %v2867 = vadd.f32 0.0, %v2866
    %2868 = vmatmul.f32.gmra.mxu0 %v2711
    %v2869 = vpop.f32.mrf.mxu0
    %v2870 = vadd.f32 0.0, %v2869
    %2871 = vmatmul.f32.gmra.mxu0 %v2712
    %v2872 = vpop.f32.mrf.mxu0
    %v2873 = vadd.f32 0.0, %v2872
    %2874 = vmatmul.f32.gmra.mxu0 %v2713
    %v2875 = vpop.f32.mrf.mxu0
    %v2876 = vadd.f32 0.0, %v2875
    %2877 = vmatmul.f32.gmra.mxu0 %v2714
    %v2878 = vpop.f32.mrf.mxu0
    %v2879 = vadd.f32 0.0, %v2878
    %2880 = vmatmul.f32.gmra.mxu0 %v2715
    %v2881 = vpop.f32.mrf.mxu0
    %v2882 = vadd.f32 0.0, %v2881
    %2883 = vmatmul.f32.gmra.mxu0 %v2716
    %v2884 = vpop.f32.mrf.mxu0
    %v2885 = vadd.f32 0.0, %v2884
    %2886 = vmatmul.f32.gmra.mxu0 %v2717
    %v2887 = vpop.f32.mrf.mxu0
    %v2888 = vadd.f32 0.0, %v2887
    %2889 = vmatmul.f32.gmra.mxu0 %v2718
    %v2890 = vpop.f32.mrf.mxu0
    %v2891 = vadd.f32 0.0, %v2890
    %2892 = vmatmul.f32.gmra.mxu0 %v2719
    %v2893 = vpop.f32.mrf.mxu0
    %v2894 = vadd.f32 0.0, %v2893
    %2895 = vmatmul.f32.gmra.mxu0 %v2720
    %v2896 = vpop.f32.mrf.mxu0
    %v2897 = vadd.f32 0.0, %v2896
    %2898 = vmatmul.f32.gmra.mxu0 %v2721
    %v2899 = vpop.f32.mrf.mxu0
    %v2900 = vadd.f32 0.0, %v2899
    %2901 = vmatmul.f32.gmra.mxu0 %v2722
    %v2902 = vpop.f32.mrf.mxu0
    %v2903 = vadd.f32 0.0, %v2902
    %2904 = vmatmul.f32.gmra.mxu0 %v2723
    %v2905 = vpop.f32.mrf.mxu0
    %v2906 = vadd.f32 0.0, %v2905
    %2907 = vmatmul.f32.gmra.mxu0 %v2724
    %v2908 = vpop.f32.mrf.mxu0
    %v2909 = vadd.f32 0.0, %v2908
    %2910 = vmatmul.f32.gmra.mxu0 %v2725
    %v2911 = vpop.f32.mrf.mxu0
    %v2912 = vadd.f32 0.0, %v2911
    %2913 = vmatmul.f32.gmra.mxu0 %v2726
    %v2914 = vpop.f32.mrf.mxu0
    %v2915 = vadd.f32 0.0, %v2914
    %2916 = vmatmul.f32.gmra.mxu0 %v2727
    %v2917 = vpop.f32.mrf.mxu0
    %v2918 = vadd.f32 0.0, %v2917
    %2919 = vmatmul.f32.gmra.mxu0 %v2728
    %v2920 = vpop.f32.mrf.mxu0
    %v2921 = vadd.f32 0.0, %v2920
    %2922 = vmatmul.f32.gmra.mxu0 %v2729
    %v2923 = vpop.f32.mrf.mxu0
    %v2924 = vadd.f32 0.0, %v2923
    %2925 = vmatmul.f32.gmra.mxu0 %v2730
    %v2926 = vpop.f32.mrf.mxu0
    %v2927 = vadd.f32 0.0, %v2926
    %2928 = vmatmul.f32.gmra.mxu0 %v2731
    %v2929 = vpop.f32.mrf.mxu0
    %v2930 = vadd.f32 0.0, %v2929
    %2931 = vmatmul.f32.gmra.mxu0 %v2732
    %v2932 = vpop.f32.mrf.mxu0
    %v2933 = vadd.f32 0.0, %v2932
    %2934 = vmatmul.f32.gmra.mxu0 %v2733
    %v2935 = vpop.f32.mrf.mxu0
    %v2936 = vadd.f32 0.0, %v2935
    %2937 = vmatmul.f32.gmra.mxu0 %v2734
    %v2938 = vpop.f32.mrf.mxu0
    %v2939 = vadd.f32 0.0, %v2938
    %2940 = vmatmul.f32.gmra.mxu0 %v2735
    %v2941 = vpop.f32.mrf.mxu0
    %v2942 = vadd.f32 0.0, %v2941
    %2943 = vmatmul.f32.gmra.mxu0 %v2736
    %v2944 = vpop.f32.mrf.mxu0
    %v2945 = vadd.f32 0.0, %v2944
    %2946 = vmatmul.f32.gmra.mxu0 %v2737
    %v2947 = vpop.f32.mrf.mxu0
    %v2948 = vadd.f32 0.0, %v2947
    %2949 = vmatmul.f32.gmra.mxu0 %v2738
    %v2950 = vpop.f32.mrf.mxu0
    %v2951 = vadd.f32 0.0, %v2950
    %2952 = vmatmul.f32.gmra.mxu0 %v2739
    %v2953 = vpop.f32.mrf.mxu0
    %v2954 = vadd.f32 0.0, %v2953
    %2955 = vmatmul.f32.gmra.mxu0 %v2740
    %v2956 = vpop.f32.mrf.mxu0
    %v2957 = vadd.f32 0.0, %v2956
    %2958 = vmatmul.f32.gmra.mxu0 %v2741
    %v2959 = vpop.f32.mrf.mxu0
    %v2960 = vadd.f32 0.0, %v2959
    %2961 = vmatmul.f32.gmra.mxu0 %v2742
    %v2962 = vpop.f32.mrf.mxu0
    %v2963 = vadd.f32 0.0, %v2962
    %2964 = vmatmul.f32.gmra.mxu0 %v2743
    %v2965 = vpop.f32.mrf.mxu0
    %v2966 = vadd.f32 0.0, %v2965
    %2967 = vmatmul.f32.gmra.mxu0 %v2744
    %v2968 = vpop.f32.mrf.mxu0
    %v2969 = vadd.f32 0.0, %v2968
    %2970 = vdwg.mxu0
    %v2971 = vadd.f32 %v2617, %v2780
    %v2972 = vadd.f32 %v2618, %v2783
    %v2973 = vadd.f32 %v2619, %v2786
    %v2974 = vadd.f32 %v2620, %v2789
    %v2975 = vadd.f32 %v2621, %v2792
    %v2976 = vadd.f32 %v2622, %v2795
    %v2977 = vadd.f32 %v2623, %v2798
    %v2978 = vadd.f32 %v2624, %v2801
    %v2979 = vadd.f32 %v2625, %v2804
    %v2980 = vadd.f32 %v2626, %v2807
    %v2981 = vadd.f32 %v2627, %v2810
    %v2982 = vadd.f32 %v2628, %v2813
    %v2983 = vadd.f32 %v2629, %v2816
    %v2984 = vadd.f32 %v2630, %v2819
    %v2985 = vadd.f32 %v2631, %v2822
    %v2986 = vadd.f32 %v2632, %v2825
    %v2987 = vadd.f32 %v2633, %v2828
    %v2988 = vadd.f32 %v2634, %v2831
    %v2989 = vadd.f32 %v2635, %v2834
    %v2990 = vadd.f32 %v2636, %v2837
    %v2991 = vadd.f32 %v2637, %v2840
    %v2992 = vadd.f32 %v2638, %v2843
    %v2993 = vadd.f32 %v2639, %v2846
    %v2994 = vadd.f32 %v2640, %v2849
    %v2995 = vadd.f32 %v2641, %v2852
    %v2996 = vadd.f32 %v2642, %v2855
    %v2997 = vadd.f32 %v2643, %v2858
    %v2998 = vadd.f32 %v2644, %v2861
    %v2999 = vadd.f32 %v2645, %v2864
    %v3000 = vadd.f32 %v2646, %v2867
    %v3001 = vadd.f32 %v2647, %v2870
    %v3002 = vadd.f32 %v2648, %v2873
    %v3003 = vadd.f32 %v2649, %v2876
    %v3004 = vadd.f32 %v2650, %v2879
    %v3005 = vadd.f32 %v2651, %v2882
    %v3006 = vadd.f32 %v2652, %v2885
    %v3007 = vadd.f32 %v2653, %v2888
    %v3008 = vadd.f32 %v2654, %v2891
    %v3009 = vadd.f32 %v2655, %v2894
    %v3010 = vadd.f32 %v2656, %v2897
    %v3011 = vadd.f32 %v2657, %v2900
    %v3012 = vadd.f32 %v2658, %v2903
    %v3013 = vadd.f32 %v2659, %v2906
    %v3014 = vadd.f32 %v2660, %v2909
    %v3015 = vadd.f32 %v2661, %v2912
    %v3016 = vadd.f32 %v2662, %v2915
    %v3017 = vadd.f32 %v2663, %v2918
    %v3018 = vadd.f32 %v2664, %v2921
    %v3019 = vadd.f32 %v2665, %v2924
    %v3020 = vadd.f32 %v2666, %v2927
    %v3021 = vadd.f32 %v2667, %v2930
    %v3022 = vadd.f32 %v2668, %v2933
    %v3023 = vadd.f32 %v2669, %v2936
    %v3024 = vadd.f32 %v2670, %v2939
    %v3025 = vadd.f32 %v2671, %v2942
    %v3026 = vadd.f32 %v2672, %v2945
    %v3027 = vadd.f32 %v2673, %v2948
    %v3028 = vadd.f32 %v2674, %v2951
    %v3029 = vadd.f32 %v2675, %v2954
    %v3030 = vadd.f32 %v2676, %v2957
    %v3031 = vadd.f32 %v2677, %v2960
    %v3032 = vadd.f32 %v2678, %v2963
    %v3033 = vadd.f32 %v2679, %v2966
    %v3034 = vadd.f32 %v2680, %v2969
    %v3035 = vld [vmem:[%s1616] sm:$0xff]
    %v3036 = vld [vmem:[%s1616 + $0x8] sm:$0xff]
    %v3037 = vld [vmem:[%s1616 + $0x10] sm:$0xff]
    %v3038 = vld [vmem:[%s1616 + $0x18] sm:$0xff]
    %v3039 = vld [vmem:[%s1616 + $0x20] sm:$0xff]
    %v3040 = vld [vmem:[%s1616 + $0x28] sm:$0xff]
    %v3041 = vld [vmem:[%s1616 + $0x30] sm:$0xff]
    %v3042 = vld [vmem:[%s1616 + $0x38] sm:$0xff]
    %v3043 = vld [vmem:[%s1616 + $0x40] sm:$0xff]
    %v3044 = vld [vmem:[%s1616 + $0x48] sm:$0xff]
    %v3045 = vld [vmem:[%s1616 + $0x50] sm:$0xff]
    %v3046 = vld [vmem:[%s1616 + $0x58] sm:$0xff]
    %v3047 = vld [vmem:[%s1616 + $0x60] sm:$0xff]
    %v3048 = vld [vmem:[%s1616 + $0x68] sm:$0xff]
    %v3049 = vld [vmem:[%s1616 + $0x70] sm:$0xff]
    %v3050 = vld [vmem:[%s1616 + $0x78] sm:$0xff]
    %v3051 = vld [vmem:[%s1616 + $0x80] sm:$0xff]
    %v3052 = vld [vmem:[%s1616 + $0x88] sm:$0xff]
    %v3053 = vld [vmem:[%s1616 + $0x90] sm:$0xff]
    %v3054 = vld [vmem:[%s1616 + $0x98] sm:$0xff]
    %v3055 = vld [vmem:[%s1616 + $0xa0] sm:$0xff]
    %v3056 = vld [vmem:[%s1616 + $0xa8] sm:$0xff]
    %v3057 = vld [vmem:[%s1616 + $0xb0] sm:$0xff]
    %v3058 = vld [vmem:[%s1616 + $0xb8] sm:$0xff]
    %v3059 = vld [vmem:[%s1616 + $0xc0] sm:$0xff]
    %v3060 = vld [vmem:[%s1616 + $0xc8] sm:$0xff]
    %v3061 = vld [vmem:[%s1616 + $0xd0] sm:$0xff]
    %v3062 = vld [vmem:[%s1616 + $0xd8] sm:$0xff]
    %v3063 = vld [vmem:[%s1616 + $0xe0] sm:$0xff]
    %v3064 = vld [vmem:[%s1616 + $0xe8] sm:$0xff]
    %v3065 = vld [vmem:[%s1616 + $0xf0] sm:$0xff]
    %v3066 = vld [vmem:[%s1616 + $0xf8] sm:$0xff]
    %v3067 = vld [vmem:[%s1616 + $0x120] sm:$0xff]
    %v3068 = vld [vmem:[%s1616 + $0x128] sm:$0xff]
    %v3069 = vld [vmem:[%s1616 + $0x130] sm:$0xff]
    %v3070 = vld [vmem:[%s1616 + $0x138] sm:$0xff]
    %v3071 = vld [vmem:[%s1616 + $0x140] sm:$0xff]
    %v3072 = vld [vmem:[%s1616 + $0x148] sm:$0xff]
    %v3073 = vld [vmem:[%s1616 + $0x150] sm:$0xff]
    %v3074 = vld [vmem:[%s1616 + $0x158] sm:$0xff]
    %v3075 = vld [vmem:[%s1616 + $0x160] sm:$0xff]
    %v3076 = vld [vmem:[%s1616 + $0x168] sm:$0xff]
    %v3077 = vld [vmem:[%s1616 + $0x170] sm:$0xff]
    %v3078 = vld [vmem:[%s1616 + $0x178] sm:$0xff]
    %v3079 = vld [vmem:[%s1616 + $0x180] sm:$0xff]
    %v3080 = vld [vmem:[%s1616 + $0x188] sm:$0xff]
    %v3081 = vld [vmem:[%s1616 + $0x190] sm:$0xff]
    %v3082 = vld [vmem:[%s1616 + $0x198] sm:$0xff]
    %v3083 = vld [vmem:[%s1616 + $0x1a0] sm:$0xff]
    %v3084 = vld [vmem:[%s1616 + $0x1a8] sm:$0xff]
    %v3085 = vld [vmem:[%s1616 + $0x1b0] sm:$0xff]
    %v3086 = vld [vmem:[%s1616 + $0x1b8] sm:$0xff]
    %v3087 = vld [vmem:[%s1616 + $0x1c0] sm:$0xff]
    %v3088 = vld [vmem:[%s1616 + $0x1c8] sm:$0xff]
    %v3089 = vld [vmem:[%s1616 + $0x1d0] sm:$0xff]
    %v3090 = vld [vmem:[%s1616 + $0x1d8] sm:$0xff]
    %v3091 = vld [vmem:[%s1616 + $0x1e0] sm:$0xff]
    %v3092 = vld [vmem:[%s1616 + $0x1e8] sm:$0xff]
    %v3093 = vld [vmem:[%s1616 + $0x1f0] sm:$0xff]
    %v3094 = vld [vmem:[%s1616 + $0x1f8] sm:$0xff]
    %v3095 = vld [vmem:[%s1616 + $0x200] sm:$0xff]
    %v3096 = vld [vmem:[%s1616 + $0x208] sm:$0xff]
    %v3097 = vld [vmem:[%s1616 + $0x210] sm:$0xff]
    %v3098 = vld [vmem:[%s1616 + $0x218] sm:$0xff]
    %s3099 = scalar_lea.vmem [#allocation8], 512
    %v3100 = vld [vmem:[%s3099] sm:$0xff]
    %v3101 = vld [vmem:[%s3099 + $0x8] sm:$0xff]
    %v3102 = vld [vmem:[%s3099 + $0x10] sm:$0xff]
    %v3103 = vld [vmem:[%s3099 + $0x18] sm:$0xff]
    %v3104 = vld [vmem:[%s3099 + $0x20] sm:$0xff]
    %v3105 = vld [vmem:[%s3099 + $0x28] sm:$0xff]
    %v3106 = vld [vmem:[%s3099 + $0x30] sm:$0xff]
    %v3107 = vld [vmem:[%s3099 + $0x38] sm:$0xff]
    %v3108 = vld [vmem:[%s3099 + $0x40] sm:$0xff]
    %v3109 = vld [vmem:[%s3099 + $0x48] sm:$0xff]
    %v3110 = vld [vmem:[%s3099 + $0x50] sm:$0xff]
    %v3111 = vld [vmem:[%s3099 + $0x58] sm:$0xff]
    %v3112 = vld [vmem:[%s3099 + $0x60] sm:$0xff]
    %v3113 = vld [vmem:[%s3099 + $0x68] sm:$0xff]
    %v3114 = vld [vmem:[%s3099 + $0x70] sm:$0xff]
    %v3115 = vld [vmem:[%s3099 + $0x78] sm:$0xff]
    %3116 = vmatpush.msra.mxu0 %v3115
    %3117 = vmatpush.msra.mxu0 %v3114
    %3118 = vmatpush.msra.mxu0 %v3113
    %3119 = vmatpush.msra.mxu0 %v3112
    %3120 = vmatpush.msra.mxu0 %v3111
    %3121 = vmatpush.msra.mxu0 %v3110
    %3122 = vmatpush.msra.mxu0 %v3109
    %3123 = vmatpush.msra.mxu0 %v3108
    %3124 = vmatpush.msra.mxu0 %v3107
    %3125 = vmatpush.msra.mxu0 %v3106
    %3126 = vmatpush.msra.mxu0 %v3105
    %3127 = vmatpush.msra.mxu0 %v3104
    %3128 = vmatpush.msra.mxu0 %v3103
    %3129 = vmatpush.msra.mxu0 %v3102
    %3130 = vmatpush.msra.mxu0 %v3101
    %3131 = vmatpush.msra.mxu0 %v3100
    %3132 = vmatmul.f32.gmra.mxu0 %v3035
    %v3133 = vpop.f32.mrf.mxu0
    %v3134 = vadd.f32 0.0, %v3133
    %3135 = vmatmul.f32.gmra.mxu0 %v3036
    %v3136 = vpop.f32.mrf.mxu0
    %v3137 = vadd.f32 0.0, %v3136
    %3138 = vmatmul.f32.gmra.mxu0 %v3037
    %v3139 = vpop.f32.mrf.mxu0
    %v3140 = vadd.f32 0.0, %v3139
    %3141 = vmatmul.f32.gmra.mxu0 %v3038
    %v3142 = vpop.f32.mrf.mxu0
    %v3143 = vadd.f32 0.0, %v3142
    %3144 = vmatmul.f32.gmra.mxu0 %v3039
    %v3145 = vpop.f32.mrf.mxu0
    %v3146 = vadd.f32 0.0, %v3145
    %3147 = vmatmul.f32.gmra.mxu0 %v3040
    %v3148 = vpop.f32.mrf.mxu0
    %v3149 = vadd.f32 0.0, %v3148
    %3150 = vmatmul.f32.gmra.mxu0 %v3041
    %v3151 = vpop.f32.mrf.mxu0
    %v3152 = vadd.f32 0.0, %v3151
    %3153 = vmatmul.f32.gmra.mxu0 %v3042
    %v3154 = vpop.f32.mrf.mxu0
    %v3155 = vadd.f32 0.0, %v3154
    %3156 = vmatmul.f32.gmra.mxu0 %v3043
    %v3157 = vpop.f32.mrf.mxu0
    %v3158 = vadd.f32 0.0, %v3157
    %3159 = vmatmul.f32.gmra.mxu0 %v3044
    %v3160 = vpop.f32.mrf.mxu0
    %v3161 = vadd.f32 0.0, %v3160
    %3162 = vmatmul.f32.gmra.mxu0 %v3045
    %v3163 = vpop.f32.mrf.mxu0
    %v3164 = vadd.f32 0.0, %v3163
    %3165 = vmatmul.f32.gmra.mxu0 %v3046
    %v3166 = vpop.f32.mrf.mxu0
    %v3167 = vadd.f32 0.0, %v3166
    %3168 = vmatmul.f32.gmra.mxu0 %v3047
    %v3169 = vpop.f32.mrf.mxu0
    %v3170 = vadd.f32 0.0, %v3169
    %3171 = vmatmul.f32.gmra.mxu0 %v3048
    %v3172 = vpop.f32.mrf.mxu0
    %v3173 = vadd.f32 0.0, %v3172
    %3174 = vmatmul.f32.gmra.mxu0 %v3049
    %v3175 = vpop.f32.mrf.mxu0
    %v3176 = vadd.f32 0.0, %v3175
    %3177 = vmatmul.f32.gmra.mxu0 %v3050
    %v3178 = vpop.f32.mrf.mxu0
    %v3179 = vadd.f32 0.0, %v3178
    %3180 = vmatmul.f32.gmra.mxu0 %v3051
    %v3181 = vpop.f32.mrf.mxu0
    %v3182 = vadd.f32 0.0, %v3181
    %3183 = vmatmul.f32.gmra.mxu0 %v3052
    %v3184 = vpop.f32.mrf.mxu0
    %v3185 = vadd.f32 0.0, %v3184
    %3186 = vmatmul.f32.gmra.mxu0 %v3053
    %v3187 = vpop.f32.mrf.mxu0
    %v3188 = vadd.f32 0.0, %v3187
    %3189 = vmatmul.f32.gmra.mxu0 %v3054
    %v3190 = vpop.f32.mrf.mxu0
    %v3191 = vadd.f32 0.0, %v3190
    %3192 = vmatmul.f32.gmra.mxu0 %v3055
    %v3193 = vpop.f32.mrf.mxu0
    %v3194 = vadd.f32 0.0, %v3193
    %3195 = vmatmul.f32.gmra.mxu0 %v3056
    %v3196 = vpop.f32.mrf.mxu0
    %v3197 = vadd.f32 0.0, %v3196
    %3198 = vmatmul.f32.gmra.mxu0 %v3057
    %v3199 = vpop.f32.mrf.mxu0
    %v3200 = vadd.f32 0.0, %v3199
    %3201 = vmatmul.f32.gmra.mxu0 %v3058
    %v3202 = vpop.f32.mrf.mxu0
    %v3203 = vadd.f32 0.0, %v3202
    %3204 = vmatmul.f32.gmra.mxu0 %v3059
    %v3205 = vpop.f32.mrf.mxu0
    %v3206 = vadd.f32 0.0, %v3205
    %3207 = vmatmul.f32.gmra.mxu0 %v3060
    %v3208 = vpop.f32.mrf.mxu0
    %v3209 = vadd.f32 0.0, %v3208
    %3210 = vmatmul.f32.gmra.mxu0 %v3061
    %v3211 = vpop.f32.mrf.mxu0
    %v3212 = vadd.f32 0.0, %v3211
    %3213 = vmatmul.f32.gmra.mxu0 %v3062
    %v3214 = vpop.f32.mrf.mxu0
    %v3215 = vadd.f32 0.0, %v3214
    %3216 = vmatmul.f32.gmra.mxu0 %v3063
    %v3217 = vpop.f32.mrf.mxu0
    %v3218 = vadd.f32 0.0, %v3217
    %3219 = vmatmul.f32.gmra.mxu0 %v3064
    %v3220 = vpop.f32.mrf.mxu0
    %v3221 = vadd.f32 0.0, %v3220
    %3222 = vmatmul.f32.gmra.mxu0 %v3065
    %v3223 = vpop.f32.mrf.mxu0
    %v3224 = vadd.f32 0.0, %v3223
    %3225 = vmatmul.f32.gmra.mxu0 %v3066
    %v3226 = vpop.f32.mrf.mxu0
    %v3227 = vadd.f32 0.0, %v3226
    %3228 = vmatmul.f32.gmra.mxu0 %v3067
    %v3229 = vpop.f32.mrf.mxu0
    %v3230 = vadd.f32 0.0, %v3229
    %3231 = vmatmul.f32.gmra.mxu0 %v3068
    %v3232 = vpop.f32.mrf.mxu0
    %v3233 = vadd.f32 0.0, %v3232
    %3234 = vmatmul.f32.gmra.mxu0 %v3069
    %v3235 = vpop.f32.mrf.mxu0
    %v3236 = vadd.f32 0.0, %v3235
    %3237 = vmatmul.f32.gmra.mxu0 %v3070
    %v3238 = vpop.f32.mrf.mxu0
    %v3239 = vadd.f32 0.0, %v3238
    %3240 = vmatmul.f32.gmra.mxu0 %v3071
    %v3241 = vpop.f32.mrf.mxu0
    %v3242 = vadd.f32 0.0, %v3241
    %3243 = vmatmul.f32.gmra.mxu0 %v3072
    %v3244 = vpop.f32.mrf.mxu0
    %v3245 = vadd.f32 0.0, %v3244
    %3246 = vmatmul.f32.gmra.mxu0 %v3073
    %v3247 = vpop.f32.mrf.mxu0
    %v3248 = vadd.f32 0.0, %v3247
    %3249 = vmatmul.f32.gmra.mxu0 %v3074
    %v3250 = vpop.f32.mrf.mxu0
    %v3251 = vadd.f32 0.0, %v3250
    %3252 = vmatmul.f32.gmra.mxu0 %v3075
    %v3253 = vpop.f32.mrf.mxu0
    %v3254 = vadd.f32 0.0, %v3253
    %3255 = vmatmul.f32.gmra.mxu0 %v3076
    %v3256 = vpop.f32.mrf.mxu0
    %v3257 = vadd.f32 0.0, %v3256
    %3258 = vmatmul.f32.gmra.mxu0 %v3077
    %v3259 = vpop.f32.mrf.mxu0
    %v3260 = vadd.f32 0.0, %v3259
    %3261 = vmatmul.f32.gmra.mxu0 %v3078
    %v3262 = vpop.f32.mrf.mxu0
    %v3263 = vadd.f32 0.0, %v3262
    %3264 = vmatmul.f32.gmra.mxu0 %v3079
    %v3265 = vpop.f32.mrf.mxu0
    %v3266 = vadd.f32 0.0, %v3265
    %3267 = vmatmul.f32.gmra.mxu0 %v3080
    %v3268 = vpop.f32.mrf.mxu0
    %v3269 = vadd.f32 0.0, %v3268
    %3270 = vmatmul.f32.gmra.mxu0 %v3081
    %v3271 = vpop.f32.mrf.mxu0
    %v3272 = vadd.f32 0.0, %v3271
    %3273 = vmatmul.f32.gmra.mxu0 %v3082
    %v3274 = vpop.f32.mrf.mxu0
    %v3275 = vadd.f32 0.0, %v3274
    %3276 = vmatmul.f32.gmra.mxu0 %v3083
    %v3277 = vpop.f32.mrf.mxu0
    %v3278 = vadd.f32 0.0, %v3277
    %3279 = vmatmul.f32.gmra.mxu0 %v3084
    %v3280 = vpop.f32.mrf.mxu0
    %v3281 = vadd.f32 0.0, %v3280
    %3282 = vmatmul.f32.gmra.mxu0 %v3085
    %v3283 = vpop.f32.mrf.mxu0
    %v3284 = vadd.f32 0.0, %v3283
    %3285 = vmatmul.f32.gmra.mxu0 %v3086
    %v3286 = vpop.f32.mrf.mxu0
    %v3287 = vadd.f32 0.0, %v3286
    %3288 = vmatmul.f32.gmra.mxu0 %v3087
    %v3289 = vpop.f32.mrf.mxu0
    %v3290 = vadd.f32 0.0, %v3289
    %3291 = vmatmul.f32.gmra.mxu0 %v3088
    %v3292 = vpop.f32.mrf.mxu0
    %v3293 = vadd.f32 0.0, %v3292
    %3294 = vmatmul.f32.gmra.mxu0 %v3089
    %v3295 = vpop.f32.mrf.mxu0
    %v3296 = vadd.f32 0.0, %v3295
    %3297 = vmatmul.f32.gmra.mxu0 %v3090
    %v3298 = vpop.f32.mrf.mxu0
    %v3299 = vadd.f32 0.0, %v3298
    %3300 = vmatmul.f32.gmra.mxu0 %v3091
    %v3301 = vpop.f32.mrf.mxu0
    %v3302 = vadd.f32 0.0, %v3301
    %3303 = vmatmul.f32.gmra.mxu0 %v3092
    %v3304 = vpop.f32.mrf.mxu0
    %v3305 = vadd.f32 0.0, %v3304
    %3306 = vmatmul.f32.gmra.mxu0 %v3093
    %v3307 = vpop.f32.mrf.mxu0
    %v3308 = vadd.f32 0.0, %v3307
    %3309 = vmatmul.f32.gmra.mxu0 %v3094
    %v3310 = vpop.f32.mrf.mxu0
    %v3311 = vadd.f32 0.0, %v3310
    %3312 = vmatmul.f32.gmra.mxu0 %v3095
    %v3313 = vpop.f32.mrf.mxu0
    %v3314 = vadd.f32 0.0, %v3313
    %3315 = vmatmul.f32.gmra.mxu0 %v3096
    %v3316 = vpop.f32.mrf.mxu0
    %v3317 = vadd.f32 0.0, %v3316
    %3318 = vmatmul.f32.gmra.mxu0 %v3097
    %v3319 = vpop.f32.mrf.mxu0
    %v3320 = vadd.f32 0.0, %v3319
    %3321 = vmatmul.f32.gmra.mxu0 %v3098
    %v3322 = vpop.f32.mrf.mxu0
    %v3323 = vadd.f32 0.0, %v3322
    %3324 = vdwg.mxu0
    %v3325 = vadd.f32 %v2971, %v3134
    %v3326 = vadd.f32 %v2972, %v3137
    %v3327 = vadd.f32 %v2973, %v3140
    %v3328 = vadd.f32 %v2974, %v3143
    %v3329 = vadd.f32 %v2975, %v3146
    %v3330 = vadd.f32 %v2976, %v3149
    %v3331 = vadd.f32 %v2977, %v3152
    %v3332 = vadd.f32 %v2978, %v3155
    %v3333 = vadd.f32 %v2979, %v3158
    %v3334 = vadd.f32 %v2980, %v3161
    %v3335 = vadd.f32 %v2981, %v3164
    %v3336 = vadd.f32 %v2982, %v3167
    %v3337 = vadd.f32 %v2983, %v3170
    %v3338 = vadd.f32 %v2984, %v3173
    %v3339 = vadd.f32 %v2985, %v3176
    %v3340 = vadd.f32 %v2986, %v3179
    %v3341 = vadd.f32 %v2987, %v3182
    %v3342 = vadd.f32 %v2988, %v3185
    %v3343 = vadd.f32 %v2989, %v3188
    %v3344 = vadd.f32 %v2990, %v3191
    %v3345 = vadd.f32 %v2991, %v3194
    %v3346 = vadd.f32 %v2992, %v3197
    %v3347 = vadd.f32 %v2993, %v3200
    %v3348 = vadd.f32 %v2994, %v3203
    %v3349 = vadd.f32 %v2995, %v3206
    %v3350 = vadd.f32 %v2996, %v3209
    %v3351 = vadd.f32 %v2997, %v3212
    %v3352 = vadd.f32 %v2998, %v3215
    %v3353 = vadd.f32 %v2999, %v3218
    %v3354 = vadd.f32 %v3000, %v3221
    %v3355 = vadd.f32 %v3001, %v3224
    %v3356 = vadd.f32 %v3002, %v3227
    %v3357 = vadd.f32 %v3003, %v3230
    %v3358 = vadd.f32 %v3004, %v3233
    %v3359 = vadd.f32 %v3005, %v3236
    %v3360 = vadd.f32 %v3006, %v3239
    %v3361 = vadd.f32 %v3007, %v3242
    %v3362 = vadd.f32 %v3008, %v3245
    %v3363 = vadd.f32 %v3009, %v3248
    %v3364 = vadd.f32 %v3010, %v3251
    %v3365 = vadd.f32 %v3011, %v3254
    %v3366 = vadd.f32 %v3012, %v3257
    %v3367 = vadd.f32 %v3013, %v3260
    %v3368 = vadd.f32 %v3014, %v3263
    %v3369 = vadd.f32 %v3015, %v3266
    %v3370 = vadd.f32 %v3016, %v3269
    %v3371 = vadd.f32 %v3017, %v3272
    %v3372 = vadd.f32 %v3018, %v3275
    %v3373 = vadd.f32 %v3019, %v3278
    %v3374 = vadd.f32 %v3020, %v3281
    %v3375 = vadd.f32 %v3021, %v3284
    %v3376 = vadd.f32 %v3022, %v3287
    %v3377 = vadd.f32 %v3023, %v3290
    %v3378 = vadd.f32 %v3024, %v3293
    %v3379 = vadd.f32 %v3025, %v3296
    %v3380 = vadd.f32 %v3026, %v3299
    %v3381 = vadd.f32 %v3027, %v3302
    %v3382 = vadd.f32 %v3028, %v3305
    %v3383 = vadd.f32 %v3029, %v3308
    %v3384 = vadd.f32 %v3030, %v3311
    %v3385 = vadd.f32 %v3031, %v3314
    %v3386 = vadd.f32 %v3032, %v3317
    %v3387 = vadd.f32 %v3033, %v3320
    %v3388 = vadd.f32 %v3034, %v3323
    %v3389 = vld [vmem:[%s1681] sm:$0xff]
    %v3390 = vld [vmem:[%s1681 + $0x8] sm:$0xff]
    %v3391 = vld [vmem:[%s1681 + $0x10] sm:$0xff]
    %v3392 = vld [vmem:[%s1681 + $0x18] sm:$0xff]
    %v3393 = vld [vmem:[%s1681 + $0x20] sm:$0xff]
    %v3394 = vld [vmem:[%s1681 + $0x28] sm:$0xff]
    %v3395 = vld [vmem:[%s1681 + $0x30] sm:$0xff]
    %v3396 = vld [vmem:[%s1681 + $0x38] sm:$0xff]
    %v3397 = vld [vmem:[%s1681 + $0x40] sm:$0xff]
    %v3398 = vld [vmem:[%s1681 + $0x48] sm:$0xff]
    %v3399 = vld [vmem:[%s1681 + $0x50] sm:$0xff]
    %v3400 = vld [vmem:[%s1681 + $0x58] sm:$0xff]
    %v3401 = vld [vmem:[%s1681 + $0x60] sm:$0xff]
    %v3402 = vld [vmem:[%s1681 + $0x68] sm:$0xff]
    %v3403 = vld [vmem:[%s1681 + $0x70] sm:$0xff]
    %v3404 = vld [vmem:[%s1681 + $0x78] sm:$0xff]
    %v3405 = vld [vmem:[%s1681 + $0x80] sm:$0xff]
    %v3406 = vld [vmem:[%s1681 + $0x88] sm:$0xff]
    %v3407 = vld [vmem:[%s1681 + $0x90] sm:$0xff]
    %v3408 = vld [vmem:[%s1681 + $0x98] sm:$0xff]
    %v3409 = vld [vmem:[%s1681 + $0xa0] sm:$0xff]
    %v3410 = vld [vmem:[%s1681 + $0xa8] sm:$0xff]
    %v3411 = vld [vmem:[%s1681 + $0xb0] sm:$0xff]
    %v3412 = vld [vmem:[%s1681 + $0xb8] sm:$0xff]
    %v3413 = vld [vmem:[%s1681 + $0xc0] sm:$0xff]
    %v3414 = vld [vmem:[%s1681 + $0xc8] sm:$0xff]
    %v3415 = vld [vmem:[%s1681 + $0xd0] sm:$0xff]
    %v3416 = vld [vmem:[%s1681 + $0xd8] sm:$0xff]
    %v3417 = vld [vmem:[%s1681 + $0xe0] sm:$0xff]
    %v3418 = vld [vmem:[%s1681 + $0xe8] sm:$0xff]
    %v3419 = vld [vmem:[%s1681 + $0xf0] sm:$0xff]
    %v3420 = vld [vmem:[%s1681 + $0xf8] sm:$0xff]
    %v3421 = vld [vmem:[%s1681 + $0x120] sm:$0xff]
    %v3422 = vld [vmem:[%s1681 + $0x128] sm:$0xff]
    %v3423 = vld [vmem:[%s1681 + $0x130] sm:$0xff]
    %v3424 = vld [vmem:[%s1681 + $0x138] sm:$0xff]
    %v3425 = vld [vmem:[%s1681 + $0x140] sm:$0xff]
    %v3426 = vld [vmem:[%s1681 + $0x148] sm:$0xff]
    %v3427 = vld [vmem:[%s1681 + $0x150] sm:$0xff]
    %v3428 = vld [vmem:[%s1681 + $0x158] sm:$0xff]
    %v3429 = vld [vmem:[%s1681 + $0x160] sm:$0xff]
    %v3430 = vld [vmem:[%s1681 + $0x168] sm:$0xff]
    %v3431 = vld [vmem:[%s1681 + $0x170] sm:$0xff]
    %v3432 = vld [vmem:[%s1681 + $0x178] sm:$0xff]
    %v3433 = vld [vmem:[%s1681 + $0x180] sm:$0xff]
    %v3434 = vld [vmem:[%s1681 + $0x188] sm:$0xff]
    %v3435 = vld [vmem:[%s1681 + $0x190] sm:$0xff]
    %v3436 = vld [vmem:[%s1681 + $0x198] sm:$0xff]
    %v3437 = vld [vmem:[%s1681 + $0x1a0] sm:$0xff]
    %v3438 = vld [vmem:[%s1681 + $0x1a8] sm:$0xff]
    %v3439 = vld [vmem:[%s1681 + $0x1b0] sm:$0xff]
    %v3440 = vld [vmem:[%s1681 + $0x1b8] sm:$0xff]
    %v3441 = vld [vmem:[%s1681 + $0x1c0] sm:$0xff]
    %v3442 = vld [vmem:[%s1681 + $0x1c8] sm:$0xff]
    %v3443 = vld [vmem:[%s1681 + $0x1d0] sm:$0xff]
    %v3444 = vld [vmem:[%s1681 + $0x1d8] sm:$0xff]
    %v3445 = vld [vmem:[%s1681 + $0x1e0] sm:$0xff]
    %v3446 = vld [vmem:[%s1681 + $0x1e8] sm:$0xff]
    %v3447 = vld [vmem:[%s1681 + $0x1f0] sm:$0xff]
    %v3448 = vld [vmem:[%s1681 + $0x1f8] sm:$0xff]
    %v3449 = vld [vmem:[%s1681 + $0x200] sm:$0xff]
    %v3450 = vld [vmem:[%s1681 + $0x208] sm:$0xff]
    %v3451 = vld [vmem:[%s1681 + $0x210] sm:$0xff]
    %v3452 = vld [vmem:[%s1681 + $0x218] sm:$0xff]
    %s3453 = scalar_lea.vmem [#allocation8], 640
    %v3454 = vld [vmem:[%s3453] sm:$0xff]
    %v3455 = vld [vmem:[%s3453 + $0x8] sm:$0xff]
    %v3456 = vld [vmem:[%s3453 + $0x10] sm:$0xff]
    %v3457 = vld [vmem:[%s3453 + $0x18] sm:$0xff]
    %v3458 = vld [vmem:[%s3453 + $0x20] sm:$0xff]
    %v3459 = vld [vmem:[%s3453 + $0x28] sm:$0xff]
    %v3460 = vld [vmem:[%s3453 + $0x30] sm:$0xff]
    %v3461 = vld [vmem:[%s3453 + $0x38] sm:$0xff]
    %v3462 = vld [vmem:[%s3453 + $0x40] sm:$0xff]
    %v3463 = vld [vmem:[%s3453 + $0x48] sm:$0xff]
    %v3464 = vld [vmem:[%s3453 + $0x50] sm:$0xff]
    %v3465 = vld [vmem:[%s3453 + $0x58] sm:$0xff]
    %v3466 = vld [vmem:[%s3453 + $0x60] sm:$0xff]
    %v3467 = vld [vmem:[%s3453 + $0x68] sm:$0xff]
    %v3468 = vld [vmem:[%s3453 + $0x70] sm:$0xff]
    %v3469 = vld [vmem:[%s3453 + $0x78] sm:$0xff]
    %3470 = vmatpush.msra.mxu0 %v3469
    %3471 = vmatpush.msra.mxu0 %v3468
    %3472 = vmatpush.msra.mxu0 %v3467
    %3473 = vmatpush.msra.mxu0 %v3466
    %3474 = vmatpush.msra.mxu0 %v3465
    %3475 = vmatpush.msra.mxu0 %v3464
    %3476 = vmatpush.msra.mxu0 %v3463
    %3477 = vmatpush.msra.mxu0 %v3462
    %3478 = vmatpush.msra.mxu0 %v3461
    %3479 = vmatpush.msra.mxu0 %v3460
    %3480 = vmatpush.msra.mxu0 %v3459
    %3481 = vmatpush.msra.mxu0 %v3458
    %3482 = vmatpush.msra.mxu0 %v3457
    %3483 = vmatpush.msra.mxu0 %v3456
    %3484 = vmatpush.msra.mxu0 %v3455
    %3485 = vmatpush.msra.mxu0 %v3454
    %3486 = vmatmul.f32.gmra.mxu0 %v3389
    %v3487 = vpop.f32.mrf.mxu0
    %v3488 = vadd.f32 0.0, %v3487
    %3489 = vmatmul.f32.gmra.mxu0 %v3390
    %v3490 = vpop.f32.mrf.mxu0
    %v3491 = vadd.f32 0.0, %v3490
    %3492 = vmatmul.f32.gmra.mxu0 %v3391
    %v3493 = vpop.f32.mrf.mxu0
    %v3494 = vadd.f32 0.0, %v3493
    %3495 = vmatmul.f32.gmra.mxu0 %v3392
    %v3496 = vpop.f32.mrf.mxu0
    %v3497 = vadd.f32 0.0, %v3496
    %3498 = vmatmul.f32.gmra.mxu0 %v3393
    %v3499 = vpop.f32.mrf.mxu0
    %v3500 = vadd.f32 0.0, %v3499
    %3501 = vmatmul.f32.gmra.mxu0 %v3394
    %v3502 = vpop.f32.mrf.mxu0
    %v3503 = vadd.f32 0.0, %v3502
    %3504 = vmatmul.f32.gmra.mxu0 %v3395
    %v3505 = vpop.f32.mrf.mxu0
    %v3506 = vadd.f32 0.0, %v3505
    %3507 = vmatmul.f32.gmra.mxu0 %v3396
    %v3508 = vpop.f32.mrf.mxu0
    %v3509 = vadd.f32 0.0, %v3508
    %3510 = vmatmul.f32.gmra.mxu0 %v3397
    %v3511 = vpop.f32.mrf.mxu0
    %v3512 = vadd.f32 0.0, %v3511
    %3513 = vmatmul.f32.gmra.mxu0 %v3398
    %v3514 = vpop.f32.mrf.mxu0
    %v3515 = vadd.f32 0.0, %v3514
    %3516 = vmatmul.f32.gmra.mxu0 %v3399
    %v3517 = vpop.f32.mrf.mxu0
    %v3518 = vadd.f32 0.0, %v3517
    %3519 = vmatmul.f32.gmra.mxu0 %v3400
    %v3520 = vpop.f32.mrf.mxu0
    %v3521 = vadd.f32 0.0, %v3520
    %3522 = vmatmul.f32.gmra.mxu0 %v3401
    %v3523 = vpop.f32.mrf.mxu0
    %v3524 = vadd.f32 0.0, %v3523
    %3525 = vmatmul.f32.gmra.mxu0 %v3402
    %v3526 = vpop.f32.mrf.mxu0
    %v3527 = vadd.f32 0.0, %v3526
    %3528 = vmatmul.f32.gmra.mxu0 %v3403
    %v3529 = vpop.f32.mrf.mxu0
    %v3530 = vadd.f32 0.0, %v3529
    %3531 = vmatmul.f32.gmra.mxu0 %v3404
    %v3532 = vpop.f32.mrf.mxu0
    %v3533 = vadd.f32 0.0, %v3532
    %3534 = vmatmul.f32.gmra.mxu0 %v3405
    %v3535 = vpop.f32.mrf.mxu0
    %v3536 = vadd.f32 0.0, %v3535
    %3537 = vmatmul.f32.gmra.mxu0 %v3406
    %v3538 = vpop.f32.mrf.mxu0
    %v3539 = vadd.f32 0.0, %v3538
    %3540 = vmatmul.f32.gmra.mxu0 %v3407
    %v3541 = vpop.f32.mrf.mxu0
    %v3542 = vadd.f32 0.0, %v3541
    %3543 = vmatmul.f32.gmra.mxu0 %v3408
    %v3544 = vpop.f32.mrf.mxu0
    %v3545 = vadd.f32 0.0, %v3544
    %3546 = vmatmul.f32.gmra.mxu0 %v3409
    %v3547 = vpop.f32.mrf.mxu0
    %v3548 = vadd.f32 0.0, %v3547
    %3549 = vmatmul.f32.gmra.mxu0 %v3410
    %v3550 = vpop.f32.mrf.mxu0
    %v3551 = vadd.f32 0.0, %v3550
    %3552 = vmatmul.f32.gmra.mxu0 %v3411
    %v3553 = vpop.f32.mrf.mxu0
    %v3554 = vadd.f32 0.0, %v3553
    %3555 = vmatmul.f32.gmra.mxu0 %v3412
    %v3556 = vpop.f32.mrf.mxu0
    %v3557 = vadd.f32 0.0, %v3556
    %3558 = vmatmul.f32.gmra.mxu0 %v3413
    %v3559 = vpop.f32.mrf.mxu0
    %v3560 = vadd.f32 0.0, %v3559
    %3561 = vmatmul.f32.gmra.mxu0 %v3414
    %v3562 = vpop.f32.mrf.mxu0
    %v3563 = vadd.f32 0.0, %v3562
    %3564 = vmatmul.f32.gmra.mxu0 %v3415
    %v3565 = vpop.f32.mrf.mxu0
    %v3566 = vadd.f32 0.0, %v3565
    %3567 = vmatmul.f32.gmra.mxu0 %v3416
    %v3568 = vpop.f32.mrf.mxu0
    %v3569 = vadd.f32 0.0, %v3568
    %3570 = vmatmul.f32.gmra.mxu0 %v3417
    %v3571 = vpop.f32.mrf.mxu0
    %v3572 = vadd.f32 0.0, %v3571
    %3573 = vmatmul.f32.gmra.mxu0 %v3418
    %v3574 = vpop.f32.mrf.mxu0
    %v3575 = vadd.f32 0.0, %v3574
    %3576 = vmatmul.f32.gmra.mxu0 %v3419
    %v3577 = vpop.f32.mrf.mxu0
    %v3578 = vadd.f32 0.0, %v3577
    %3579 = vmatmul.f32.gmra.mxu0 %v3420
    %v3580 = vpop.f32.mrf.mxu0
    %v3581 = vadd.f32 0.0, %v3580
    %3582 = vmatmul.f32.gmra.mxu0 %v3421
    %v3583 = vpop.f32.mrf.mxu0
    %v3584 = vadd.f32 0.0, %v3583
    %3585 = vmatmul.f32.gmra.mxu0 %v3422
    %v3586 = vpop.f32.mrf.mxu0
    %v3587 = vadd.f32 0.0, %v3586
    %3588 = vmatmul.f32.gmra.mxu0 %v3423
    %v3589 = vpop.f32.mrf.mxu0
    %v3590 = vadd.f32 0.0, %v3589
    %3591 = vmatmul.f32.gmra.mxu0 %v3424
    %v3592 = vpop.f32.mrf.mxu0
    %v3593 = vadd.f32 0.0, %v3592
    %3594 = vmatmul.f32.gmra.mxu0 %v3425
    %v3595 = vpop.f32.mrf.mxu0
    %v3596 = vadd.f32 0.0, %v3595
    %3597 = vmatmul.f32.gmra.mxu0 %v3426
    %v3598 = vpop.f32.mrf.mxu0
    %v3599 = vadd.f32 0.0, %v3598
    %3600 = vmatmul.f32.gmra.mxu0 %v3427
    %v3601 = vpop.f32.mrf.mxu0
    %v3602 = vadd.f32 0.0, %v3601
    %3603 = vmatmul.f32.gmra.mxu0 %v3428
    %v3604 = vpop.f32.mrf.mxu0
    %v3605 = vadd.f32 0.0, %v3604
    %3606 = vmatmul.f32.gmra.mxu0 %v3429
    %v3607 = vpop.f32.mrf.mxu0
    %v3608 = vadd.f32 0.0, %v3607
    %3609 = vmatmul.f32.gmra.mxu0 %v3430
    %v3610 = vpop.f32.mrf.mxu0
    %v3611 = vadd.f32 0.0, %v3610
    %3612 = vmatmul.f32.gmra.mxu0 %v3431
    %v3613 = vpop.f32.mrf.mxu0
    %v3614 = vadd.f32 0.0, %v3613
    %3615 = vmatmul.f32.gmra.mxu0 %v3432
    %v3616 = vpop.f32.mrf.mxu0
    %v3617 = vadd.f32 0.0, %v3616
    %3618 = vmatmul.f32.gmra.mxu0 %v3433
    %v3619 = vpop.f32.mrf.mxu0
    %v3620 = vadd.f32 0.0, %v3619
    %3621 = vmatmul.f32.gmra.mxu0 %v3434
    %v3622 = vpop.f32.mrf.mxu0
    %v3623 = vadd.f32 0.0, %v3622
    %3624 = vmatmul.f32.gmra.mxu0 %v3435
    %v3625 = vpop.f32.mrf.mxu0
    %v3626 = vadd.f32 0.0, %v3625
    %3627 = vmatmul.f32.gmra.mxu0 %v3436
    %v3628 = vpop.f32.mrf.mxu0
    %v3629 = vadd.f32 0.0, %v3628
    %3630 = vmatmul.f32.gmra.mxu0 %v3437
    %v3631 = vpop.f32.mrf.mxu0
    %v3632 = vadd.f32 0.0, %v3631
    %3633 = vmatmul.f32.gmra.mxu0 %v3438
    %v3634 = vpop.f32.mrf.mxu0
    %v3635 = vadd.f32 0.0, %v3634
    %3636 = vmatmul.f32.gmra.mxu0 %v3439
    %v3637 = vpop.f32.mrf.mxu0
    %v3638 = vadd.f32 0.0, %v3637
    %3639 = vmatmul.f32.gmra.mxu0 %v3440
    %v3640 = vpop.f32.mrf.mxu0
    %v3641 = vadd.f32 0.0, %v3640
    %3642 = vmatmul.f32.gmra.mxu0 %v3441
    %v3643 = vpop.f32.mrf.mxu0
    %v3644 = vadd.f32 0.0, %v3643
    %3645 = vmatmul.f32.gmra.mxu0 %v3442
    %v3646 = vpop.f32.mrf.mxu0
    %v3647 = vadd.f32 0.0, %v3646
    %3648 = vmatmul.f32.gmra.mxu0 %v3443
    %v3649 = vpop.f32.mrf.mxu0
    %v3650 = vadd.f32 0.0, %v3649
    %3651 = vmatmul.f32.gmra.mxu0 %v3444
    %v3652 = vpop.f32.mrf.mxu0
    %v3653 = vadd.f32 0.0, %v3652
    %3654 = vmatmul.f32.gmra.mxu0 %v3445
    %v3655 = vpop.f32.mrf.mxu0
    %v3656 = vadd.f32 0.0, %v3655
    %3657 = vmatmul.f32.gmra.mxu0 %v3446
    %v3658 = vpop.f32.mrf.mxu0
    %v3659 = vadd.f32 0.0, %v3658
    %3660 = vmatmul.f32.gmra.mxu0 %v3447
    %v3661 = vpop.f32.mrf.mxu0
    %v3662 = vadd.f32 0.0, %v3661
    %3663 = vmatmul.f32.gmra.mxu0 %v3448
    %v3664 = vpop.f32.mrf.mxu0
    %v3665 = vadd.f32 0.0, %v3664
    %3666 = vmatmul.f32.gmra.mxu0 %v3449
    %v3667 = vpop.f32.mrf.mxu0
    %v3668 = vadd.f32 0.0, %v3667
    %3669 = vmatmul.f32.gmra.mxu0 %v3450
    %v3670 = vpop.f32.mrf.mxu0
    %v3671 = vadd.f32 0.0, %v3670
    %3672 = vmatmul.f32.gmra.mxu0 %v3451
    %v3673 = vpop.f32.mrf.mxu0
    %v3674 = vadd.f32 0.0, %v3673
    %3675 = vmatmul.f32.gmra.mxu0 %v3452
    %v3676 = vpop.f32.mrf.mxu0
    %v3677 = vadd.f32 0.0, %v3676
    %3678 = vdwg.mxu0
    %v3679 = vadd.f32 %v3325, %v3488
    %v3680 = vadd.f32 %v3326, %v3491
    %v3681 = vadd.f32 %v3327, %v3494
    %v3682 = vadd.f32 %v3328, %v3497
    %v3683 = vadd.f32 %v3329, %v3500
    %v3684 = vadd.f32 %v3330, %v3503
    %v3685 = vadd.f32 %v3331, %v3506
    %v3686 = vadd.f32 %v3332, %v3509
    %v3687 = vadd.f32 %v3333, %v3512
    %v3688 = vadd.f32 %v3334, %v3515
    %v3689 = vadd.f32 %v3335, %v3518
    %v3690 = vadd.f32 %v3336, %v3521
    %v3691 = vadd.f32 %v3337, %v3524
    %v3692 = vadd.f32 %v3338, %v3527
    %v3693 = vadd.f32 %v3339, %v3530
    %v3694 = vadd.f32 %v3340, %v3533
    %v3695 = vadd.f32 %v3341, %v3536
    %v3696 = vadd.f32 %v3342, %v3539
    %v3697 = vadd.f32 %v3343, %v3542
    %v3698 = vadd.f32 %v3344, %v3545
    %v3699 = vadd.f32 %v3345, %v3548
    %v3700 = vadd.f32 %v3346, %v3551
    %v3701 = vadd.f32 %v3347, %v3554
    %v3702 = vadd.f32 %v3348, %v3557
    %v3703 = vadd.f32 %v3349, %v3560
    %v3704 = vadd.f32 %v3350, %v3563
    %v3705 = vadd.f32 %v3351, %v3566
    %v3706 = vadd.f32 %v3352, %v3569
    %v3707 = vadd.f32 %v3353, %v3572
    %v3708 = vadd.f32 %v3354, %v3575
    %v3709 = vadd.f32 %v3355, %v3578
    %v3710 = vadd.f32 %v3356, %v3581
    %v3711 = vadd.f32 %v3357, %v3584
    %v3712 = vadd.f32 %v3358, %v3587
    %v3713 = vadd.f32 %v3359, %v3590
    %v3714 = vadd.f32 %v3360, %v3593
    %v3715 = vadd.f32 %v3361, %v3596
    %v3716 = vadd.f32 %v3362, %v3599
    %v3717 = vadd.f32 %v3363, %v3602
    %v3718 = vadd.f32 %v3364, %v3605
    %v3719 = vadd.f32 %v3365, %v3608
    %v3720 = vadd.f32 %v3366, %v3611
    %v3721 = vadd.f32 %v3367, %v3614
    %v3722 = vadd.f32 %v3368, %v3617
    %v3723 = vadd.f32 %v3369, %v3620
    %v3724 = vadd.f32 %v3370, %v3623
    %v3725 = vadd.f32 %v3371, %v3626
    %v3726 = vadd.f32 %v3372, %v3629
    %v3727 = vadd.f32 %v3373, %v3632
    %v3728 = vadd.f32 %v3374, %v3635
    %v3729 = vadd.f32 %v3375, %v3638
    %v3730 = vadd.f32 %v3376, %v3641
    %v3731 = vadd.f32 %v3377, %v3644
    %v3732 = vadd.f32 %v3378, %v3647
    %v3733 = vadd.f32 %v3379, %v3650
    %v3734 = vadd.f32 %v3380, %v3653
    %v3735 = vadd.f32 %v3381, %v3656
    %v3736 = vadd.f32 %v3382, %v3659
    %v3737 = vadd.f32 %v3383, %v3662
    %v3738 = vadd.f32 %v3384, %v3665
    %v3739 = vadd.f32 %v3385, %v3668
    %v3740 = vadd.f32 %v3386, %v3671
    %v3741 = vadd.f32 %v3387, %v3674
    %v3742 = vadd.f32 %v3388, %v3677
    %s3743 = scalar_lea.vmem [#allocation2], 32
    %v3744 = vld [vmem:[%s3743] sm:$0xff]
    %v3745 = vld [vmem:[%s3743 + $0x8] sm:$0xff]
    %v3746 = vld [vmem:[%s3743 + $0x10] sm:$0xff]
    %v3747 = vld [vmem:[%s3743 + $0x18] sm:$0xff]
    %v3748 = vld [vmem:[%s3743 + $0x20] sm:$0xff]
    %v3749 = vld [vmem:[%s3743 + $0x28] sm:$0xff]
    %v3750 = vld [vmem:[%s3743 + $0x30] sm:$0xff]
    %v3751 = vld [vmem:[%s3743 + $0x38] sm:$0xff]
    %v3752 = vld [vmem:[%s3743 + $0x40] sm:$0xff]
    %v3753 = vld [vmem:[%s3743 + $0x48] sm:$0xff]
    %v3754 = vld [vmem:[%s3743 + $0x50] sm:$0xff]
    %v3755 = vld [vmem:[%s3743 + $0x58] sm:$0xff]
    %v3756 = vld [vmem:[%s3743 + $0x60] sm:$0xff]
    %v3757 = vld [vmem:[%s3743 + $0x68] sm:$0xff]
    %v3758 = vld [vmem:[%s3743 + $0x70] sm:$0xff]
    %v3759 = vld [vmem:[%s3743 + $0x78] sm:$0xff]
    %v3760 = vld [vmem:[%s3743 + $0x80] sm:$0xff]
    %v3761 = vld [vmem:[%s3743 + $0x88] sm:$0xff]
    %v3762 = vld [vmem:[%s3743 + $0x90] sm:$0xff]
    %v3763 = vld [vmem:[%s3743 + $0x98] sm:$0xff]
    %v3764 = vld [vmem:[%s3743 + $0xa0] sm:$0xff]
    %v3765 = vld [vmem:[%s3743 + $0xa8] sm:$0xff]
    %v3766 = vld [vmem:[%s3743 + $0xb0] sm:$0xff]
    %v3767 = vld [vmem:[%s3743 + $0xb8] sm:$0xff]
    %v3768 = vld [vmem:[%s3743 + $0xc0] sm:$0xff]
    %v3769 = vld [vmem:[%s3743 + $0xc8] sm:$0xff]
    %v3770 = vld [vmem:[%s3743 + $0xd0] sm:$0xff]
    %v3771 = vld [vmem:[%s3743 + $0xd8] sm:$0xff]
    %v3772 = vld [vmem:[%s3743 + $0xe0] sm:$0xff]
    %v3773 = vld [vmem:[%s3743 + $0xe8] sm:$0xff]
    %v3774 = vld [vmem:[%s3743 + $0xf0] sm:$0xff]
    %v3775 = vld [vmem:[%s3743 + $0xf8] sm:$0xff]
    %v3776 = vld [vmem:[%s3743 + $0x120] sm:$0xff]
    %v3777 = vld [vmem:[%s3743 + $0x128] sm:$0xff]
    %v3778 = vld [vmem:[%s3743 + $0x130] sm:$0xff]
    %v3779 = vld [vmem:[%s3743 + $0x138] sm:$0xff]
    %v3780 = vld [vmem:[%s3743 + $0x140] sm:$0xff]
    %v3781 = vld [vmem:[%s3743 + $0x148] sm:$0xff]
    %v3782 = vld [vmem:[%s3743 + $0x150] sm:$0xff]
    %v3783 = vld [vmem:[%s3743 + $0x158] sm:$0xff]
    %v3784 = vld [vmem:[%s3743 + $0x160] sm:$0xff]
    %v3785 = vld [vmem:[%s3743 + $0x168] sm:$0xff]
    %v3786 = vld [vmem:[%s3743 + $0x170] sm:$0xff]
    %v3787 = vld [vmem:[%s3743 + $0x178] sm:$0xff]
    %v3788 = vld [vmem:[%s3743 + $0x180] sm:$0xff]
    %v3789 = vld [vmem:[%s3743 + $0x188] sm:$0xff]
    %v3790 = vld [vmem:[%s3743 + $0x190] sm:$0xff]
    %v3791 = vld [vmem:[%s3743 + $0x198] sm:$0xff]
    %v3792 = vld [vmem:[%s3743 + $0x1a0] sm:$0xff]
    %v3793 = vld [vmem:[%s3743 + $0x1a8] sm:$0xff]
    %v3794 = vld [vmem:[%s3743 + $0x1b0] sm:$0xff]
    %v3795 = vld [vmem:[%s3743 + $0x1b8] sm:$0xff]
    %v3796 = vld [vmem:[%s3743 + $0x1c0] sm:$0xff]
    %v3797 = vld [vmem:[%s3743 + $0x1c8] sm:$0xff]
    %v3798 = vld [vmem:[%s3743 + $0x1d0] sm:$0xff]
    %v3799 = vld [vmem:[%s3743 + $0x1d8] sm:$0xff]
    %v3800 = vld [vmem:[%s3743 + $0x1e0] sm:$0xff]
    %v3801 = vld [vmem:[%s3743 + $0x1e8] sm:$0xff]
    %v3802 = vld [vmem:[%s3743 + $0x1f0] sm:$0xff]
    %v3803 = vld [vmem:[%s3743 + $0x1f8] sm:$0xff]
    %v3804 = vld [vmem:[%s3743 + $0x200] sm:$0xff]
    %v3805 = vld [vmem:[%s3743 + $0x208] sm:$0xff]
    %v3806 = vld [vmem:[%s3743 + $0x210] sm:$0xff]
    %v3807 = vld [vmem:[%s3743 + $0x218] sm:$0xff]
    %s3808 = scalar_lea.vmem [#allocation8], 768
    %v3809 = vld [vmem:[%s3808] sm:$0xff]
    %v3810 = vld [vmem:[%s3808 + $0x8] sm:$0xff]
    %v3811 = vld [vmem:[%s3808 + $0x10] sm:$0xff]
    %v3812 = vld [vmem:[%s3808 + $0x18] sm:$0xff]
    %v3813 = vld [vmem:[%s3808 + $0x20] sm:$0xff]
    %v3814 = vld [vmem:[%s3808 + $0x28] sm:$0xff]
    %v3815 = vld [vmem:[%s3808 + $0x30] sm:$0xff]
    %v3816 = vld [vmem:[%s3808 + $0x38] sm:$0xff]
    %v3817 = vld [vmem:[%s3808 + $0x40] sm:$0xff]
    %v3818 = vld [vmem:[%s3808 + $0x48] sm:$0xff]
    %v3819 = vld [vmem:[%s3808 + $0x50] sm:$0xff]
    %v3820 = vld [vmem:[%s3808 + $0x58] sm:$0xff]
    %v3821 = vld [vmem:[%s3808 + $0x60] sm:$0xff]
    %v3822 = vld [vmem:[%s3808 + $0x68] sm:$0xff]
    %v3823 = vld [vmem:[%s3808 + $0x70] sm:$0xff]
    %v3824 = vld [vmem:[%s3808 + $0x78] sm:$0xff]
    %3825 = vmatpush.msra.mxu0 %v3824
    %3826 = vmatpush.msra.mxu0 %v3823
    %3827 = vmatpush.msra.mxu0 %v3822
    %3828 = vmatpush.msra.mxu0 %v3821
    %3829 = vmatpush.msra.mxu0 %v3820
    %3830 = vmatpush.msra.mxu0 %v3819
    %3831 = vmatpush.msra.mxu0 %v3818
    %3832 = vmatpush.msra.mxu0 %v3817
    %3833 = vmatpush.msra.mxu0 %v3816
    %3834 = vmatpush.msra.mxu0 %v3815
    %3835 = vmatpush.msra.mxu0 %v3814
    %3836 = vmatpush.msra.mxu0 %v3813
    %3837 = vmatpush.msra.mxu0 %v3812
    %3838 = vmatpush.msra.mxu0 %v3811
    %3839 = vmatpush.msra.mxu0 %v3810
    %3840 = vmatpush.msra.mxu0 %v3809
    %3841 = vmatmul.f32.gmra.mxu0 %v3744
    %v3842 = vpop.f32.mrf.mxu0
    %v3843 = vadd.f32 0.0, %v3842
    %3844 = vmatmul.f32.gmra.mxu0 %v3745
    %v3845 = vpop.f32.mrf.mxu0
    %v3846 = vadd.f32 0.0, %v3845
    %3847 = vmatmul.f32.gmra.mxu0 %v3746
    %v3848 = vpop.f32.mrf.mxu0
    %v3849 = vadd.f32 0.0, %v3848
    %3850 = vmatmul.f32.gmra.mxu0 %v3747
    %v3851 = vpop.f32.mrf.mxu0
    %v3852 = vadd.f32 0.0, %v3851
    %3853 = vmatmul.f32.gmra.mxu0 %v3748
    %v3854 = vpop.f32.mrf.mxu0
    %v3855 = vadd.f32 0.0, %v3854
    %3856 = vmatmul.f32.gmra.mxu0 %v3749
    %v3857 = vpop.f32.mrf.mxu0
    %v3858 = vadd.f32 0.0, %v3857
    %3859 = vmatmul.f32.gmra.mxu0 %v3750
    %v3860 = vpop.f32.mrf.mxu0
    %v3861 = vadd.f32 0.0, %v3860
    %3862 = vmatmul.f32.gmra.mxu0 %v3751
    %v3863 = vpop.f32.mrf.mxu0
    %v3864 = vadd.f32 0.0, %v3863
    %3865 = vmatmul.f32.gmra.mxu0 %v3752
    %v3866 = vpop.f32.mrf.mxu0
    %v3867 = vadd.f32 0.0, %v3866
    %3868 = vmatmul.f32.gmra.mxu0 %v3753
    %v3869 = vpop.f32.mrf.mxu0
    %v3870 = vadd.f32 0.0, %v3869
    %3871 = vmatmul.f32.gmra.mxu0 %v3754
    %v3872 = vpop.f32.mrf.mxu0
    %v3873 = vadd.f32 0.0, %v3872
    %3874 = vmatmul.f32.gmra.mxu0 %v3755
    %v3875 = vpop.f32.mrf.mxu0
    %v3876 = vadd.f32 0.0, %v3875
    %3877 = vmatmul.f32.gmra.mxu0 %v3756
    %v3878 = vpop.f32.mrf.mxu0
    %v3879 = vadd.f32 0.0, %v3878
    %3880 = vmatmul.f32.gmra.mxu0 %v3757
    %v3881 = vpop.f32.mrf.mxu0
    %v3882 = vadd.f32 0.0, %v3881
    %3883 = vmatmul.f32.gmra.mxu0 %v3758
    %v3884 = vpop.f32.mrf.mxu0
    %v3885 = vadd.f32 0.0, %v3884
    %3886 = vmatmul.f32.gmra.mxu0 %v3759
    %v3887 = vpop.f32.mrf.mxu0
    %v3888 = vadd.f32 0.0, %v3887
    %3889 = vmatmul.f32.gmra.mxu0 %v3760
    %v3890 = vpop.f32.mrf.mxu0
    %v3891 = vadd.f32 0.0, %v3890
    %3892 = vmatmul.f32.gmra.mxu0 %v3761
    %v3893 = vpop.f32.mrf.mxu0
    %v3894 = vadd.f32 0.0, %v3893
    %3895 = vmatmul.f32.gmra.mxu0 %v3762
    %v3896 = vpop.f32.mrf.mxu0
    %v3897 = vadd.f32 0.0, %v3896
    %3898 = vmatmul.f32.gmra.mxu0 %v3763
    %v3899 = vpop.f32.mrf.mxu0
    %v3900 = vadd.f32 0.0, %v3899
    %3901 = vmatmul.f32.gmra.mxu0 %v3764
    %v3902 = vpop.f32.mrf.mxu0
    %v3903 = vadd.f32 0.0, %v3902
    %3904 = vmatmul.f32.gmra.mxu0 %v3765
    %v3905 = vpop.f32.mrf.mxu0
    %v3906 = vadd.f32 0.0, %v3905
    %3907 = vmatmul.f32.gmra.mxu0 %v3766
    %v3908 = vpop.f32.mrf.mxu0
    %v3909 = vadd.f32 0.0, %v3908
    %3910 = vmatmul.f32.gmra.mxu0 %v3767
    %v3911 = vpop.f32.mrf.mxu0
    %v3912 = vadd.f32 0.0, %v3911
    %3913 = vmatmul.f32.gmra.mxu0 %v3768
    %v3914 = vpop.f32.mrf.mxu0
    %v3915 = vadd.f32 0.0, %v3914
    %3916 = vmatmul.f32.gmra.mxu0 %v3769
    %v3917 = vpop.f32.mrf.mxu0
    %v3918 = vadd.f32 0.0, %v3917
    %3919 = vmatmul.f32.gmra.mxu0 %v3770
    %v3920 = vpop.f32.mrf.mxu0
    %v3921 = vadd.f32 0.0, %v3920
    %3922 = vmatmul.f32.gmra.mxu0 %v3771
    %v3923 = vpop.f32.mrf.mxu0
    %v3924 = vadd.f32 0.0, %v3923
    %3925 = vmatmul.f32.gmra.mxu0 %v3772
    %v3926 = vpop.f32.mrf.mxu0
    %v3927 = vadd.f32 0.0, %v3926
    %3928 = vmatmul.f32.gmra.mxu0 %v3773
    %v3929 = vpop.f32.mrf.mxu0
    %v3930 = vadd.f32 0.0, %v3929
    %3931 = vmatmul.f32.gmra.mxu0 %v3774
    %v3932 = vpop.f32.mrf.mxu0
    %v3933 = vadd.f32 0.0, %v3932
    %3934 = vmatmul.f32.gmra.mxu0 %v3775
    %v3935 = vpop.f32.mrf.mxu0
    %v3936 = vadd.f32 0.0, %v3935
    %3937 = vmatmul.f32.gmra.mxu0 %v3776
    %v3938 = vpop.f32.mrf.mxu0
    %v3939 = vadd.f32 0.0, %v3938
    %3940 = vmatmul.f32.gmra.mxu0 %v3777
    %v3941 = vpop.f32.mrf.mxu0
    %v3942 = vadd.f32 0.0, %v3941
    %3943 = vmatmul.f32.gmra.mxu0 %v3778
    %v3944 = vpop.f32.mrf.mxu0
    %v3945 = vadd.f32 0.0, %v3944
    %3946 = vmatmul.f32.gmra.mxu0 %v3779
    %v3947 = vpop.f32.mrf.mxu0
    %v3948 = vadd.f32 0.0, %v3947
    %3949 = vmatmul.f32.gmra.mxu0 %v3780
    %v3950 = vpop.f32.mrf.mxu0
    %v3951 = vadd.f32 0.0, %v3950
    %3952 = vmatmul.f32.gmra.mxu0 %v3781
    %v3953 = vpop.f32.mrf.mxu0
    %v3954 = vadd.f32 0.0, %v3953
    %3955 = vmatmul.f32.gmra.mxu0 %v3782
    %v3956 = vpop.f32.mrf.mxu0
    %v3957 = vadd.f32 0.0, %v3956
    %3958 = vmatmul.f32.gmra.mxu0 %v3783
    %v3959 = vpop.f32.mrf.mxu0
    %v3960 = vadd.f32 0.0, %v3959
    %3961 = vmatmul.f32.gmra.mxu0 %v3784
    %v3962 = vpop.f32.mrf.mxu0
    %v3963 = vadd.f32 0.0, %v3962
    %3964 = vmatmul.f32.gmra.mxu0 %v3785
    %v3965 = vpop.f32.mrf.mxu0
    %v3966 = vadd.f32 0.0, %v3965
    %3967 = vmatmul.f32.gmra.mxu0 %v3786
    %v3968 = vpop.f32.mrf.mxu0
    %v3969 = vadd.f32 0.0, %v3968
    %3970 = vmatmul.f32.gmra.mxu0 %v3787
    %v3971 = vpop.f32.mrf.mxu0
    %v3972 = vadd.f32 0.0, %v3971
    %3973 = vmatmul.f32.gmra.mxu0 %v3788
    %v3974 = vpop.f32.mrf.mxu0
    %v3975 = vadd.f32 0.0, %v3974
    %3976 = vmatmul.f32.gmra.mxu0 %v3789
    %v3977 = vpop.f32.mrf.mxu0
    %v3978 = vadd.f32 0.0, %v3977
    %3979 = vmatmul.f32.gmra.mxu0 %v3790
    %v3980 = vpop.f32.mrf.mxu0
    %v3981 = vadd.f32 0.0, %v3980
    %3982 = vmatmul.f32.gmra.mxu0 %v3791
    %v3983 = vpop.f32.mrf.mxu0
    %v3984 = vadd.f32 0.0, %v3983
    %3985 = vmatmul.f32.gmra.mxu0 %v3792
    %v3986 = vpop.f32.mrf.mxu0
    %v3987 = vadd.f32 0.0, %v3986
    %3988 = vmatmul.f32.gmra.mxu0 %v3793
    %v3989 = vpop.f32.mrf.mxu0
    %v3990 = vadd.f32 0.0, %v3989
    %3991 = vmatmul.f32.gmra.mxu0 %v3794
    %v3992 = vpop.f32.mrf.mxu0
    %v3993 = vadd.f32 0.0, %v3992
    %3994 = vmatmul.f32.gmra.mxu0 %v3795
    %v3995 = vpop.f32.mrf.mxu0
    %v3996 = vadd.f32 0.0, %v3995
    %3997 = vmatmul.f32.gmra.mxu0 %v3796
    %v3998 = vpop.f32.mrf.mxu0
    %v3999 = vadd.f32 0.0, %v3998
    %4000 = vmatmul.f32.gmra.mxu0 %v3797
    %v4001 = vpop.f32.mrf.mxu0
    %v4002 = vadd.f32 0.0, %v4001
    %4003 = vmatmul.f32.gmra.mxu0 %v3798
    %v4004 = vpop.f32.mrf.mxu0
    %v4005 = vadd.f32 0.0, %v4004
    %4006 = vmatmul.f32.gmra.mxu0 %v3799
    %v4007 = vpop.f32.mrf.mxu0
    %v4008 = vadd.f32 0.0, %v4007
    %4009 = vmatmul.f32.gmra.mxu0 %v3800
    %v4010 = vpop.f32.mrf.mxu0
    %v4011 = vadd.f32 0.0, %v4010
    %4012 = vmatmul.f32.gmra.mxu0 %v3801
    %v4013 = vpop.f32.mrf.mxu0
    %v4014 = vadd.f32 0.0, %v4013
    %4015 = vmatmul.f32.gmra.mxu0 %v3802
    %v4016 = vpop.f32.mrf.mxu0
    %v4017 = vadd.f32 0.0, %v4016
    %4018 = vmatmul.f32.gmra.mxu0 %v3803
    %v4019 = vpop.f32.mrf.mxu0
    %v4020 = vadd.f32 0.0, %v4019
    %4021 = vmatmul.f32.gmra.mxu0 %v3804
    %v4022 = vpop.f32.mrf.mxu0
    %v4023 = vadd.f32 0.0, %v4022
    %4024 = vmatmul.f32.gmra.mxu0 %v3805
    %v4025 = vpop.f32.mrf.mxu0
    %v4026 = vadd.f32 0.0, %v4025
    %4027 = vmatmul.f32.gmra.mxu0 %v3806
    %v4028 = vpop.f32.mrf.mxu0
    %v4029 = vadd.f32 0.0, %v4028
    %4030 = vmatmul.f32.gmra.mxu0 %v3807
    %v4031 = vpop.f32.mrf.mxu0
    %v4032 = vadd.f32 0.0, %v4031
    %4033 = vdwg.mxu0
    %v4034 = vadd.f32 %v3679, %v3843
    %v4035 = vadd.f32 %v3680, %v3846
    %v4036 = vadd.f32 %v3681, %v3849
    %v4037 = vadd.f32 %v3682, %v3852
    %v4038 = vadd.f32 %v3683, %v3855
    %v4039 = vadd.f32 %v3684, %v3858
    %v4040 = vadd.f32 %v3685, %v3861
    %v4041 = vadd.f32 %v3686, %v3864
    %v4042 = vadd.f32 %v3687, %v3867
    %v4043 = vadd.f32 %v3688, %v3870
    %v4044 = vadd.f32 %v3689, %v3873
    %v4045 = vadd.f32 %v3690, %v3876
    %v4046 = vadd.f32 %v3691, %v3879
    %v4047 = vadd.f32 %v3692, %v3882
    %v4048 = vadd.f32 %v3693, %v3885
    %v4049 = vadd.f32 %v3694, %v3888
    %v4050 = vadd.f32 %v3695, %v3891
    %v4051 = vadd.f32 %v3696, %v3894
    %v4052 = vadd.f32 %v3697, %v3897
    %v4053 = vadd.f32 %v3698, %v3900
    %v4054 = vadd.f32 %v3699, %v3903
    %v4055 = vadd.f32 %v3700, %v3906
    %v4056 = vadd.f32 %v3701, %v3909
    %v4057 = vadd.f32 %v3702, %v3912
    %v4058 = vadd.f32 %v3703, %v3915
    %v4059 = vadd.f32 %v3704, %v3918
    %v4060 = vadd.f32 %v3705, %v3921
    %v4061 = vadd.f32 %v3706, %v3924
    %v4062 = vadd.f32 %v3707, %v3927
    %v4063 = vadd.f32 %v3708, %v3930
    %v4064 = vadd.f32 %v3709, %v3933
    %v4065 = vadd.f32 %v3710, %v3936
    %v4066 = vadd.f32 %v3711, %v3939
    %v4067 = vadd.f32 %v3712, %v3942
    %v4068 = vadd.f32 %v3713, %v3945
    %v4069 = vadd.f32 %v3714, %v3948
    %v4070 = vadd.f32 %v3715, %v3951
    %v4071 = vadd.f32 %v3716, %v3954
    %v4072 = vadd.f32 %v3717, %v3957
    %v4073 = vadd.f32 %v3718, %v3960
    %v4074 = vadd.f32 %v3719, %v3963
    %v4075 = vadd.f32 %v3720, %v3966
    %v4076 = vadd.f32 %v3721, %v3969
    %v4077 = vadd.f32 %v3722, %v3972
    %v4078 = vadd.f32 %v3723, %v3975
    %v4079 = vadd.f32 %v3724, %v3978
    %v4080 = vadd.f32 %v3725, %v3981
    %v4081 = vadd.f32 %v3726, %v3984
    %v4082 = vadd.f32 %v3727, %v3987
    %v4083 = vadd.f32 %v3728, %v3990
    %v4084 = vadd.f32 %v3729, %v3993
    %v4085 = vadd.f32 %v3730, %v3996
    %v4086 = vadd.f32 %v3731, %v3999
    %v4087 = vadd.f32 %v3732, %v4002
    %v4088 = vadd.f32 %v3733, %v4005
    %v4089 = vadd.f32 %v3734, %v4008
    %v4090 = vadd.f32 %v3735, %v4011
    %v4091 = vadd.f32 %v3736, %v4014
    %v4092 = vadd.f32 %v3737, %v4017
    %v4093 = vadd.f32 %v3738, %v4020
    %v4094 = vadd.f32 %v3739, %v4023
    %v4095 = vadd.f32 %v3740, %v4026
    %v4096 = vadd.f32 %v3741, %v4029
    %v4097 = vadd.f32 %v3742, %v4032
    %s4098 = scalar_lea.vmem [#allocation2], 608
    %v4099 = vld [vmem:[%s4098] sm:$0xff]
    %v4100 = vld [vmem:[%s4098 + $0x8] sm:$0xff]
    %v4101 = vld [vmem:[%s4098 + $0x10] sm:$0xff]
    %v4102 = vld [vmem:[%s4098 + $0x18] sm:$0xff]
    %v4103 = vld [vmem:[%s4098 + $0x20] sm:$0xff]
    %v4104 = vld [vmem:[%s4098 + $0x28] sm:$0xff]
    %v4105 = vld [vmem:[%s4098 + $0x30] sm:$0xff]
    %v4106 = vld [vmem:[%s4098 + $0x38] sm:$0xff]
    %v4107 = vld [vmem:[%s4098 + $0x40] sm:$0xff]
    %v4108 = vld [vmem:[%s4098 + $0x48] sm:$0xff]
    %v4109 = vld [vmem:[%s4098 + $0x50] sm:$0xff]
    %v4110 = vld [vmem:[%s4098 + $0x58] sm:$0xff]
    %v4111 = vld [vmem:[%s4098 + $0x60] sm:$0xff]
    %v4112 = vld [vmem:[%s4098 + $0x68] sm:$0xff]
    %v4113 = vld [vmem:[%s4098 + $0x70] sm:$0xff]
    %v4114 = vld [vmem:[%s4098 + $0x78] sm:$0xff]
    %v4115 = vld [vmem:[%s4098 + $0x80] sm:$0xff]
    %v4116 = vld [vmem:[%s4098 + $0x88] sm:$0xff]
    %v4117 = vld [vmem:[%s4098 + $0x90] sm:$0xff]
    %v4118 = vld [vmem:[%s4098 + $0x98] sm:$0xff]
    %v4119 = vld [vmem:[%s4098 + $0xa0] sm:$0xff]
    %v4120 = vld [vmem:[%s4098 + $0xa8] sm:$0xff]
    %v4121 = vld [vmem:[%s4098 + $0xb0] sm:$0xff]
    %v4122 = vld [vmem:[%s4098 + $0xb8] sm:$0xff]
    %v4123 = vld [vmem:[%s4098 + $0xc0] sm:$0xff]
    %v4124 = vld [vmem:[%s4098 + $0xc8] sm:$0xff]
    %v4125 = vld [vmem:[%s4098 + $0xd0] sm:$0xff]
    %v4126 = vld [vmem:[%s4098 + $0xd8] sm:$0xff]
    %v4127 = vld [vmem:[%s4098 + $0xe0] sm:$0xff]
    %v4128 = vld [vmem:[%s4098 + $0xe8] sm:$0xff]
    %v4129 = vld [vmem:[%s4098 + $0xf0] sm:$0xff]
    %v4130 = vld [vmem:[%s4098 + $0xf8] sm:$0xff]
    %v4131 = vld [vmem:[%s4098 + $0x120] sm:$0xff]
    %v4132 = vld [vmem:[%s4098 + $0x128] sm:$0xff]
    %v4133 = vld [vmem:[%s4098 + $0x130] sm:$0xff]
    %v4134 = vld [vmem:[%s4098 + $0x138] sm:$0xff]
    %v4135 = vld [vmem:[%s4098 + $0x140] sm:$0xff]
    %v4136 = vld [vmem:[%s4098 + $0x148] sm:$0xff]
    %v4137 = vld [vmem:[%s4098 + $0x150] sm:$0xff]
    %v4138 = vld [vmem:[%s4098 + $0x158] sm:$0xff]
    %v4139 = vld [vmem:[%s4098 + $0x160] sm:$0xff]
    %v4140 = vld [vmem:[%s4098 + $0x168] sm:$0xff]
    %v4141 = vld [vmem:[%s4098 + $0x170] sm:$0xff]
    %v4142 = vld [vmem:[%s4098 + $0x178] sm:$0xff]
    %v4143 = vld [vmem:[%s4098 + $0x180] sm:$0xff]
    %v4144 = vld [vmem:[%s4098 + $0x188] sm:$0xff]
    %v4145 = vld [vmem:[%s4098 + $0x190] sm:$0xff]
    %v4146 = vld [vmem:[%s4098 + $0x198] sm:$0xff]
    %v4147 = vld [vmem:[%s4098 + $0x1a0] sm:$0xff]
    %v4148 = vld [vmem:[%s4098 + $0x1a8] sm:$0xff]
    %v4149 = vld [vmem:[%s4098 + $0x1b0] sm:$0xff]
    %v4150 = vld [vmem:[%s4098 + $0x1b8] sm:$0xff]
    %v4151 = vld [vmem:[%s4098 + $0x1c0] sm:$0xff]
    %v4152 = vld [vmem:[%s4098 + $0x1c8] sm:$0xff]
    %v4153 = vld [vmem:[%s4098 + $0x1d0] sm:$0xff]
    %v4154 = vld [vmem:[%s4098 + $0x1d8] sm:$0xff]
    %v4155 = vld [vmem:[%s4098 + $0x1e0] sm:$0xff]
    %v4156 = vld [vmem:[%s4098 + $0x1e8] sm:$0xff]
    %v4157 = vld [vmem:[%s4098 + $0x1f0] sm:$0xff]
    %v4158 = vld [vmem:[%s4098 + $0x1f8] sm:$0xff]
    %v4159 = vld [vmem:[%s4098 + $0x200] sm:$0xff]
    %v4160 = vld [vmem:[%s4098 + $0x208] sm:$0xff]
    %v4161 = vld [vmem:[%s4098 + $0x210] sm:$0xff]
    %v4162 = vld [vmem:[%s4098 + $0x218] sm:$0xff]
    %s4163 = scalar_lea.vmem [#allocation8], 896
    %v4164 = vld [vmem:[%s4163] sm:$0xff]
    %v4165 = vld [vmem:[%s4163 + $0x8] sm:$0xff]
    %v4166 = vld [vmem:[%s4163 + $0x10] sm:$0xff]
    %v4167 = vld [vmem:[%s4163 + $0x18] sm:$0xff]
    %v4168 = vld [vmem:[%s4163 + $0x20] sm:$0xff]
    %v4169 = vld [vmem:[%s4163 + $0x28] sm:$0xff]
    %v4170 = vld [vmem:[%s4163 + $0x30] sm:$0xff]
    %v4171 = vld [vmem:[%s4163 + $0x38] sm:$0xff]
    %v4172 = vld [vmem:[%s4163 + $0x40] sm:$0xff]
    %v4173 = vld [vmem:[%s4163 + $0x48] sm:$0xff]
    %v4174 = vld [vmem:[%s4163 + $0x50] sm:$0xff]
    %v4175 = vld [vmem:[%s4163 + $0x58] sm:$0xff]
    %v4176 = vld [vmem:[%s4163 + $0x60] sm:$0xff]
    %v4177 = vld [vmem:[%s4163 + $0x68] sm:$0xff]
    %v4178 = vld [vmem:[%s4163 + $0x70] sm:$0xff]
    %v4179 = vld [vmem:[%s4163 + $0x78] sm:$0xff]
    %4180 = vmatpush.msra.mxu0 %v4179
    %4181 = vmatpush.msra.mxu0 %v4178
    %4182 = vmatpush.msra.mxu0 %v4177
    %4183 = vmatpush.msra.mxu0 %v4176
    %4184 = vmatpush.msra.mxu0 %v4175
    %4185 = vmatpush.msra.mxu0 %v4174
    %4186 = vmatpush.msra.mxu0 %v4173
    %4187 = vmatpush.msra.mxu0 %v4172
    %4188 = vmatpush.msra.mxu0 %v4171
    %4189 = vmatpush.msra.mxu0 %v4170
    %4190 = vmatpush.msra.mxu0 %v4169
    %4191 = vmatpush.msra.mxu0 %v4168
    %4192 = vmatpush.msra.mxu0 %v4167
    %4193 = vmatpush.msra.mxu0 %v4166
    %4194 = vmatpush.msra.mxu0 %v4165
    %4195 = vmatpush.msra.mxu0 %v4164
    %4196 = vmatmul.f32.gmra.mxu0 %v4099
    %v4197 = vpop.f32.mrf.mxu0
    %v4198 = vadd.f32 0.0, %v4197
    %4199 = vmatmul.f32.gmra.mxu0 %v4100
    %v4200 = vpop.f32.mrf.mxu0
    %v4201 = vadd.f32 0.0, %v4200
    %4202 = vmatmul.f32.gmra.mxu0 %v4101
    %v4203 = vpop.f32.mrf.mxu0
    %v4204 = vadd.f32 0.0, %v4203
    %4205 = vmatmul.f32.gmra.mxu0 %v4102
    %v4206 = vpop.f32.mrf.mxu0
    %v4207 = vadd.f32 0.0, %v4206
    %4208 = vmatmul.f32.gmra.mxu0 %v4103
    %v4209 = vpop.f32.mrf.mxu0
    %v4210 = vadd.f32 0.0, %v4209
    %4211 = vmatmul.f32.gmra.mxu0 %v4104
    %v4212 = vpop.f32.mrf.mxu0
    %v4213 = vadd.f32 0.0, %v4212
    %4214 = vmatmul.f32.gmra.mxu0 %v4105
    %v4215 = vpop.f32.mrf.mxu0
    %v4216 = vadd.f32 0.0, %v4215
    %4217 = vmatmul.f32.gmra.mxu0 %v4106
    %v4218 = vpop.f32.mrf.mxu0
    %v4219 = vadd.f32 0.0, %v4218
    %4220 = vmatmul.f32.gmra.mxu0 %v4107
    %v4221 = vpop.f32.mrf.mxu0
    %v4222 = vadd.f32 0.0, %v4221
    %4223 = vmatmul.f32.gmra.mxu0 %v4108
    %v4224 = vpop.f32.mrf.mxu0
    %v4225 = vadd.f32 0.0, %v4224
    %4226 = vmatmul.f32.gmra.mxu0 %v4109
    %v4227 = vpop.f32.mrf.mxu0
    %v4228 = vadd.f32 0.0, %v4227
    %4229 = vmatmul.f32.gmra.mxu0 %v4110
    %v4230 = vpop.f32.mrf.mxu0
    %v4231 = vadd.f32 0.0, %v4230
    %4232 = vmatmul.f32.gmra.mxu0 %v4111
    %v4233 = vpop.f32.mrf.mxu0
    %v4234 = vadd.f32 0.0, %v4233
    %4235 = vmatmul.f32.gmra.mxu0 %v4112
    %v4236 = vpop.f32.mrf.mxu0
    %v4237 = vadd.f32 0.0, %v4236
    %4238 = vmatmul.f32.gmra.mxu0 %v4113
    %v4239 = vpop.f32.mrf.mxu0
    %v4240 = vadd.f32 0.0, %v4239
    %4241 = vmatmul.f32.gmra.mxu0 %v4114
    %v4242 = vpop.f32.mrf.mxu0
    %v4243 = vadd.f32 0.0, %v4242
    %4244 = vmatmul.f32.gmra.mxu0 %v4115
    %v4245 = vpop.f32.mrf.mxu0
    %v4246 = vadd.f32 0.0, %v4245
    %4247 = vmatmul.f32.gmra.mxu0 %v4116
    %v4248 = vpop.f32.mrf.mxu0
    %v4249 = vadd.f32 0.0, %v4248
    %4250 = vmatmul.f32.gmra.mxu0 %v4117
    %v4251 = vpop.f32.mrf.mxu0
    %v4252 = vadd.f32 0.0, %v4251
    %4253 = vmatmul.f32.gmra.mxu0 %v4118
    %v4254 = vpop.f32.mrf.mxu0
    %v4255 = vadd.f32 0.0, %v4254
    %4256 = vmatmul.f32.gmra.mxu0 %v4119
    %v4257 = vpop.f32.mrf.mxu0
    %v4258 = vadd.f32 0.0, %v4257
    %4259 = vmatmul.f32.gmra.mxu0 %v4120
    %v4260 = vpop.f32.mrf.mxu0
    %v4261 = vadd.f32 0.0, %v4260
    %4262 = vmatmul.f32.gmra.mxu0 %v4121
    %v4263 = vpop.f32.mrf.mxu0
    %v4264 = vadd.f32 0.0, %v4263
    %4265 = vmatmul.f32.gmra.mxu0 %v4122
    %v4266 = vpop.f32.mrf.mxu0
    %v4267 = vadd.f32 0.0, %v4266
    %4268 = vmatmul.f32.gmra.mxu0 %v4123
    %v4269 = vpop.f32.mrf.mxu0
    %v4270 = vadd.f32 0.0, %v4269
    %4271 = vmatmul.f32.gmra.mxu0 %v4124
    %v4272 = vpop.f32.mrf.mxu0
    %v4273 = vadd.f32 0.0, %v4272
    %4274 = vmatmul.f32.gmra.mxu0 %v4125
    %v4275 = vpop.f32.mrf.mxu0
    %v4276 = vadd.f32 0.0, %v4275
    %4277 = vmatmul.f32.gmra.mxu0 %v4126
    %v4278 = vpop.f32.mrf.mxu0
    %v4279 = vadd.f32 0.0, %v4278
    %4280 = vmatmul.f32.gmra.mxu0 %v4127
    %v4281 = vpop.f32.mrf.mxu0
    %v4282 = vadd.f32 0.0, %v4281
    %4283 = vmatmul.f32.gmra.mxu0 %v4128
    %v4284 = vpop.f32.mrf.mxu0
    %v4285 = vadd.f32 0.0, %v4284
    %4286 = vmatmul.f32.gmra.mxu0 %v4129
    %v4287 = vpop.f32.mrf.mxu0
    %v4288 = vadd.f32 0.0, %v4287
    %4289 = vmatmul.f32.gmra.mxu0 %v4130
    %v4290 = vpop.f32.mrf.mxu0
    %v4291 = vadd.f32 0.0, %v4290
    %4292 = vmatmul.f32.gmra.mxu0 %v4131
    %v4293 = vpop.f32.mrf.mxu0
    %v4294 = vadd.f32 0.0, %v4293
    %4295 = vmatmul.f32.gmra.mxu0 %v4132
    %v4296 = vpop.f32.mrf.mxu0
    %v4297 = vadd.f32 0.0, %v4296
    %4298 = vmatmul.f32.gmra.mxu0 %v4133
    %v4299 = vpop.f32.mrf.mxu0
    %v4300 = vadd.f32 0.0, %v4299
    %4301 = vmatmul.f32.gmra.mxu0 %v4134
    %v4302 = vpop.f32.mrf.mxu0
    %v4303 = vadd.f32 0.0, %v4302
    %4304 = vmatmul.f32.gmra.mxu0 %v4135
    %v4305 = vpop.f32.mrf.mxu0
    %v4306 = vadd.f32 0.0, %v4305
    %4307 = vmatmul.f32.gmra.mxu0 %v4136
    %v4308 = vpop.f32.mrf.mxu0
    %v4309 = vadd.f32 0.0, %v4308
    %4310 = vmatmul.f32.gmra.mxu0 %v4137
    %v4311 = vpop.f32.mrf.mxu0
    %v4312 = vadd.f32 0.0, %v4311
    %4313 = vmatmul.f32.gmra.mxu0 %v4138
    %v4314 = vpop.f32.mrf.mxu0
    %v4315 = vadd.f32 0.0, %v4314
    %4316 = vmatmul.f32.gmra.mxu0 %v4139
    %v4317 = vpop.f32.mrf.mxu0
    %v4318 = vadd.f32 0.0, %v4317
    %4319 = vmatmul.f32.gmra.mxu0 %v4140
    %v4320 = vpop.f32.mrf.mxu0
    %v4321 = vadd.f32 0.0, %v4320
    %4322 = vmatmul.f32.gmra.mxu0 %v4141
    %v4323 = vpop.f32.mrf.mxu0
    %v4324 = vadd.f32 0.0, %v4323
    %4325 = vmatmul.f32.gmra.mxu0 %v4142
    %v4326 = vpop.f32.mrf.mxu0
    %v4327 = vadd.f32 0.0, %v4326
    %4328 = vmatmul.f32.gmra.mxu0 %v4143
    %v4329 = vpop.f32.mrf.mxu0
    %v4330 = vadd.f32 0.0, %v4329
    %4331 = vmatmul.f32.gmra.mxu0 %v4144
    %v4332 = vpop.f32.mrf.mxu0
    %v4333 = vadd.f32 0.0, %v4332
    %4334 = vmatmul.f32.gmra.mxu0 %v4145
    %v4335 = vpop.f32.mrf.mxu0
    %v4336 = vadd.f32 0.0, %v4335
    %4337 = vmatmul.f32.gmra.mxu0 %v4146
    %v4338 = vpop.f32.mrf.mxu0
    %v4339 = vadd.f32 0.0, %v4338
    %4340 = vmatmul.f32.gmra.mxu0 %v4147
    %v4341 = vpop.f32.mrf.mxu0
    %v4342 = vadd.f32 0.0, %v4341
    %4343 = vmatmul.f32.gmra.mxu0 %v4148
    %v4344 = vpop.f32.mrf.mxu0
    %v4345 = vadd.f32 0.0, %v4344
    %4346 = vmatmul.f32.gmra.mxu0 %v4149
    %v4347 = vpop.f32.mrf.mxu0
    %v4348 = vadd.f32 0.0, %v4347
    %4349 = vmatmul.f32.gmra.mxu0 %v4150
    %v4350 = vpop.f32.mrf.mxu0
    %v4351 = vadd.f32 0.0, %v4350
    %4352 = vmatmul.f32.gmra.mxu0 %v4151
    %v4353 = vpop.f32.mrf.mxu0
    %v4354 = vadd.f32 0.0, %v4353
    %4355 = vmatmul.f32.gmra.mxu0 %v4152
    %v4356 = vpop.f32.mrf.mxu0
    %v4357 = vadd.f32 0.0, %v4356
    %4358 = vmatmul.f32.gmra.mxu0 %v4153
    %v4359 = vpop.f32.mrf.mxu0
    %v4360 = vadd.f32 0.0, %v4359
    %4361 = vmatmul.f32.gmra.mxu0 %v4154
    %v4362 = vpop.f32.mrf.mxu0
    %v4363 = vadd.f32 0.0, %v4362
    %4364 = vmatmul.f32.gmra.mxu0 %v4155
    %v4365 = vpop.f32.mrf.mxu0
    %v4366 = vadd.f32 0.0, %v4365
    %4367 = vmatmul.f32.gmra.mxu0 %v4156
    %v4368 = vpop.f32.mrf.mxu0
    %v4369 = vadd.f32 0.0, %v4368
    %4370 = vmatmul.f32.gmra.mxu0 %v4157
    %v4371 = vpop.f32.mrf.mxu0
    %v4372 = vadd.f32 0.0, %v4371
    %4373 = vmatmul.f32.gmra.mxu0 %v4158
    %v4374 = vpop.f32.mrf.mxu0
    %v4375 = vadd.f32 0.0, %v4374
    %4376 = vmatmul.f32.gmra.mxu0 %v4159
    %v4377 = vpop.f32.mrf.mxu0
    %v4378 = vadd.f32 0.0, %v4377
    %4379 = vmatmul.f32.gmra.mxu0 %v4160
    %v4380 = vpop.f32.mrf.mxu0
    %v4381 = vadd.f32 0.0, %v4380
    %4382 = vmatmul.f32.gmra.mxu0 %v4161
    %v4383 = vpop.f32.mrf.mxu0
    %v4384 = vadd.f32 0.0, %v4383
    %4385 = vmatmul.f32.gmra.mxu0 %v4162
    %v4386 = vpop.f32.mrf.mxu0
    %v4387 = vadd.f32 0.0, %v4386
    %4388 = vdwg.mxu0
    %v4389 = vadd.f32 %v4034, %v4198
    %v4390 = vadd.f32 %v4035, %v4201
    %v4391 = vadd.f32 %v4036, %v4204
    %v4392 = vadd.f32 %v4037, %v4207
    %v4393 = vadd.f32 %v4038, %v4210
    %v4394 = vadd.f32 %v4039, %v4213
    %v4395 = vadd.f32 %v4040, %v4216
    %v4396 = vadd.f32 %v4041, %v4219
    %v4397 = vadd.f32 %v4042, %v4222
    %v4398 = vadd.f32 %v4043, %v4225
    %v4399 = vadd.f32 %v4044, %v4228
    %v4400 = vadd.f32 %v4045, %v4231
    %v4401 = vadd.f32 %v4046, %v4234
    %v4402 = vadd.f32 %v4047, %v4237
    %v4403 = vadd.f32 %v4048, %v4240
    %v4404 = vadd.f32 %v4049, %v4243
    %v4405 = vadd.f32 %v4050, %v4246
    %v4406 = vadd.f32 %v4051, %v4249
    %v4407 = vadd.f32 %v4052, %v4252
    %v4408 = vadd.f32 %v4053, %v4255
    %v4409 = vadd.f32 %v4054, %v4258
    %v4410 = vadd.f32 %v4055, %v4261
    %v4411 = vadd.f32 %v4056, %v4264
    %v4412 = vadd.f32 %v4057, %v4267
    %v4413 = vadd.f32 %v4058, %v4270
    %v4414 = vadd.f32 %v4059, %v4273
    %v4415 = vadd.f32 %v4060, %v4276
    %v4416 = vadd.f32 %v4061, %v4279
    %v4417 = vadd.f32 %v4062, %v4282
    %v4418 = vadd.f32 %v4063, %v4285
    %v4419 = vadd.f32 %v4064, %v4288
    %v4420 = vadd.f32 %v4065, %v4291
    %v4421 = vadd.f32 %v4066, %v4294
    %v4422 = vadd.f32 %v4067, %v4297
    %v4423 = vadd.f32 %v4068, %v4300
    %v4424 = vadd.f32 %v4069, %v4303
    %v4425 = vadd.f32 %v4070, %v4306
    %v4426 = vadd.f32 %v4071, %v4309
    %v4427 = vadd.f32 %v4072, %v4312
    %v4428 = vadd.f32 %v4073, %v4315
    %v4429 = vadd.f32 %v4074, %v4318
    %v4430 = vadd.f32 %v4075, %v4321
    %v4431 = vadd.f32 %v4076, %v4324
    %v4432 = vadd.f32 %v4077, %v4327
    %v4433 = vadd.f32 %v4078, %v4330
    %v4434 = vadd.f32 %v4079, %v4333
    %v4435 = vadd.f32 %v4080, %v4336
    %v4436 = vadd.f32 %v4081, %v4339
    %v4437 = vadd.f32 %v4082, %v4342
    %v4438 = vadd.f32 %v4083, %v4345
    %v4439 = vadd.f32 %v4084, %v4348
    %v4440 = vadd.f32 %v4085, %v4351
    %v4441 = vadd.f32 %v4086, %v4354
    %v4442 = vadd.f32 %v4087, %v4357
    %v4443 = vadd.f32 %v4088, %v4360
    %v4444 = vadd.f32 %v4089, %v4363
    %v4445 = vadd.f32 %v4090, %v4366
    %v4446 = vadd.f32 %v4091, %v4369
    %v4447 = vadd.f32 %v4092, %v4372
    %v4448 = vadd.f32 %v4093, %v4375
    %v4449 = vadd.f32 %v4094, %v4378
    %v4450 = vadd.f32 %v4095, %v4381
    %v4451 = vadd.f32 %v4096, %v4384
    %v4452 = vadd.f32 %v4097, %v4387
    %s4453 = scalar_lea.vmem [#allocation2], 1184
    %v4454 = vld [vmem:[%s4453] sm:$0xff]
    %v4455 = vld [vmem:[%s4453 + $0x8] sm:$0xff]
    %v4456 = vld [vmem:[%s4453 + $0x10] sm:$0xff]
    %v4457 = vld [vmem:[%s4453 + $0x18] sm:$0xff]
    %v4458 = vld [vmem:[%s4453 + $0x20] sm:$0xff]
    %v4459 = vld [vmem:[%s4453 + $0x28] sm:$0xff]
    %v4460 = vld [vmem:[%s4453 + $0x30] sm:$0xff]
    %v4461 = vld [vmem:[%s4453 + $0x38] sm:$0xff]
    %v4462 = vld [vmem:[%s4453 + $0x40] sm:$0xff]
    %v4463 = vld [vmem:[%s4453 + $0x48] sm:$0xff]
    %v4464 = vld [vmem:[%s4453 + $0x50] sm:$0xff]
    %v4465 = vld [vmem:[%s4453 + $0x58] sm:$0xff]
    %v4466 = vld [vmem:[%s4453 + $0x60] sm:$0xff]
    %v4467 = vld [vmem:[%s4453 + $0x68] sm:$0xff]
    %v4468 = vld [vmem:[%s4453 + $0x70] sm:$0xff]
    %v4469 = vld [vmem:[%s4453 + $0x78] sm:$0xff]
    %v4470 = vld [vmem:[%s4453 + $0x80] sm:$0xff]
    %v4471 = vld [vmem:[%s4453 + $0x88] sm:$0xff]
    %v4472 = vld [vmem:[%s4453 + $0x90] sm:$0xff]
    %v4473 = vld [vmem:[%s4453 + $0x98] sm:$0xff]
    %v4474 = vld [vmem:[%s4453 + $0xa0] sm:$0xff]
    %v4475 = vld [vmem:[%s4453 + $0xa8] sm:$0xff]
    %v4476 = vld [vmem:[%s4453 + $0xb0] sm:$0xff]
    %v4477 = vld [vmem:[%s4453 + $0xb8] sm:$0xff]
    %v4478 = vld [vmem:[%s4453 + $0xc0] sm:$0xff]
    %v4479 = vld [vmem:[%s4453 + $0xc8] sm:$0xff]
    %v4480 = vld [vmem:[%s4453 + $0xd0] sm:$0xff]
    %v4481 = vld [vmem:[%s4453 + $0xd8] sm:$0xff]
    %v4482 = vld [vmem:[%s4453 + $0xe0] sm:$0xff]
    %v4483 = vld [vmem:[%s4453 + $0xe8] sm:$0xff]
    %v4484 = vld [vmem:[%s4453 + $0xf0] sm:$0xff]
    %v4485 = vld [vmem:[%s4453 + $0xf8] sm:$0xff]
    %v4486 = vld [vmem:[%s4453 + $0x120] sm:$0xff]
    %v4487 = vld [vmem:[%s4453 + $0x128] sm:$0xff]
    %v4488 = vld [vmem:[%s4453 + $0x130] sm:$0xff]
    %v4489 = vld [vmem:[%s4453 + $0x138] sm:$0xff]
    %v4490 = vld [vmem:[%s4453 + $0x140] sm:$0xff]
    %v4491 = vld [vmem:[%s4453 + $0x148] sm:$0xff]
    %v4492 = vld [vmem:[%s4453 + $0x150] sm:$0xff]
    %v4493 = vld [vmem:[%s4453 + $0x158] sm:$0xff]
    %v4494 = vld [vmem:[%s4453 + $0x160] sm:$0xff]
    %v4495 = vld [vmem:[%s4453 + $0x168] sm:$0xff]
    %v4496 = vld [vmem:[%s4453 + $0x170] sm:$0xff]
    %v4497 = vld [vmem:[%s4453 + $0x178] sm:$0xff]
    %v4498 = vld [vmem:[%s4453 + $0x180] sm:$0xff]
    %v4499 = vld [vmem:[%s4453 + $0x188] sm:$0xff]
    %v4500 = vld [vmem:[%s4453 + $0x190] sm:$0xff]
    %v4501 = vld [vmem:[%s4453 + $0x198] sm:$0xff]
    %v4502 = vld [vmem:[%s4453 + $0x1a0] sm:$0xff]
    %v4503 = vld [vmem:[%s4453 + $0x1a8] sm:$0xff]
    %v4504 = vld [vmem:[%s4453 + $0x1b0] sm:$0xff]
    %v4505 = vld [vmem:[%s4453 + $0x1b8] sm:$0xff]
    %v4506 = vld [vmem:[%s4453 + $0x1c0] sm:$0xff]
    %v4507 = vld [vmem:[%s4453 + $0x1c8] sm:$0xff]
    %v4508 = vld [vmem:[%s4453 + $0x1d0] sm:$0xff]
    %v4509 = vld [vmem:[%s4453 + $0x1d8] sm:$0xff]
    %v4510 = vld [vmem:[%s4453 + $0x1e0] sm:$0xff]
    %v4511 = vld [vmem:[%s4453 + $0x1e8] sm:$0xff]
    %v4512 = vld [vmem:[%s4453 + $0x1f0] sm:$0xff]
    %v4513 = vld [vmem:[%s4453 + $0x1f8] sm:$0xff]
    %v4514 = vld [vmem:[%s4453 + $0x200] sm:$0xff]
    %v4515 = vld [vmem:[%s4453 + $0x208] sm:$0xff]
    %v4516 = vld [vmem:[%s4453 + $0x210] sm:$0xff]
    %v4517 = vld [vmem:[%s4453 + $0x218] sm:$0xff]
    %s4518 = scalar_lea.vmem [#allocation8], 1024
    %v4519 = vld [vmem:[%s4518] sm:$0xff]
    %v4520 = vld [vmem:[%s4518 + $0x8] sm:$0xff]
    %v4521 = vld [vmem:[%s4518 + $0x10] sm:$0xff]
    %v4522 = vld [vmem:[%s4518 + $0x18] sm:$0xff]
    %v4523 = vld [vmem:[%s4518 + $0x20] sm:$0xff]
    %v4524 = vld [vmem:[%s4518 + $0x28] sm:$0xff]
    %v4525 = vld [vmem:[%s4518 + $0x30] sm:$0xff]
    %v4526 = vld [vmem:[%s4518 + $0x38] sm:$0xff]
    %v4527 = vld [vmem:[%s4518 + $0x40] sm:$0xff]
    %v4528 = vld [vmem:[%s4518 + $0x48] sm:$0xff]
    %v4529 = vld [vmem:[%s4518 + $0x50] sm:$0xff]
    %v4530 = vld [vmem:[%s4518 + $0x58] sm:$0xff]
    %v4531 = vld [vmem:[%s4518 + $0x60] sm:$0xff]
    %v4532 = vld [vmem:[%s4518 + $0x68] sm:$0xff]
    %v4533 = vld [vmem:[%s4518 + $0x70] sm:$0xff]
    %v4534 = vld [vmem:[%s4518 + $0x78] sm:$0xff]
    %4535 = vmatpush.msra.mxu0 %v4534
    %4536 = vmatpush.msra.mxu0 %v4533
    %4537 = vmatpush.msra.mxu0 %v4532
    %4538 = vmatpush.msra.mxu0 %v4531
    %4539 = vmatpush.msra.mxu0 %v4530
    %4540 = vmatpush.msra.mxu0 %v4529
    %4541 = vmatpush.msra.mxu0 %v4528
    %4542 = vmatpush.msra.mxu0 %v4527
    %4543 = vmatpush.msra.mxu0 %v4526
    %4544 = vmatpush.msra.mxu0 %v4525
    %4545 = vmatpush.msra.mxu0 %v4524
    %4546 = vmatpush.msra.mxu0 %v4523
    %4547 = vmatpush.msra.mxu0 %v4522
    %4548 = vmatpush.msra.mxu0 %v4521
    %4549 = vmatpush.msra.mxu0 %v4520
    %4550 = vmatpush.msra.mxu0 %v4519
    %4551 = vmatmul.f32.gmra.mxu0 %v4454
    %v4552 = vpop.f32.mrf.mxu0
    %v4553 = vadd.f32 0.0, %v4552
    %4554 = vmatmul.f32.gmra.mxu0 %v4455
    %v4555 = vpop.f32.mrf.mxu0
    %v4556 = vadd.f32 0.0, %v4555
    %4557 = vmatmul.f32.gmra.mxu0 %v4456
    %v4558 = vpop.f32.mrf.mxu0
    %v4559 = vadd.f32 0.0, %v4558
    %4560 = vmatmul.f32.gmra.mxu0 %v4457
    %v4561 = vpop.f32.mrf.mxu0
    %v4562 = vadd.f32 0.0, %v4561
    %4563 = vmatmul.f32.gmra.mxu0 %v4458
    %v4564 = vpop.f32.mrf.mxu0
    %v4565 = vadd.f32 0.0, %v4564
    %4566 = vmatmul.f32.gmra.mxu0 %v4459
    %v4567 = vpop.f32.mrf.mxu0
    %v4568 = vadd.f32 0.0, %v4567
    %4569 = vmatmul.f32.gmra.mxu0 %v4460
    %v4570 = vpop.f32.mrf.mxu0
    %v4571 = vadd.f32 0.0, %v4570
    %4572 = vmatmul.f32.gmra.mxu0 %v4461
    %v4573 = vpop.f32.mrf.mxu0
    %v4574 = vadd.f32 0.0, %v4573
    %4575 = vmatmul.f32.gmra.mxu0 %v4462
    %v4576 = vpop.f32.mrf.mxu0
    %v4577 = vadd.f32 0.0, %v4576
    %4578 = vmatmul.f32.gmra.mxu0 %v4463
    %v4579 = vpop.f32.mrf.mxu0
    %v4580 = vadd.f32 0.0, %v4579
    %4581 = vmatmul.f32.gmra.mxu0 %v4464
    %v4582 = vpop.f32.mrf.mxu0
    %v4583 = vadd.f32 0.0, %v4582
    %4584 = vmatmul.f32.gmra.mxu0 %v4465
    %v4585 = vpop.f32.mrf.mxu0
    %v4586 = vadd.f32 0.0, %v4585
    %4587 = vmatmul.f32.gmra.mxu0 %v4466
    %v4588 = vpop.f32.mrf.mxu0
    %v4589 = vadd.f32 0.0, %v4588
    %4590 = vmatmul.f32.gmra.mxu0 %v4467
    %v4591 = vpop.f32.mrf.mxu0
    %v4592 = vadd.f32 0.0, %v4591
    %4593 = vmatmul.f32.gmra.mxu0 %v4468
    %v4594 = vpop.f32.mrf.mxu0
    %v4595 = vadd.f32 0.0, %v4594
    %4596 = vmatmul.f32.gmra.mxu0 %v4469
    %v4597 = vpop.f32.mrf.mxu0
    %v4598 = vadd.f32 0.0, %v4597
    %4599 = vmatmul.f32.gmra.mxu0 %v4470
    %v4600 = vpop.f32.mrf.mxu0
    %v4601 = vadd.f32 0.0, %v4600
    %4602 = vmatmul.f32.gmra.mxu0 %v4471
    %v4603 = vpop.f32.mrf.mxu0
    %v4604 = vadd.f32 0.0, %v4603
    %4605 = vmatmul.f32.gmra.mxu0 %v4472
    %v4606 = vpop.f32.mrf.mxu0
    %v4607 = vadd.f32 0.0, %v4606
    %4608 = vmatmul.f32.gmra.mxu0 %v4473
    %v4609 = vpop.f32.mrf.mxu0
    %v4610 = vadd.f32 0.0, %v4609
    %4611 = vmatmul.f32.gmra.mxu0 %v4474
    %v4612 = vpop.f32.mrf.mxu0
    %v4613 = vadd.f32 0.0, %v4612
    %4614 = vmatmul.f32.gmra.mxu0 %v4475
    %v4615 = vpop.f32.mrf.mxu0
    %v4616 = vadd.f32 0.0, %v4615
    %4617 = vmatmul.f32.gmra.mxu0 %v4476
    %v4618 = vpop.f32.mrf.mxu0
    %v4619 = vadd.f32 0.0, %v4618
    %4620 = vmatmul.f32.gmra.mxu0 %v4477
    %v4621 = vpop.f32.mrf.mxu0
    %v4622 = vadd.f32 0.0, %v4621
    %4623 = vmatmul.f32.gmra.mxu0 %v4478
    %v4624 = vpop.f32.mrf.mxu0
    %v4625 = vadd.f32 0.0, %v4624
    %4626 = vmatmul.f32.gmra.mxu0 %v4479
    %v4627 = vpop.f32.mrf.mxu0
    %v4628 = vadd.f32 0.0, %v4627
    %4629 = vmatmul.f32.gmra.mxu0 %v4480
    %v4630 = vpop.f32.mrf.mxu0
    %v4631 = vadd.f32 0.0, %v4630
    %4632 = vmatmul.f32.gmra.mxu0 %v4481
    %v4633 = vpop.f32.mrf.mxu0
    %v4634 = vadd.f32 0.0, %v4633
    %4635 = vmatmul.f32.gmra.mxu0 %v4482
    %v4636 = vpop.f32.mrf.mxu0
    %v4637 = vadd.f32 0.0, %v4636
    %4638 = vmatmul.f32.gmra.mxu0 %v4483
    %v4639 = vpop.f32.mrf.mxu0
    %v4640 = vadd.f32 0.0, %v4639
    %4641 = vmatmul.f32.gmra.mxu0 %v4484
    %v4642 = vpop.f32.mrf.mxu0
    %v4643 = vadd.f32 0.0, %v4642
    %4644 = vmatmul.f32.gmra.mxu0 %v4485
    %v4645 = vpop.f32.mrf.mxu0
    %v4646 = vadd.f32 0.0, %v4645
    %4647 = vmatmul.f32.gmra.mxu0 %v4486
    %v4648 = vpop.f32.mrf.mxu0
    %v4649 = vadd.f32 0.0, %v4648
    %4650 = vmatmul.f32.gmra.mxu0 %v4487
    %v4651 = vpop.f32.mrf.mxu0
    %v4652 = vadd.f32 0.0, %v4651
    %4653 = vmatmul.f32.gmra.mxu0 %v4488
    %v4654 = vpop.f32.mrf.mxu0
    %v4655 = vadd.f32 0.0, %v4654
    %4656 = vmatmul.f32.gmra.mxu0 %v4489
    %v4657 = vpop.f32.mrf.mxu0
    %v4658 = vadd.f32 0.0, %v4657
    %4659 = vmatmul.f32.gmra.mxu0 %v4490
    %v4660 = vpop.f32.mrf.mxu0
    %v4661 = vadd.f32 0.0, %v4660
    %4662 = vmatmul.f32.gmra.mxu0 %v4491
    %v4663 = vpop.f32.mrf.mxu0
    %v4664 = vadd.f32 0.0, %v4663
    %4665 = vmatmul.f32.gmra.mxu0 %v4492
    %v4666 = vpop.f32.mrf.mxu0
    %v4667 = vadd.f32 0.0, %v4666
    %4668 = vmatmul.f32.gmra.mxu0 %v4493
    %v4669 = vpop.f32.mrf.mxu0
    %v4670 = vadd.f32 0.0, %v4669
    %4671 = vmatmul.f32.gmra.mxu0 %v4494
    %v4672 = vpop.f32.mrf.mxu0
    %v4673 = vadd.f32 0.0, %v4672
    %4674 = vmatmul.f32.gmra.mxu0 %v4495
    %v4675 = vpop.f32.mrf.mxu0
    %v4676 = vadd.f32 0.0, %v4675
    %4677 = vmatmul.f32.gmra.mxu0 %v4496
    %v4678 = vpop.f32.mrf.mxu0
    %v4679 = vadd.f32 0.0, %v4678
    %4680 = vmatmul.f32.gmra.mxu0 %v4497
    %v4681 = vpop.f32.mrf.mxu0
    %v4682 = vadd.f32 0.0, %v4681
    %4683 = vmatmul.f32.gmra.mxu0 %v4498
    %v4684 = vpop.f32.mrf.mxu0
    %v4685 = vadd.f32 0.0, %v4684
    %4686 = vmatmul.f32.gmra.mxu0 %v4499
    %v4687 = vpop.f32.mrf.mxu0
    %v4688 = vadd.f32 0.0, %v4687
    %4689 = vmatmul.f32.gmra.mxu0 %v4500
    %v4690 = vpop.f32.mrf.mxu0
    %v4691 = vadd.f32 0.0, %v4690
    %4692 = vmatmul.f32.gmra.mxu0 %v4501
    %v4693 = vpop.f32.mrf.mxu0
    %v4694 = vadd.f32 0.0, %v4693
    %4695 = vmatmul.f32.gmra.mxu0 %v4502
    %v4696 = vpop.f32.mrf.mxu0
    %v4697 = vadd.f32 0.0, %v4696
    %4698 = vmatmul.f32.gmra.mxu0 %v4503
    %v4699 = vpop.f32.mrf.mxu0
    %v4700 = vadd.f32 0.0, %v4699
    %4701 = vmatmul.f32.gmra.mxu0 %v4504
    %v4702 = vpop.f32.mrf.mxu0
    %v4703 = vadd.f32 0.0, %v4702
    %4704 = vmatmul.f32.gmra.mxu0 %v4505
    %v4705 = vpop.f32.mrf.mxu0
    %v4706 = vadd.f32 0.0, %v4705
    %4707 = vmatmul.f32.gmra.mxu0 %v4506
    %v4708 = vpop.f32.mrf.mxu0
    %v4709 = vadd.f32 0.0, %v4708
    %4710 = vmatmul.f32.gmra.mxu0 %v4507
    %v4711 = vpop.f32.mrf.mxu0
    %v4712 = vadd.f32 0.0, %v4711
    %4713 = vmatmul.f32.gmra.mxu0 %v4508
    %v4714 = vpop.f32.mrf.mxu0
    %v4715 = vadd.f32 0.0, %v4714
    %4716 = vmatmul.f32.gmra.mxu0 %v4509
    %v4717 = vpop.f32.mrf.mxu0
    %v4718 = vadd.f32 0.0, %v4717
    %4719 = vmatmul.f32.gmra.mxu0 %v4510
    %v4720 = vpop.f32.mrf.mxu0
    %v4721 = vadd.f32 0.0, %v4720
    %4722 = vmatmul.f32.gmra.mxu0 %v4511
    %v4723 = vpop.f32.mrf.mxu0
    %v4724 = vadd.f32 0.0, %v4723
    %4725 = vmatmul.f32.gmra.mxu0 %v4512
    %v4726 = vpop.f32.mrf.mxu0
    %v4727 = vadd.f32 0.0, %v4726
    %4728 = vmatmul.f32.gmra.mxu0 %v4513
    %v4729 = vpop.f32.mrf.mxu0
    %v4730 = vadd.f32 0.0, %v4729
    %4731 = vmatmul.f32.gmra.mxu0 %v4514
    %v4732 = vpop.f32.mrf.mxu0
    %v4733 = vadd.f32 0.0, %v4732
    %4734 = vmatmul.f32.gmra.mxu0 %v4515
    %v4735 = vpop.f32.mrf.mxu0
    %v4736 = vadd.f32 0.0, %v4735
    %4737 = vmatmul.f32.gmra.mxu0 %v4516
    %v4738 = vpop.f32.mrf.mxu0
    %v4739 = vadd.f32 0.0, %v4738
    %4740 = vmatmul.f32.gmra.mxu0 %v4517
    %v4741 = vpop.f32.mrf.mxu0
    %v4742 = vadd.f32 0.0, %v4741
    %4743 = vdwg.mxu0
    %v4744 = vadd.f32 %v4389, %v4553
    %v4745 = vadd.f32 %v4390, %v4556
    %v4746 = vadd.f32 %v4391, %v4559
    %v4747 = vadd.f32 %v4392, %v4562
    %v4748 = vadd.f32 %v4393, %v4565
    %v4749 = vadd.f32 %v4394, %v4568
    %v4750 = vadd.f32 %v4395, %v4571
    %v4751 = vadd.f32 %v4396, %v4574
    %v4752 = vadd.f32 %v4397, %v4577
    %v4753 = vadd.f32 %v4398, %v4580
    %v4754 = vadd.f32 %v4399, %v4583
    %v4755 = vadd.f32 %v4400, %v4586
    %v4756 = vadd.f32 %v4401, %v4589
    %v4757 = vadd.f32 %v4402, %v4592
    %v4758 = vadd.f32 %v4403, %v4595
    %v4759 = vadd.f32 %v4404, %v4598
    %v4760 = vadd.f32 %v4405, %v4601
    %v4761 = vadd.f32 %v4406, %v4604
    %v4762 = vadd.f32 %v4407, %v4607
    %v4763 = vadd.f32 %v4408, %v4610
    %v4764 = vadd.f32 %v4409, %v4613
    %v4765 = vadd.f32 %v4410, %v4616
    %v4766 = vadd.f32 %v4411, %v4619
    %v4767 = vadd.f32 %v4412, %v4622
    %v4768 = vadd.f32 %v4413, %v4625
    %v4769 = vadd.f32 %v4414, %v4628
    %v4770 = vadd.f32 %v4415, %v4631
    %v4771 = vadd.f32 %v4416, %v4634
    %v4772 = vadd.f32 %v4417, %v4637
    %v4773 = vadd.f32 %v4418, %v4640
    %v4774 = vadd.f32 %v4419, %v4643
    %v4775 = vadd.f32 %v4420, %v4646
    %v4776 = vadd.f32 %v4421, %v4649
    %v4777 = vadd.f32 %v4422, %v4652
    %v4778 = vadd.f32 %v4423, %v4655
    %v4779 = vadd.f32 %v4424, %v4658
    %v4780 = vadd.f32 %v4425, %v4661
    %v4781 = vadd.f32 %v4426, %v4664
    %v4782 = vadd.f32 %v4427, %v4667
    %v4783 = vadd.f32 %v4428, %v4670
    %v4784 = vadd.f32 %v4429, %v4673
    %v4785 = vadd.f32 %v4430, %v4676
    %v4786 = vadd.f32 %v4431, %v4679
    %v4787 = vadd.f32 %v4432, %v4682
    %v4788 = vadd.f32 %v4433, %v4685
    %v4789 = vadd.f32 %v4434, %v4688
    %v4790 = vadd.f32 %v4435, %v4691
    %v4791 = vadd.f32 %v4436, %v4694
    %v4792 = vadd.f32 %v4437, %v4697
    %v4793 = vadd.f32 %v4438, %v4700
    %v4794 = vadd.f32 %v4439, %v4703
    %v4795 = vadd.f32 %v4440, %v4706
    %v4796 = vadd.f32 %v4441, %v4709
    %v4797 = vadd.f32 %v4442, %v4712
    %v4798 = vadd.f32 %v4443, %v4715
    %v4799 = vadd.f32 %v4444, %v4718
    %v4800 = vadd.f32 %v4445, %v4721
    %v4801 = vadd.f32 %v4446, %v4724
    %v4802 = vadd.f32 %v4447, %v4727
    %v4803 = vadd.f32 %v4448, %v4730
    %v4804 = vadd.f32 %v4449, %v4733
    %v4805 = vadd.f32 %v4450, %v4736
    %v4806 = vadd.f32 %v4451, %v4739
    %v4807 = vadd.f32 %v4452, %v4742
    %v4808 = vld [vmem:[%s5] sm:$0x1]
    %v4809 = vld [vmem:[%s6] sm:$0x1]
    %v4810 = vadd.f32 %v4744, %v4745
    %v4811 = vadd.f32 %v4810, %v4746
    %v4812 = vadd.f32 %v4811, %v4747
    %v4813 = vadd.f32 %v4812, %v4748
    %v4814 = vadd.f32 %v4813, %v4749
    %v4815 = vadd.f32 %v4814, %v4750
    %v4816 = vadd.f32 %v4815, %v4751
    %v4817 = vadd.f32 %v4816, %v4752
    %v4818 = vadd.f32 %v4817, %v4753
    %v4819 = vadd.f32 %v4818, %v4754
    %v4820 = vadd.f32 %v4819, %v4755
    %v4821 = vadd.f32 %v4820, %v4756
    %v4822 = vadd.f32 %v4821, %v4757
    %v4823 = vadd.f32 %v4822, %v4758
    %v4824 = vadd.f32 %v4823, %v4759
    %v4825 = vadd.f32 %v4824, %v4760
    %v4826 = vadd.f32 %v4825, %v4761
    %v4827 = vadd.f32 %v4826, %v4762
    %v4828 = vadd.f32 %v4827, %v4763
    %v4829 = vadd.f32 %v4828, %v4764
    %v4830 = vadd.f32 %v4829, %v4765
    %v4831 = vadd.f32 %v4830, %v4766
    %v4832 = vadd.f32 %v4831, %v4767
    %v4833 = vadd.f32 %v4832, %v4768
    %v4834 = vadd.f32 %v4833, %v4769
    %v4835 = vadd.f32 %v4834, %v4770
    %v4836 = vadd.f32 %v4835, %v4771
    %v4837 = vadd.f32 %v4836, %v4772
    %v4838 = vadd.f32 %v4837, %v4773
    %v4839 = vadd.f32 %v4838, %v4774
    %v4840 = vadd.f32 %v4839, %v4775
    %v4841 = vadd.f32 %v4840, %v4776
    %v4842 = vadd.f32 %v4841, %v4777
    %v4843 = vadd.f32 %v4842, %v4778
    %v4844 = vadd.f32 %v4843, %v4779
    %v4845 = vadd.f32 %v4844, %v4780
    %v4846 = vadd.f32 %v4845, %v4781
    %v4847 = vadd.f32 %v4846, %v4782
    %v4848 = vadd.f32 %v4847, %v4783
    %v4849 = vadd.f32 %v4848, %v4784
    %v4850 = vadd.f32 %v4849, %v4785
    %v4851 = vadd.f32 %v4850, %v4786
    %v4852 = vadd.f32 %v4851, %v4787
    %v4853 = vadd.f32 %v4852, %v4788
    %v4854 = vadd.f32 %v4853, %v4789
    %v4855 = vadd.f32 %v4854, %v4790
    %v4856 = vadd.f32 %v4855, %v4791
    %v4857 = vadd.f32 %v4856, %v4792
    %v4858 = vadd.f32 %v4857, %v4793
    %v4859 = vadd.f32 %v4858, %v4794
    %v4860 = vadd.f32 %v4859, %v4795
    %v4861 = vadd.f32 %v4860, %v4796
    %v4862 = vadd.f32 %v4861, %v4797
    %v4863 = vadd.f32 %v4862, %v4798
    %v4864 = vadd.f32 %v4863, %v4799
    %v4865 = vadd.f32 %v4864, %v4800
    %v4866 = vadd.f32 %v4865, %v4801
    %v4867 = vadd.f32 %v4866, %v4802
    %v4868 = vadd.f32 %v4867, %v4803
    %v4869 = vadd.f32 %v4868, %v4804
    %v4870 = vadd.f32 %v4869, %v4805
    %v4871 = vadd.f32 %v4870, %v4806
    %v4872 = vadd.f32 %v4871, %v4807
    %v4873 = vrot.slane %v4872, 4
    %v4874 = vadd.f32 %v4872, %v4873
    %v4875 = vrot.slane %v4874, 2
    %v4876 = vadd.f32 %v4874, %v4875
    %v4877 = vrot.slane %v4876, 1
    %v4878 = vadd.f32 %v4876, %v4877
    %v4879 = vmul.f32 %v4744, %v4744
    %v4880 = vmul.f32 %v4745, %v4745
    %v4881 = vmul.f32 %v4746, %v4746
    %v4882 = vmul.f32 %v4747, %v4747
    %v4883 = vmul.f32 %v4748, %v4748
    %v4884 = vmul.f32 %v4749, %v4749
    %v4885 = vmul.f32 %v4750, %v4750
    %v4886 = vmul.f32 %v4751, %v4751
    %v4887 = vmul.f32 %v4752, %v4752
    %v4888 = vmul.f32 %v4753, %v4753
    %v4889 = vmul.f32 %v4754, %v4754
    %v4890 = vmul.f32 %v4755, %v4755
    %v4891 = vmul.f32 %v4756, %v4756
    %v4892 = vmul.f32 %v4757, %v4757
    %v4893 = vmul.f32 %v4758, %v4758
    %v4894 = vmul.f32 %v4759, %v4759
    %v4895 = vmul.f32 %v4760, %v4760
    %v4896 = vmul.f32 %v4761, %v4761
    %v4897 = vmul.f32 %v4762, %v4762
    %v4898 = vmul.f32 %v4763, %v4763
    %v4899 = vmul.f32 %v4764, %v4764
    %v4900 = vmul.f32 %v4765, %v4765
    %v4901 = vmul.f32 %v4766, %v4766
    %v4902 = vmul.f32 %v4767, %v4767
    %v4903 = vmul.f32 %v4768, %v4768
    %v4904 = vmul.f32 %v4769, %v4769
    %v4905 = vmul.f32 %v4770, %v4770
    %v4906 = vmul.f32 %v4771, %v4771
    %v4907 = vmul.f32 %v4772, %v4772
    %v4908 = vmul.f32 %v4773, %v4773
    %v4909 = vmul.f32 %v4774, %v4774
    %v4910 = vmul.f32 %v4775, %v4775
    %v4911 = vmul.f32 %v4776, %v4776
    %v4912 = vmul.f32 %v4777, %v4777
    %v4913 = vmul.f32 %v4778, %v4778
    %v4914 = vmul.f32 %v4779, %v4779
    %v4915 = vmul.f32 %v4780, %v4780
    %v4916 = vmul.f32 %v4781, %v4781
    %v4917 = vmul.f32 %v4782, %v4782
    %v4918 = vmul.f32 %v4783, %v4783
    %v4919 = vmul.f32 %v4784, %v4784
    %v4920 = vmul.f32 %v4785, %v4785
    %v4921 = vmul.f32 %v4786, %v4786
    %v4922 = vmul.f32 %v4787, %v4787
    %v4923 = vmul.f32 %v4788, %v4788
    %v4924 = vmul.f32 %v4789, %v4789
    %v4925 = vmul.f32 %v4790, %v4790
    %v4926 = vmul.f32 %v4791, %v4791
    %v4927 = vmul.f32 %v4792, %v4792
    %v4928 = vmul.f32 %v4793, %v4793
    %v4929 = vmul.f32 %v4794, %v4794
    %v4930 = vmul.f32 %v4795, %v4795
    %v4931 = vmul.f32 %v4796, %v4796
    %v4932 = vmul.f32 %v4797, %v4797
    %v4933 = vmul.f32 %v4798, %v4798
    %v4934 = vmul.f32 %v4799, %v4799
    %v4935 = vmul.f32 %v4800, %v4800
    %v4936 = vmul.f32 %v4801, %v4801
    %v4937 = vmul.f32 %v4802, %v4802
    %v4938 = vmul.f32 %v4803, %v4803
    %v4939 = vmul.f32 %v4804, %v4804
    %v4940 = vmul.f32 %v4805, %v4805
    %v4941 = vmul.f32 %v4806, %v4806
    %v4942 = vmul.f32 %v4807, %v4807
    %v4943 = vadd.f32 %v4879, %v4880
    %v4944 = vadd.f32 %v4943, %v4881
    %v4945 = vadd.f32 %v4944, %v4882
    %v4946 = vadd.f32 %v4945, %v4883
    %v4947 = vadd.f32 %v4946, %v4884
    %v4948 = vadd.f32 %v4947, %v4885
    %v4949 = vadd.f32 %v4948, %v4886
    %v4950 = vadd.f32 %v4949, %v4887
    %v4951 = vadd.f32 %v4950, %v4888
    %v4952 = vadd.f32 %v4951, %v4889
    %v4953 = vadd.f32 %v4952, %v4890
    %v4954 = vadd.f32 %v4953, %v4891
    %v4955 = vadd.f32 %v4954, %v4892
    %v4956 = vadd.f32 %v4955, %v4893
    %v4957 = vadd.f32 %v4956, %v4894
    %v4958 = vadd.f32 %v4957, %v4895
    %v4959 = vadd.f32 %v4958, %v4896
    %v4960 = vadd.f32 %v4959, %v4897
    %v4961 = vadd.f32 %v4960, %v4898
    %v4962 = vadd.f32 %v4961, %v4899
    %v4963 = vadd.f32 %v4962, %v4900
    %v4964 = vadd.f32 %v4963, %v4901
    %v4965 = vadd.f32 %v4964, %v4902
    %v4966 = vadd.f32 %v4965, %v4903
    %v4967 = vadd.f32 %v4966, %v4904
    %v4968 = vadd.f32 %v4967, %v4905
    %v4969 = vadd.f32 %v4968, %v4906
    %v4970 = vadd.f32 %v4969, %v4907
    %v4971 = vadd.f32 %v4970, %v4908
    %v4972 = vadd.f32 %v4971, %v4909
    %v4973 = vadd.f32 %v4972, %v4910
    %v4974 = vadd.f32 %v4973, %v4911
    %v4975 = vadd.f32 %v4974, %v4912
    %v4976 = vadd.f32 %v4975, %v4913
    %v4977 = vadd.f32 %v4976, %v4914
    %v4978 = vadd.f32 %v4977, %v4915
    %v4979 = vadd.f32 %v4978, %v4916
    %v4980 = vadd.f32 %v4979, %v4917
    %v4981 = vadd.f32 %v4980, %v4918
    %v4982 = vadd.f32 %v4981, %v4919
    %v4983 = vadd.f32 %v4982, %v4920
    %v4984 = vadd.f32 %v4983, %v4921
    %v4985 = vadd.f32 %v4984, %v4922
    %v4986 = vadd.f32 %v4985, %v4923
    %v4987 = vadd.f32 %v4986, %v4924
    %v4988 = vadd.f32 %v4987, %v4925
    %v4989 = vadd.f32 %v4988, %v4926
    %v4990 = vadd.f32 %v4989, %v4927
    %v4991 = vadd.f32 %v4990, %v4928
    %v4992 = vadd.f32 %v4991, %v4929
    %v4993 = vadd.f32 %v4992, %v4930
    %v4994 = vadd.f32 %v4993, %v4931
    %v4995 = vadd.f32 %v4994, %v4932
    %v4996 = vadd.f32 %v4995, %v4933
    %v4997 = vadd.f32 %v4996, %v4934
    %v4998 = vadd.f32 %v4997, %v4935
    %v4999 = vadd.f32 %v4998, %v4936
    %v5000 = vadd.f32 %v4999, %v4937
    %v5001 = vadd.f32 %v5000, %v4938
    %v5002 = vadd.f32 %v5001, %v4939
    %v5003 = vadd.f32 %v5002, %v4940
    %v5004 = vadd.f32 %v5003, %v4941
    %v5005 = vadd.f32 %v5004, %v4942
    %v5006 = vrot.slane %v5005, 4
    %v5007 = vadd.f32 %v5005, %v5006
    %v5008 = vrot.slane %v5007, 2
    %v5009 = vadd.f32 %v5007, %v5008
    %v5010 = vrot.slane %v5009, 1
    %v5011 = vadd.f32 %v5009, %v5010
    %v5012 = vmul.f32 %v4878, 0.001953125
    %v5013 = vmul.f32 %v5011, 0.001953125
    %v5014 = vmul.f32 %v5012, %v5012
    %v5015 = vsub.f32 %v5013, %v5014
    %v5016 = vsub.f32 %v4744, %v5012
    %v5017 = vsub.f32 %v4745, %v5012
    %v5018 = vsub.f32 %v4746, %v5012
    %v5019 = vsub.f32 %v4747, %v5012
    %v5020 = vsub.f32 %v4748, %v5012
    %v5021 = vsub.f32 %v4749, %v5012
    %v5022 = vsub.f32 %v4750, %v5012
    %v5023 = vsub.f32 %v4751, %v5012
    %v5024 = vsub.f32 %v4752, %v5012
    %v5025 = vsub.f32 %v4753, %v5012
    %v5026 = vsub.f32 %v4754, %v5012
    %v5027 = vsub.f32 %v4755, %v5012
    %v5028 = vsub.f32 %v4756, %v5012
    %v5029 = vsub.f32 %v4757, %v5012
    %v5030 = vsub.f32 %v4758, %v5012
    %v5031 = vsub.f32 %v4759, %v5012
    %v5032 = vsub.f32 %v4760, %v5012
    %v5033 = vsub.f32 %v4761, %v5012
    %v5034 = vsub.f32 %v4762, %v5012
    %v5035 = vsub.f32 %v4763, %v5012
    %v5036 = vsub.f32 %v4764, %v5012
    %v5037 = vsub.f32 %v4765, %v5012
    %v5038 = vsub.f32 %v4766, %v5012
    %v5039 = vsub.f32 %v4767, %v5012
    %v5040 = vsub.f32 %v4768, %v5012
    %v5041 = vsub.f32 %v4769, %v5012
    %v5042 = vsub.f32 %v4770, %v5012
    %v5043 = vsub.f32 %v4771, %v5012
    %v5044 = vsub.f32 %v4772, %v5012
    %v5045 = vsub.f32 %v4773, %v5012
    %v5046 = vsub.f32 %v4774, %v5012
    %v5047 = vsub.f32 %v4775, %v5012
    %v5048 = vsub.f32 %v4776, %v5012
    %v5049 = vsub.f32 %v4777, %v5012
    %v5050 = vsub.f32 %v4778, %v5012
    %v5051 = vsub.f32 %v4779, %v5012
    %v5052 = vsub.f32 %v4780, %v5012
    %v5053 = vsub.f32 %v4781, %v5012
    %v5054 = vsub.f32 %v4782, %v5012
    %v5055 = vsub.f32 %v4783, %v5012
    %v5056 = vsub.f32 %v4784, %v5012
    %v5057 = vsub.f32 %v4785, %v5012
    %v5058 = vsub.f32 %v4786, %v5012
    %v5059 = vsub.f32 %v4787, %v5012
    %v5060 = vsub.f32 %v4788, %v5012
    %v5061 = vsub.f32 %v4789, %v5012
    %v5062 = vsub.f32 %v4790, %v5012
    %v5063 = vsub.f32 %v4791, %v5012
    %v5064 = vsub.f32 %v4792, %v5012
    %v5065 = vsub.f32 %v4793, %v5012
    %v5066 = vsub.f32 %v4794, %v5012
    %v5067 = vsub.f32 %v4795, %v5012
    %v5068 = vsub.f32 %v4796, %v5012
    %v5069 = vsub.f32 %v4797, %v5012
    %v5070 = vsub.f32 %v4798, %v5012
    %v5071 = vsub.f32 %v4799, %v5012
    %v5072 = vsub.f32 %v4800, %v5012
    %v5073 = vsub.f32 %v4801, %v5012
    %v5074 = vsub.f32 %v4802, %v5012
    %v5075 = vsub.f32 %v4803, %v5012
    %v5076 = vsub.f32 %v4804, %v5012
    %v5077 = vsub.f32 %v4805, %v5012
    %v5078 = vsub.f32 %v4806, %v5012
    %v5079 = vsub.f32 %v4807, %v5012
    %v5080 = vadd.f32 %v5015, 1e-05
    %v5081 = vrsqrt.pop %v5080
    %v5082 = vmul.f32 %v5081, %v5080
    %v5083 = vmul.f32 %v5082, %v5081
    %v5084 = vmul.f32 0.5, %v5083
    %v5085 = vsub.f32 1.5, %v5084
    %v5086 = vmul.f32 %v5081, %v5085
    %vm5087 = vweird.f32 %v5080
    %vm5088 = vweird.f32 %v5081
    %vm5089 = vmor %vm5087, %vm5088
    %v5090 = vsel %vm5089, %v5081, %v5086
    %v5091 = vmul.f32 %v5016, %v5090
    %v5092 = vmul.f32 %v5017, %v5090
    %v5093 = vmul.f32 %v5018, %v5090
    %v5094 = vmul.f32 %v5019, %v5090
    %v5095 = vmul.f32 %v5020, %v5090
    %v5096 = vmul.f32 %v5021, %v5090
    %v5097 = vmul.f32 %v5022, %v5090
    %v5098 = vmul.f32 %v5023, %v5090
    %v5099 = vmul.f32 %v5024, %v5090
    %v5100 = vmul.f32 %v5025, %v5090
    %v5101 = vmul.f32 %v5026, %v5090
    %v5102 = vmul.f32 %v5027, %v5090
    %v5103 = vmul.f32 %v5028, %v5090
    %v5104 = vmul.f32 %v5029, %v5090
    %v5105 = vmul.f32 %v5030, %v5090
    %v5106 = vmul.f32 %v5031, %v5090
    %v5107 = vmul.f32 %v5032, %v5090
    %v5108 = vmul.f32 %v5033, %v5090
    %v5109 = vmul.f32 %v5034, %v5090
    %v5110 = vmul.f32 %v5035, %v5090
    %v5111 = vmul.f32 %v5036, %v5090
    %v5112 = vmul.f32 %v5037, %v5090
    %v5113 = vmul.f32 %v5038, %v5090
    %v5114 = vmul.f32 %v5039, %v5090
    %v5115 = vmul.f32 %v5040, %v5090
    %v5116 = vmul.f32 %v5041, %v5090
    %v5117 = vmul.f32 %v5042, %v5090
    %v5118 = vmul.f32 %v5043, %v5090
    %v5119 = vmul.f32 %v5044, %v5090
    %v5120 = vmul.f32 %v5045, %v5090
    %v5121 = vmul.f32 %v5046, %v5090
    %v5122 = vmul.f32 %v5047, %v5090
    %v5123 = vmul.f32 %v5048, %v5090
    %v5124 = vmul.f32 %v5049, %v5090
    %v5125 = vmul.f32 %v5050, %v5090
    %v5126 = vmul.f32 %v5051, %v5090
    %v5127 = vmul.f32 %v5052, %v5090
    %v5128 = vmul.f32 %v5053, %v5090
    %v5129 = vmul.f32 %v5054, %v5090
    %v5130 = vmul.f32 %v5055, %v5090
    %v5131 = vmul.f32 %v5056, %v5090
    %v5132 = vmul.f32 %v5057, %v5090
    %v5133 = vmul.f32 %v5058, %v5090
    %v5134 = vmul.f32 %v5059, %v5090
    %v5135 = vmul.f32 %v5060, %v5090
    %v5136 = vmul.f32 %v5061, %v5090
    %v5137 = vmul.f32 %v5062, %v5090
    %v5138 = vmul.f32 %v5063, %v5090
    %v5139 = vmul.f32 %v5064, %v5090
    %v5140 = vmul.f32 %v5065, %v5090
    %v5141 = vmul.f32 %v5066, %v5090
    %v5142 = vmul.f32 %v5067, %v5090
    %v5143 = vmul.f32 %v5068, %v5090
    %v5144 = vmul.f32 %v5069, %v5090
    %v5145 = vmul.f32 %v5070, %v5090
    %v5146 = vmul.f32 %v5071, %v5090
    %v5147 = vmul.f32 %v5072, %v5090
    %v5148 = vmul.f32 %v5073, %v5090
    %v5149 = vmul.f32 %v5074, %v5090
    %v5150 = vmul.f32 %v5075, %v5090
    %v5151 = vmul.f32 %v5076, %v5090
    %v5152 = vmul.f32 %v5077, %v5090
    %v5153 = vmul.f32 %v5078, %v5090
    %v5154 = vmul.f32 %v5079, %v5090
    %v5156 = vperm.slane %v4808, 0
    %v5158 = vmul.f32 %v5091, %v5156
    %v5159 = vmul.f32 %v5092, %v5156
    %v5160 = vmul.f32 %v5093, %v5156
    %v5161 = vmul.f32 %v5094, %v5156
    %v5162 = vmul.f32 %v5095, %v5156
    %v5163 = vmul.f32 %v5096, %v5156
    %v5164 = vmul.f32 %v5097, %v5156
    %v5165 = vmul.f32 %v5098, %v5156
    %v5166 = vmul.f32 %v5099, %v5156
    %v5167 = vmul.f32 %v5100, %v5156
    %v5168 = vmul.f32 %v5101, %v5156
    %v5169 = vmul.f32 %v5102, %v5156
    %v5170 = vmul.f32 %v5103, %v5156
    %v5171 = vmul.f32 %v5104, %v5156
    %v5172 = vmul.f32 %v5105, %v5156
    %v5173 = vmul.f32 %v5106, %v5156
    %v5174 = vmul.f32 %v5107, %v5156
    %v5175 = vmul.f32 %v5108, %v5156
    %v5176 = vmul.f32 %v5109, %v5156
    %v5177 = vmul.f32 %v5110, %v5156
    %v5178 = vmul.f32 %v5111, %v5156
    %v5179 = vmul.f32 %v5112, %v5156
    %v5180 = vmul.f32 %v5113, %v5156
    %v5181 = vmul.f32 %v5114, %v5156
    %v5182 = vmul.f32 %v5115, %v5156
    %v5183 = vmul.f32 %v5116, %v5156
    %v5184 = vmul.f32 %v5117, %v5156
    %v5185 = vmul.f32 %v5118, %v5156
    %v5186 = vmul.f32 %v5119, %v5156
    %v5187 = vmul.f32 %v5120, %v5156
    %v5188 = vmul.f32 %v5121, %v5156
    %v5189 = vmul.f32 %v5122, %v5156
    %v5190 = vmul.f32 %v5123, %v5156
    %v5191 = vmul.f32 %v5124, %v5156
    %v5192 = vmul.f32 %v5125, %v5156
    %v5193 = vmul.f32 %v5126, %v5156
    %v5194 = vmul.f32 %v5127, %v5156
    %v5195 = vmul.f32 %v5128, %v5156
    %v5196 = vmul.f32 %v5129, %v5156
    %v5197 = vmul.f32 %v5130, %v5156
    %v5198 = vmul.f32 %v5131, %v5156
    %v5199 = vmul.f32 %v5132, %v5156
    %v5200 = vmul.f32 %v5133, %v5156
    %v5201 = vmul.f32 %v5134, %v5156
    %v5202 = vmul.f32 %v5135, %v5156
    %v5203 = vmul.f32 %v5136, %v5156
    %v5204 = vmul.f32 %v5137, %v5156
    %v5205 = vmul.f32 %v5138, %v5156
    %v5206 = vmul.f32 %v5139, %v5156
    %v5207 = vmul.f32 %v5140, %v5156
    %v5208 = vmul.f32 %v5141, %v5156
    %v5209 = vmul.f32 %v5142, %v5156
    %v5210 = vmul.f32 %v5143, %v5156
    %v5211 = vmul.f32 %v5144, %v5156
    %v5212 = vmul.f32 %v5145, %v5156
    %v5213 = vmul.f32 %v5146, %v5156
    %v5214 = vmul.f32 %v5147, %v5156
    %v5215 = vmul.f32 %v5148, %v5156
    %v5216 = vmul.f32 %v5149, %v5156
    %v5217 = vmul.f32 %v5150, %v5156
    %v5218 = vmul.f32 %v5151, %v5156
    %v5219 = vmul.f32 %v5152, %v5156
    %v5220 = vmul.f32 %v5153, %v5156
    %v5221 = vmul.f32 %v5154, %v5156
    %v5223 = vperm.slane %v4809, 0
    %v5225 = vadd.f32 %v5158, %v5223
    %v5226 = vadd.f32 %v5159, %v5223
    %v5227 = vadd.f32 %v5160, %v5223
    %v5228 = vadd.f32 %v5161, %v5223
    %v5229 = vadd.f32 %v5162, %v5223
    %v5230 = vadd.f32 %v5163, %v5223
    %v5231 = vadd.f32 %v5164, %v5223
    %v5232 = vadd.f32 %v5165, %v5223
    %v5233 = vadd.f32 %v5166, %v5223
    %v5234 = vadd.f32 %v5167, %v5223
    %v5235 = vadd.f32 %v5168, %v5223
    %v5236 = vadd.f32 %v5169, %v5223
    %v5237 = vadd.f32 %v5170, %v5223
    %v5238 = vadd.f32 %v5171, %v5223
    %v5239 = vadd.f32 %v5172, %v5223
    %v5240 = vadd.f32 %v5173, %v5223
    %v5241 = vadd.f32 %v5174, %v5223
    %v5242 = vadd.f32 %v5175, %v5223
    %v5243 = vadd.f32 %v5176, %v5223
    %v5244 = vadd.f32 %v5177, %v5223
    %v5245 = vadd.f32 %v5178, %v5223
    %v5246 = vadd.f32 %v5179, %v5223
    %v5247 = vadd.f32 %v5180, %v5223
    %v5248 = vadd.f32 %v5181, %v5223
    %v5249 = vadd.f32 %v5182, %v5223
    %v5250 = vadd.f32 %v5183, %v5223
    %v5251 = vadd.f32 %v5184, %v5223
    %v5252 = vadd.f32 %v5185, %v5223
    %v5253 = vadd.f32 %v5186, %v5223
    %v5254 = vadd.f32 %v5187, %v5223
    %v5255 = vadd.f32 %v5188, %v5223
    %v5256 = vadd.f32 %v5189, %v5223
    %v5257 = vadd.f32 %v5190, %v5223
    %v5258 = vadd.f32 %v5191, %v5223
    %v5259 = vadd.f32 %v5192, %v5223
    %v5260 = vadd.f32 %v5193, %v5223
    %v5261 = vadd.f32 %v5194, %v5223
    %v5262 = vadd.f32 %v5195, %v5223
    %v5263 = vadd.f32 %v5196, %v5223
    %v5264 = vadd.f32 %v5197, %v5223
    %v5265 = vadd.f32 %v5198, %v5223
    %v5266 = vadd.f32 %v5199, %v5223
    %v5267 = vadd.f32 %v5200, %v5223
    %v5268 = vadd.f32 %v5201, %v5223
    %v5269 = vadd.f32 %v5202, %v5223
    %v5270 = vadd.f32 %v5203, %v5223
    %v5271 = vadd.f32 %v5204, %v5223
    %v5272 = vadd.f32 %v5205, %v5223
    %v5273 = vadd.f32 %v5206, %v5223
    %v5274 = vadd.f32 %v5207, %v5223
    %v5275 = vadd.f32 %v5208, %v5223
    %v5276 = vadd.f32 %v5209, %v5223
    %v5277 = vadd.f32 %v5210, %v5223
    %v5278 = vadd.f32 %v5211, %v5223
    %v5279 = vadd.f32 %v5212, %v5223
    %v5280 = vadd.f32 %v5213, %v5223
    %v5281 = vadd.f32 %v5214, %v5223
    %v5282 = vadd.f32 %v5215, %v5223
    %v5283 = vadd.f32 %v5216, %v5223
    %v5284 = vadd.f32 %v5217, %v5223
    %v5285 = vadd.f32 %v5218, %v5223
    %v5286 = vadd.f32 %v5219, %v5223
    %v5287 = vadd.f32 %v5220, %v5223
    %v5288 = vadd.f32 %v5221, %v5223
    %v5289 = vadd.f32 %v5225, %v397
    %v5290 = vadd.f32 %v5226, %v400
    %v5291 = vadd.f32 %v5227, %v403
    %v5292 = vadd.f32 %v5228, %v406
    %v5293 = vadd.f32 %v5229, %v409
    %v5294 = vadd.f32 %v5230, %v412
    %v5295 = vadd.f32 %v5231, %v415
    %v5296 = vadd.f32 %v5232, %v418
    %v5297 = vadd.f32 %v5233, %v421
    %v5298 = vadd.f32 %v5234, %v424
    %v5299 = vadd.f32 %v5235, %v427
    %v5300 = vadd.f32 %v5236, %v430
    %v5301 = vadd.f32 %v5237, %v433
    %v5302 = vadd.f32 %v5238, %v436
    %v5303 = vadd.f32 %v5239, %v439
    %v5304 = vadd.f32 %v5240, %v442
    %v5305 = vadd.f32 %v5241, %v445
    %v5306 = vadd.f32 %v5242, %v448
    %v5307 = vadd.f32 %v5243, %v451
    %v5308 = vadd.f32 %v5244, %v454
    %v5309 = vadd.f32 %v5245, %v457
    %v5310 = vadd.f32 %v5246, %v460
    %v5311 = vadd.f32 %v5247, %v463
    %v5312 = vadd.f32 %v5248, %v466
    %v5313 = vadd.f32 %v5249, %v469
    %v5314 = vadd.f32 %v5250, %v472
    %v5315 = vadd.f32 %v5251, %v475
    %v5316 = vadd.f32 %v5252, %v478
    %v5317 = vadd.f32 %v5253, %v481
    %v5318 = vadd.f32 %v5254, %v484
    %v5319 = vadd.f32 %v5255, %v487
    %v5320 = vadd.f32 %v5256, %v490
    %v5321 = vadd.f32 %v5257, %v493
    %v5322 = vadd.f32 %v5258, %v496
    %v5323 = vadd.f32 %v5259, %v499
    %v5324 = vadd.f32 %v5260, %v502
    %v5325 = vadd.f32 %v5261, %v505
    %v5326 = vadd.f32 %v5262, %v508
    %v5327 = vadd.f32 %v5263, %v511
    %v5328 = vadd.f32 %v5264, %v514
    %v5329 = vadd.f32 %v5265, %v517
    %v5330 = vadd.f32 %v5266, %v520
    %v5331 = vadd.f32 %v5267, %v523
    %v5332 = vadd.f32 %v5268, %v526
    %v5333 = vadd.f32 %v5269, %v529
    %v5334 = vadd.f32 %v5270, %v532
    %v5335 = vadd.f32 %v5271, %v535
    %v5336 = vadd.f32 %v5272, %v538
    %v5337 = vadd.f32 %v5273, %v541
    %v5338 = vadd.f32 %v5274, %v544
    %v5339 = vadd.f32 %v5275, %v547
    %v5340 = vadd.f32 %v5276, %v550
    %v5341 = vadd.f32 %v5277, %v553
    %v5342 = vadd.f32 %v5278, %v556
    %v5343 = vadd.f32 %v5279, %v559
    %v5344 = vadd.f32 %v5280, %v562
    %v5345 = vadd.f32 %v5281, %v565
    %v5346 = vadd.f32 %v5282, %v568
    %v5347 = vadd.f32 %v5283, %v571
    %v5348 = vadd.f32 %v5284, %v574
    %v5349 = vadd.f32 %v5285, %v577
    %v5350 = vadd.f32 %v5286, %v580
    %v5351 = vadd.f32 %v5287, %v583
    %v5352 = vadd.f32 %v5288, %v586
    %v5353 = vmax.f32 %v5289, 0.0
    %v5354 = vmax.f32 %v5290, 0.0
    %v5355 = vmax.f32 %v5291, 0.0
    %v5356 = vmax.f32 %v5292, 0.0
    %v5357 = vmax.f32 %v5293, 0.0
    %v5358 = vmax.f32 %v5294, 0.0
    %v5359 = vmax.f32 %v5295, 0.0
    %v5360 = vmax.f32 %v5296, 0.0
    %v5361 = vmax.f32 %v5297, 0.0
    %v5362 = vmax.f32 %v5298, 0.0
    %v5363 = vmax.f32 %v5299, 0.0
    %v5364 = vmax.f32 %v5300, 0.0
    %v5365 = vmax.f32 %v5301, 0.0
    %v5366 = vmax.f32 %v5302, 0.0
    %v5367 = vmax.f32 %v5303, 0.0
    %v5368 = vmax.f32 %v5304, 0.0
    %v5369 = vmax.f32 %v5305, 0.0
    %v5370 = vmax.f32 %v5306, 0.0
    %v5371 = vmax.f32 %v5307, 0.0
    %v5372 = vmax.f32 %v5308, 0.0
    %v5373 = vmax.f32 %v5309, 0.0
    %v5374 = vmax.f32 %v5310, 0.0
    %v5375 = vmax.f32 %v5311, 0.0
    %v5376 = vmax.f32 %v5312, 0.0
    %v5377 = vmax.f32 %v5313, 0.0
    %v5378 = vmax.f32 %v5314, 0.0
    %v5379 = vmax.f32 %v5315, 0.0
    %v5380 = vmax.f32 %v5316, 0.0
    %v5381 = vmax.f32 %v5317, 0.0
    %v5382 = vmax.f32 %v5318, 0.0
    %v5383 = vmax.f32 %v5319, 0.0
    %v5384 = vmax.f32 %v5320, 0.0
    %v5385 = vmax.f32 %v5321, 0.0
    %v5386 = vmax.f32 %v5322, 0.0
    %v5387 = vmax.f32 %v5323, 0.0
    %v5388 = vmax.f32 %v5324, 0.0
    %v5389 = vmax.f32 %v5325, 0.0
    %v5390 = vmax.f32 %v5326, 0.0
    %v5391 = vmax.f32 %v5327, 0.0
    %v5392 = vmax.f32 %v5328, 0.0
    %v5393 = vmax.f32 %v5329, 0.0
    %v5394 = vmax.f32 %v5330, 0.0
    %v5395 = vmax.f32 %v5331, 0.0
    %v5396 = vmax.f32 %v5332, 0.0
    %v5397 = vmax.f32 %v5333, 0.0
    %v5398 = vmax.f32 %v5334, 0.0
    %v5399 = vmax.f32 %v5335, 0.0
    %v5400 = vmax.f32 %v5336, 0.0
    %v5401 = vmax.f32 %v5337, 0.0
    %v5402 = vmax.f32 %v5338, 0.0
    %v5403 = vmax.f32 %v5339, 0.0
    %v5404 = vmax.f32 %v5340, 0.0
    %v5405 = vmax.f32 %v5341, 0.0
    %v5406 = vmax.f32 %v5342, 0.0
    %v5407 = vmax.f32 %v5343, 0.0
    %v5408 = vmax.f32 %v5344, 0.0
    %v5409 = vmax.f32 %v5345, 0.0
    %v5410 = vmax.f32 %v5346, 0.0
    %v5411 = vmax.f32 %v5347, 0.0
    %v5412 = vmax.f32 %v5348, 0.0
    %v5413 = vmax.f32 %v5349, 0.0
    %v5414 = vmax.f32 %v5350, 0.0
    %v5415 = vmax.f32 %v5351, 0.0
    %v5416 = vmax.f32 %v5352, 0.0
    %5417 = vst [vmem:[#allocation9] sm:$0xff] %v5353
    %5418 = vst [vmem:[#allocation9 + $0x8] sm:$0xff] %v5354
    %5419 = vst [vmem:[#allocation9 + $0x10] sm:$0xff] %v5355
    %5420 = vst [vmem:[#allocation9 + $0x18] sm:$0xff] %v5356
    %5421 = vst [vmem:[#allocation9 + $0x20] sm:$0xff] %v5357
    %5422 = vst [vmem:[#allocation9 + $0x28] sm:$0xff] %v5358
    %5423 = vst [vmem:[#allocation9 + $0x30] sm:$0xff] %v5359
    %5424 = vst [vmem:[#allocation9 + $0x38] sm:$0xff] %v5360
    %5425 = vst [vmem:[#allocation9 + $0x40] sm:$0xff] %v5361
    %5426 = vst [vmem:[#allocation9 + $0x48] sm:$0xff] %v5362
    %5427 = vst [vmem:[#allocation9 + $0x50] sm:$0xff] %v5363
    %5428 = vst [vmem:[#allocation9 + $0x58] sm:$0xff] %v5364
    %5429 = vst [vmem:[#allocation9 + $0x60] sm:$0xff] %v5365
    %5430 = vst [vmem:[#allocation9 + $0x68] sm:$0xff] %v5366
    %5431 = vst [vmem:[#allocation9 + $0x70] sm:$0xff] %v5367
    %5432 = vst [vmem:[#allocation9 + $0x78] sm:$0xff] %v5368
    %5433 = vst [vmem:[#allocation9 + $0x80] sm:$0xff] %v5369
    %5434 = vst [vmem:[#allocation9 + $0x88] sm:$0xff] %v5370
    %5435 = vst [vmem:[#allocation9 + $0x90] sm:$0xff] %v5371
    %5436 = vst [vmem:[#allocation9 + $0x98] sm:$0xff] %v5372
    %5437 = vst [vmem:[#allocation9 + $0xa0] sm:$0xff] %v5373
    %5438 = vst [vmem:[#allocation9 + $0xa8] sm:$0xff] %v5374
    %5439 = vst [vmem:[#allocation9 + $0xb0] sm:$0xff] %v5375
    %5440 = vst [vmem:[#allocation9 + $0xb8] sm:$0xff] %v5376
    %5441 = vst [vmem:[#allocation9 + $0xc0] sm:$0xff] %v5377
    %5442 = vst [vmem:[#allocation9 + $0xc8] sm:$0xff] %v5378
    %5443 = vst [vmem:[#allocation9 + $0xd0] sm:$0xff] %v5379
    %5444 = vst [vmem:[#allocation9 + $0xd8] sm:$0xff] %v5380
    %5445 = vst [vmem:[#allocation9 + $0xe0] sm:$0xff] %v5381
    %5446 = vst [vmem:[#allocation9 + $0xe8] sm:$0xff] %v5382
    %5447 = vst [vmem:[#allocation9 + $0xf0] sm:$0xff] %v5383
    %5448 = vst [vmem:[#allocation9 + $0xf8] sm:$0xff] %v5384
    %5449 = vst [vmem:[#allocation9 + $0x100] sm:$0xff] %v5385
    %5450 = vst [vmem:[#allocation9 + $0x108] sm:$0xff] %v5386
    %5451 = vst [vmem:[#allocation9 + $0x110] sm:$0xff] %v5387
    %5452 = vst [vmem:[#allocation9 + $0x118] sm:$0xff] %v5388
    %5453 = vst [vmem:[#allocation9 + $0x120] sm:$0xff] %v5389
    %5454 = vst [vmem:[#allocation9 + $0x128] sm:$0xff] %v5390
    %5455 = vst [vmem:[#allocation9 + $0x130] sm:$0xff] %v5391
    %5456 = vst [vmem:[#allocation9 + $0x138] sm:$0xff] %v5392
    %5457 = vst [vmem:[#allocation9 + $0x140] sm:$0xff] %v5393
    %5458 = vst [vmem:[#allocation9 + $0x148] sm:$0xff] %v5394
    %5459 = vst [vmem:[#allocation9 + $0x150] sm:$0xff] %v5395
    %5460 = vst [vmem:[#allocation9 + $0x158] sm:$0xff] %v5396
    %5461 = vst [vmem:[#allocation9 + $0x160] sm:$0xff] %v5397
    %5462 = vst [vmem:[#allocation9 + $0x168] sm:$0xff] %v5398
    %5463 = vst [vmem:[#allocation9 + $0x170] sm:$0xff] %v5399
    %5464 = vst [vmem:[#allocation9 + $0x178] sm:$0xff] %v5400
    %5465 = vst [vmem:[#allocation9 + $0x180] sm:$0xff] %v5401
    %5466 = vst [vmem:[#allocation9 + $0x188] sm:$0xff] %v5402
    %5467 = vst [vmem:[#allocation9 + $0x190] sm:$0xff] %v5403
    %5468 = vst [vmem:[#allocation9 + $0x198] sm:$0xff] %v5404
    %5469 = vst [vmem:[#allocation9 + $0x1a0] sm:$0xff] %v5405
    %5470 = vst [vmem:[#allocation9 + $0x1a8] sm:$0xff] %v5406
    %5471 = vst [vmem:[#allocation9 + $0x1b0] sm:$0xff] %v5407
    %5472 = vst [vmem:[#allocation9 + $0x1b8] sm:$0xff] %v5408
    %5473 = vst [vmem:[#allocation9 + $0x1c0] sm:$0xff] %v5409
    %5474 = vst [vmem:[#allocation9 + $0x1c8] sm:$0xff] %v5410
    %5475 = vst [vmem:[#allocation9 + $0x1d0] sm:$0xff] %v5411
    %5476 = vst [vmem:[#allocation9 + $0x1d8] sm:$0xff] %v5412
    %5477 = vst [vmem:[#allocation9 + $0x1e0] sm:$0xff] %v5413
    %5478 = vst [vmem:[#allocation9 + $0x1e8] sm:$0xff] %v5414
    %5479 = vst [vmem:[#allocation9 + $0x1f0] sm:$0xff] %v5415
    %5480 = vst [vmem:[#allocation9 + $0x1f8] sm:$0xff] %v5416
    // Predicated region
    $region42: #{tpu_custom_call.1} parent=1 // pred_check
      _
    $region43: #{tpu_custom_call.1} parent=1 // pred_check_branch
      %5482 = sbr.rel (0) target = $region45
    $region44: #{tpu_custom_call.1} parent=1 // pred_region
      %5484 = vsyncadd [#allocation5], 0
      %s5485 = sshll.u32 [#allocation9], 4
      %s5486 = int_to_ptr.vmem [resolvable:$true] %s5485
      %s5487 = sshll.u32 %s7, 4
      %s5488 = int_to_ptr.hbm [resolvable:$true] %s5487
      %5493 = dma.vmem_to_hbm [thread:$0]  %s5486, 8192, %s5488, [#allocation5], 128, 128, 8
    $region45: #{tpu_custom_call.1} parent=1 // pred_fallthru
      _
    // Predicated region
    $region46: #{tpu_custom_call.1} parent=1 // pred_check
      _
    $region47: #{tpu_custom_call.1} parent=1 // pred_check_branch
      %5495 = sbr.rel (0) target = $region49
    $region48: #{tpu_custom_call.1} parent=1 // pred_region
      %5497 = dma.done [#allocation5], 8192
    $region49: #{tpu_custom_call.1} parent=1 // pred_fallthru
      _
    %5498 = vsyncpa [#allocation4], 1
    %5499 = vsyncpa [#allocation7], 1
    %5500 = vsyncpa [#allocation5], 1

</llo_original>
